<compile_context>
chip_gen: v7x
topology: tpu7x:2x2x1
jax: 0.10.0
libtpu: 0.0.40
codegen_flags: <defaults>
</compile_context>

<pallas_src>
import functools

import jax
import jax.numpy as jnp
from jax.experimental import pallas as pl
from jax.experimental.pallas import tpu as pltpu

EPS = 1e-5                      # PyTorch BatchNorm2d default eps
COMPUTE_DTYPE = jnp.bfloat16    # MXU operand dtype (accumulation stays f32)


# ----------------------------------------------------------------------------
# In-kernel helpers (channel-major: activations are (C, H, W) / (C, H*W))
# ----------------------------------------------------------------------------
def _fill_replicate_pad_cm(pad_ref, x_cm, H, W):
    """pad_ref[c, 1+h, 1+w] = x_cm[c, h, w]; border = replicate (edge) pad.

    pad_ref is a bf16 (C, H+2, W+2) VMEM scratch; x_cm is already bf16.
    Every element of the scratch is rewritten each call (no stale data)."""
    pad_ref[:, 1:H + 1, 1:W + 1] = x_cm
    pad_ref[:, 0:1, 1:W + 1] = x_cm[:, 0:1, :]
    pad_ref[:, H + 1:H + 2, 1:W + 1] = x_cm[:, H - 1:H, :]
    pad_ref[:, :, 0:1] = pad_ref[:, :, 1:2]
    pad_ref[:, :, W + 1:W + 2] = pad_ref[:, :, W:W + 1]


def _conv3x3_from_pad(pad_ref, w_ref, b_ref, H, W, C):
    """(C, H+2, W+2) bf16 padded slab -> ONE im2col matmul -> (C, H*W) f32."""
    taps = []
    for ky in range(3):
        for kx in range(3):
            taps.append(pad_ref[:, ky:ky + H, kx:kx + W].reshape(C, H * W))
    cols = jnp.concatenate(taps, axis=0)                       # (9C, HW) bf16
    y = jnp.dot(w_ref[...], cols, preferred_element_type=jnp.float32)
    return y + b_ref[...]                                      # (C,HW) + (C,1)


def _partial_stats(y, inv_hw):
    """Per-tile channel stats for a numerically stable BN combine (Chan):
    returns (C, 2) = [sum, sum of squared deviations from the tile mean]."""
    s = jnp.sum(y, axis=1, keepdims=True)                      # (C, 1)
    mean_b = s * inv_hw
    d = y - mean_b
    ssd = jnp.sum(d * d, axis=1, keepdims=True)                # (C, 1)
    return jnp.concatenate([s, ssd], axis=1)                   # (C, 2)


# ----------------------------------------------------------------------------
# Pass 1: Conv1 (raw) + partial BN1 stats          grid over batch images
# ----------------------------------------------------------------------------
def conv1_kernel(x_ref, w1_ref, b1_ref, y1_ref, st1_ref, pad_ref):
    _, C, H, W = x_ref.shape
    xb = x_ref[0].astype(COMPUTE_DTYPE)                 # cast once, f32 -> bf16
    _fill_replicate_pad_cm(pad_ref, xb, H, W)
    y = _conv3x3_from_pad(pad_ref, w1_ref, b1_ref, H, W, C)     # (C, HW) f32
    y1_ref[0] = y
    st1_ref[0] = _partial_stats(y, 1.0 / (H * W))


# ----------------------------------------------------------------------------
# Pass 2: BN1 + PReLU + Conv2 (raw) + partial BN2 stats
# ----------------------------------------------------------------------------
def conv2_kernel(y1_ref, s1_ref, t1_ref, a_ref, w2_ref, b2_ref,
                 y2_ref, st2_ref, pad_ref):
    C = y1_ref.shape[1]
    H = pad_ref.shape[1] - 2
    W = pad_ref.shape[2] - 2
    y = y1_ref[0]                                       # (C, HW) f32, lane-dense
    y = y * s1_ref[...] + t1_ref[...]                   # BN1 (precombined scale/shift)
    y = jnp.where(y > 0, y, a_ref[...] * y)             # PReLU ((C,1) alpha column)
    yb = y.astype(COMPUTE_DTYPE).reshape(C, H, W)
    _fill_replicate_pad_cm(pad_ref, yb, H, W)
    z = _conv3x3_from_pad(pad_ref, w2_ref, b2_ref, H, W, C)     # (C, HW) f32
    y2_ref[0] = z
    st2_ref[0] = _partial_stats(z, 1.0 / (H * W))


# ----------------------------------------------------------------------------
# Pass 3: BN2 + residual add (lane-dense elementwise)
# ----------------------------------------------------------------------------
def bn2_residual_kernel(y2_ref, x_ref, s2_ref, t2_ref, out_ref):
    out_ref[0] = y2_ref[0] * s2_ref[...] + t2_ref[...] + x_ref[0]
    # TODO(synk): when blocks are stacked, emit bf16 here (next conv operand
    # dtype) and carry the f32 skip path separately to halve HBM writeback.


# ----------------------------------------------------------------------------
# Wrapper-side helpers
# ----------------------------------------------------------------------------
def prepare_params(params, channels):
    """One-time parameter prep (hoist out of the per-block call when stacking):
    conv weights OIHW -> (O, 9*I) bf16 (tap-major, cin fastest, matching the
    im2col row order), per-channel vectors -> (C, 1) f32 columns, PReLU alpha
    broadcast to a (C, 1) column (no scalar/SMEM read needed in-kernel)."""
    C = channels

    def prep_w(w):   # (O, I, 3, 3) -> (O, ky, kx, I) -> (O, 9*I)
        return (jnp.transpose(w, (0, 2, 3, 1))
                .reshape(C, 9 * C).astype(COMPUTE_DTYPE))

    def col(v):
        return v.reshape(C, 1).astype(jnp.float32)

    alpha_col = jnp.broadcast_to(
        params["a"].astype(jnp.float32).reshape(1, 1), (C, 1))
    return dict(
        w1=prep_w(params["w1"]), b1=col(params["b1"]),
        g1=col(params["g1"]), beta1=col(params["beta1"]),
        alpha=alpha_col,
        w2=prep_w(params["w2"]), b2=col(params["b2"]),
        g2=col(params["g2"]), beta2=col(params["beta2"]),
    )


def _bn_scale_shift(stats, gamma_col, beta_col, n_per_block, total_n):
    """Combine per-tile [sum, ssd] stats (Chan's parallel formula, f32) into
    BatchNorm scale/shift columns: y_norm = y*scale + shift."""
    s_b = stats[..., 0]                                     # (n_blocks, C)
    ssd_b = stats[..., 1]                                   # (n_blocks, C)
    mean_b = s_b / n_per_block
    mean = jnp.sum(s_b, axis=0) / total_n                   # (C,)
    ssd = (jnp.sum(ssd_b, axis=0)
           + jnp.sum(n_per_block * (mean_b - mean[None, :]) ** 2, axis=0))
    var = ssd / total_n                                     # biased (PyTorch BN)
    scale = gamma_col[:, 0] * jax.lax.rsqrt(var + EPS)
    shift = beta_col[:, 0] - mean * scale
    return scale.reshape(-1, 1), shift.reshape(-1, 1)


@functools.cache
def _hw_vmem_cap_bytes():
    try:
        return int(pltpu.get_tpu_info().vmem_capacity_bytes)
    except Exception:
        return 64 * 1024 * 1024     # conservative (v7x per-TC)


def _vmem_limit_bytes(C, H, W):
    f32, bf16 = 4, 2
    hw = H * W
    live = (2 * C * hw * f32                      # input activation block x2 buffers
            + 2 * (C * hw * f32 + 2 * C * f32)    # output blocks x2 buffers
            + C * (H + 2) * (W + 2) * bf16        # replicate-pad scratch
            + 9 * C * hw * bf16                   # im2col operand
            + 2 * C * hw * f32                    # conv accumulator / epilogue temps
            + 2 * 9 * C * C * bf16 + 16 * C * f32)
    cap = _hw_vmem_cap_bytes() - 8 * 1024 * 1024  # headroom below physical VMEM
    return int(max(min(max(2 * live, 16 * 1024 * 1024), cap), 4 * 1024 * 1024))


# ----------------------------------------------------------------------------
# Top-level forward (PyTorch parity: NCHW in / NCHW out)
# ----------------------------------------------------------------------------
@jax.jit
def residual_block(x_nchw, params):
    N, C, H, W = x_nchw.shape
    HW = H * W
    p = prepare_params(params, C)      # hoist when stacking blocks
    x = x_nchw.astype(jnp.float32)
    x_flat = x.reshape(N, C, HW)       # trailing-dim reshape: free (bitcast)

    cparams = pltpu.CompilerParams(
        dimension_semantics=("parallel",),
        vmem_limit_bytes=_vmem_limit_bytes(C, H, W))

    vec_spec = pl.BlockSpec((C, 1), lambda n: (0, 0))
    w_spec = pl.BlockSpec((C, 9 * C), lambda n: (0, 0))
    act4_spec = pl.BlockSpec((1, C, H, W), lambda n: (n, 0, 0, 0))
    act3_spec = pl.BlockSpec((1, C, HW), lambda n: (n, 0, 0))
    stats_spec = pl.BlockSpec((1, C, 2), lambda n: (n, 0, 0))
    pad_scratch = pltpu.VMEM((C, H + 2, W + 2), COMPUTE_DTYPE)

    # ---- Pass 1: Conv1 + partial BN1 stats ---------------------------------
    y1, st1 = pl.pallas_call(
        conv1_kernel,
        grid=(N,),
        out_shape=(jax.ShapeDtypeStruct((N, C, HW), jnp.float32),
                   jax.ShapeDtypeStruct((N, C, 2), jnp.float32)),
        in_specs=[act4_spec, w_spec, vec_spec],
        out_specs=(act3_spec, stats_spec),
        scratch_shapes=[pad_scratch],
        compiler_params=cparams,
    )(x, p["w1"], p["b1"])

    scale1, shift1 = _bn_scale_shift(st1, p["g1"], p["beta1"], HW, N * HW)

    # ---- Pass 2: BN1 + PReLU + Conv2 + partial BN2 stats --------------------
    y2, st2 = pl.pallas_call(
        conv2_kernel,
        grid=(N,),
        out_shape=(jax.ShapeDtypeStruct((N, C, HW), jnp.float32),
                   jax.ShapeDtypeStruct((N, C, 2), jnp.float32)),
        in_specs=[act3_spec, vec_spec, vec_spec, vec_spec, w_spec, vec_spec],
        out_specs=(act3_spec, stats_spec),
        scratch_shapes=[pad_scratch],
        compiler_params=cparams,
    )(y1, scale1, shift1, p["alpha"], p["w2"], p["b2"])

    scale2, shift2 = _bn_scale_shift(st2, p["g2"], p["beta2"], HW, N * HW)

    # ---- Pass 3: BN2 + residual add ------------------------------------------
    out = pl.pallas_call(
        bn2_residual_kernel,
        grid=(N,),
        out_shape=jax.ShapeDtypeStruct((N, C, HW), jnp.float32),
        in_specs=[act3_spec, act3_spec, vec_spec, vec_spec],
        out_specs=act3_spec,
        compiler_params=cparams,
    )(y2, x_flat, scale2, shift2)

    return out.reshape(N, C, H, W)     # trailing-dim reshape: free (bitcast)


# ----------------------------------------------------------------------------
# Pure-JAX reference + parameter init
# ----------------------------------------------------------------------------
def ref_forward(x, p, matmul_dtype=jnp.float32):
    """Plain-JAX reference mirroring the PyTorch forward (NCHW). matmul_dtype
    controls only the conv operand precision (accumulation stays f32)."""
    def conv(x, w, b):
        xp = jnp.pad(x, ((0, 0), (0, 0), (1, 1), (1, 1)), mode="edge")
        y = jax.lax.conv_general_dilated(
            xp.astype(matmul_dtype), w.astype(matmul_dtype), (1, 1), "VALID",
            dimension_numbers=("NCHW", "OIHW", "NCHW"),
            preferred_element_type=jnp.float32)
        return y + b[None, :, None, None]

    def bn(x, g, bt):
        mean = jnp.mean(x, axis=(0, 2, 3), keepdims=True)
        var = jnp.mean((x - mean) ** 2, axis=(0, 2, 3), keepdims=True)
        return (x - mean) * jax.lax.rsqrt(var + EPS) * g[None, :, None, None] \
               + bt[None, :, None, None]

    y = conv(x, p["w1"], p["b1"])
    y = bn(y, p["g1"], p["beta1"])
    y = jnp.where(y > 0, y, p["a"][0] * y)
    y = conv(y, p["w2"], p["b2"])
    y = bn(y, p["g2"], p["beta2"])
    return y + x


def init_params(key, channels):
    k1, k2, k3, k4 = jax.random.split(key, 4)
    fan_in = channels * 9
    bound = 1.0 / jnp.sqrt(fan_in)
    return {
        "w1": jax.random.uniform(k1, (channels, channels, 3, 3), jnp.float32,
                                 -bound, bound),
        "b1": jax.random.uniform(k2, (channels,), jnp.float32, -bound, bound),
        "g1": jnp.ones((channels,), jnp.float32),        # BN weight init
        "beta1": jnp.zeros((channels,), jnp.float32),    # BN bias init
        "a": jnp.full((1,), 0.25, jnp.float32),          # PReLU init
        "w2": jax.random.uniform(k3, (channels, channels, 3, 3), jnp.float32,
                                 -bound, bound),
        "b2": jax.random.uniform(k4, (channels,), jnp.float32, -bound, bound),
        "g2": jnp.ones((channels,), jnp.float32),
        "beta2": jnp.zeros((channels,), jnp.float32),
    }


if __name__ == "__main__":
    key = jax.random.PRNGKey(0)
    kx, kp = jax.random.split(key)
    N, C, H, W = 2, 4, 16, 16
    x = jax.random.normal(kx, (N, C, H, W), jnp.float32)
    params = init_params(kp, C)

    out = jax.block_until_ready(residual_block(x, params))
    assert out.shape == (N, C, H, W)

    # Strict check: reference that also quantizes the conv operands to bf16
    # (kernel and reference then agree to f32-accumulation noise).
    ref_bf16 = jax.block_until_ready(ref_forward(x, params, COMPUTE_DTYPE))
    err_bf16 = float(jnp.max(jnp.abs(out - ref_bf16)))
    assert jnp.allclose(out, ref_bf16, atol=2e-3, rtol=2e-3), \
        f"max abs err vs bf16-operand reference: {err_bf16}"

    # Sanity check vs the pure-f32 reference: bf16 matmul operands shift the
    # result slightly (BN statistics / accumulation remain f32).
    ref_f32 = jax.block_until_ready(ref_forward(x, params, jnp.float32))
    err_f32 = float(jnp.max(jnp.abs(out - ref_f32)))
    assert jnp.allclose(out, ref_f32, atol=5e-2, rtol=5e-2), \
        f"max abs err vs f32 reference: {err_f32}"

    print("KERNEL_OK")
</pallas_src>

<mosaic_0001>
module attributes {stable_mosaic.version = 11 : i64} {
  func.func @conv1_kernel(%arg0: i32, %arg1: memref<1x4x16x16xf32, #tpu.memory_space<vmem>>, %arg2: memref<4x36xbf16, #tpu.memory_space<vmem>>, %arg3: memref<4x1xf32, #tpu.memory_space<vmem>>, %arg4: memref<1x4x256xf32, #tpu.memory_space<vmem>>, %arg5: memref<1x4x2xf32, #tpu.memory_space<vmem>>, %arg6: memref<4x18x18xbf16, #tpu.memory_space<vmem>>) attributes {dimension_semantics = [#tpu.dimension_semantics<parallel>], iteration_bounds = array<i64: 2>, scalar_prefetch = 0 : i64, scratch_operands = 1 : i64, tpu.core_type = #tpu.core_type<tc>, window_params = [{transform_indices = @transform_0, window_bounds = array<i64: 1, 4, 16, 16>}, {pipeline_mode = #tpu.pipeline_mode<synchronous>, transform_indices = @transform_1, window_bounds = array<i64: 4, 36>}, {pipeline_mode = #tpu.pipeline_mode<synchronous>, transform_indices = @transform_2, window_bounds = array<i64: 4, 1>}, {transform_indices = @transform_3, window_bounds = array<i64: 1, 4, 256>}, {transform_indices = @transform_4, window_bounds = array<i64: 1, 4, 2>}]} {
    %c0 = arith.constant 0 : index
    %c0_0 = arith.constant 0 : index
    %c0_1 = arith.constant 0 : index
    %c0_2 = arith.constant 0 : index
    %0 = vector.load %arg1[%c0, %c0_0, %c0_1, %c0_2] : memref<1x4x16x16xf32, #tpu.memory_space<vmem>>, vector<1x4x16x16xf32>
    %1 = vector.shape_cast %0 : vector<1x4x16x16xf32> to vector<4x16x16xf32>
    %2 = arith.truncf %1 : vector<4x16x16xf32> to vector<4x16x16xbf16>
    %c0_3 = arith.constant 0 : index
    %c1 = arith.constant 1 : index
    %c1_4 = arith.constant 1 : index
    %3 = vector.load %arg6[%c0_3, %c1, %c1_4] : memref<4x18x18xbf16, #tpu.memory_space<vmem>>, vector<4x16x16xbf16>
    tpu.vector_store %arg6[%c0_3, %c1, %c1_4], %2 {strides = array<i32>} : memref<4x18x18xbf16, #tpu.memory_space<vmem>>, vector<4x16x16xbf16>,
    %4 = vector.extract_strided_slice %2 {offsets = [0, 0, 0], sizes = [4, 1, 16], strides = [1, 1, 1]} : vector<4x16x16xbf16> to vector<4x1x16xbf16>
    %c0_5 = arith.constant 0 : index
    %c0_6 = arith.constant 0 : index
    %c1_7 = arith.constant 1 : index
    %5 = vector.load %arg6[%c0_5, %c0_6, %c1_7] : memref<4x18x18xbf16, #tpu.memory_space<vmem>>, vector<4x1x16xbf16>
    tpu.vector_store %arg6[%c0_5, %c0_6, %c1_7], %4 {strides = array<i32>} : memref<4x18x18xbf16, #tpu.memory_space<vmem>>, vector<4x1x16xbf16>,
    %6 = vector.extract_strided_slice %2 {offsets = [0, 15, 0], sizes = [4, 1, 16], strides = [1, 1, 1]} : vector<4x16x16xbf16> to vector<4x1x16xbf16>
    %c0_8 = arith.constant 0 : index
    %c17 = arith.constant 17 : index
    %c1_9 = arith.constant 1 : index
    %7 = vector.load %arg6[%c0_8, %c17, %c1_9] : memref<4x18x18xbf16, #tpu.memory_space<vmem>>, vector<4x1x16xbf16>
    tpu.vector_store %arg6[%c0_8, %c17, %c1_9], %6 {strides = array<i32>} : memref<4x18x18xbf16, #tpu.memory_space<vmem>>, vector<4x1x16xbf16>,
    %c0_10 = arith.constant 0 : index
    %c0_11 = arith.constant 0 : index
    %c1_12 = arith.constant 1 : index
    %8 = vector.load %arg6[%c0_10, %c0_11, %c1_12] : memref<4x18x18xbf16, #tpu.memory_space<vmem>>, vector<4x18x1xbf16>
    %c0_13 = arith.constant 0 : index
    %c0_14 = arith.constant 0 : index
    %c0_15 = arith.constant 0 : index
    %9 = vector.load %arg6[%c0_13, %c0_14, %c0_15] : memref<4x18x18xbf16, #tpu.memory_space<vmem>>, vector<4x18x1xbf16>
    tpu.vector_store %arg6[%c0_13, %c0_14, %c0_15], %8 {strides = array<i32>} : memref<4x18x18xbf16, #tpu.memory_space<vmem>>, vector<4x18x1xbf16>,
    %c0_16 = arith.constant 0 : index
    %c0_17 = arith.constant 0 : index
    %c16 = arith.constant 16 : index
    %10 = vector.load %arg6[%c0_16, %c0_17, %c16] : memref<4x18x18xbf16, #tpu.memory_space<vmem>>, vector<4x18x1xbf16>
    %c0_18 = arith.constant 0 : index
    %c0_19 = arith.constant 0 : index
    %c17_20 = arith.constant 17 : index
    %11 = vector.load %arg6[%c0_18, %c0_19, %c17_20] : memref<4x18x18xbf16, #tpu.memory_space<vmem>>, vector<4x18x1xbf16>
    tpu.vector_store %arg6[%c0_18, %c0_19, %c17_20], %10 {strides = array<i32>} : memref<4x18x18xbf16, #tpu.memory_space<vmem>>, vector<4x18x1xbf16>,
    %c0_21 = arith.constant 0 : index
    %c0_22 = arith.constant 0 : index
    %c0_23 = arith.constant 0 : index
    %12 = vector.load %arg6[%c0_21, %c0_22, %c0_23] : memref<4x18x18xbf16, #tpu.memory_space<vmem>>, vector<4x16x16xbf16>
    %13 = vector.shape_cast %12 : vector<4x16x16xbf16> to vector<4x256xbf16>
    %c0_24 = arith.constant 0 : index
    %c0_25 = arith.constant 0 : index
    %c1_26 = arith.constant 1 : index
    %14 = vector.load %arg6[%c0_24, %c0_25, %c1_26] : memref<4x18x18xbf16, #tpu.memory_space<vmem>>, vector<4x16x16xbf16>
    %15 = vector.shape_cast %14 : vector<4x16x16xbf16> to vector<4x256xbf16>
    %c0_27 = arith.constant 0 : index
    %c0_28 = arith.constant 0 : index
    %c2 = arith.constant 2 : index
    %16 = vector.load %arg6[%c0_27, %c0_28, %c2] : memref<4x18x18xbf16, #tpu.memory_space<vmem>>, vector<4x16x16xbf16>
    %17 = vector.shape_cast %16 : vector<4x16x16xbf16> to vector<4x256xbf16>
    %c0_29 = arith.constant 0 : index
    %c1_30 = arith.constant 1 : index
    %c0_31 = arith.constant 0 : index
    %18 = vector.load %arg6[%c0_29, %c1_30, %c0_31] : memref<4x18x18xbf16, #tpu.memory_space<vmem>>, vector<4x16x16xbf16>
    %19 = vector.shape_cast %18 : vector<4x16x16xbf16> to vector<4x256xbf16>
    %c0_32 = arith.constant 0 : index
    %c1_33 = arith.constant 1 : index
    %c1_34 = arith.constant 1 : index
    %20 = vector.load %arg6[%c0_32, %c1_33, %c1_34] : memref<4x18x18xbf16, #tpu.memory_space<vmem>>, vector<4x16x16xbf16>
    %21 = vector.shape_cast %20 : vector<4x16x16xbf16> to vector<4x256xbf16>
    %c0_35 = arith.constant 0 : index
    %c1_36 = arith.constant 1 : index
    %c2_37 = arith.constant 2 : index
    %22 = vector.load %arg6[%c0_35, %c1_36, %c2_37] : memref<4x18x18xbf16, #tpu.memory_space<vmem>>, vector<4x16x16xbf16>
    %23 = vector.shape_cast %22 : vector<4x16x16xbf16> to vector<4x256xbf16>
    %c0_38 = arith.constant 0 : index
    %c2_39 = arith.constant 2 : index
    %c0_40 = arith.constant 0 : index
    %24 = vector.load %arg6[%c0_38, %c2_39, %c0_40] : memref<4x18x18xbf16, #tpu.memory_space<vmem>>, vector<4x16x16xbf16>
    %25 = vector.shape_cast %24 : vector<4x16x16xbf16> to vector<4x256xbf16>
    %c0_41 = arith.constant 0 : index
    %c2_42 = arith.constant 2 : index
    %c1_43 = arith.constant 1 : index
    %26 = vector.load %arg6[%c0_41, %c2_42, %c1_43] : memref<4x18x18xbf16, #tpu.memory_space<vmem>>, vector<4x16x16xbf16>
    %27 = vector.shape_cast %26 : vector<4x16x16xbf16> to vector<4x256xbf16>
    %c0_44 = arith.constant 0 : index
    %c2_45 = arith.constant 2 : index
    %c2_46 = arith.constant 2 : index
    %28 = vector.load %arg6[%c0_44, %c2_45, %c2_46] : memref<4x18x18xbf16, #tpu.memory_space<vmem>>, vector<4x16x16xbf16>
    %29 = vector.shape_cast %28 : vector<4x16x16xbf16> to vector<4x256xbf16>
    %30 = tpu.concatenate %13, %15, %17, %19, %21, %23, %25, %27, %29 in 0 : vector<4x256xbf16>, vector<4x256xbf16>, vector<4x256xbf16>, vector<4x256xbf16>, vector<4x256xbf16>, vector<4x256xbf16>, vector<4x256xbf16>, vector<4x256xbf16>, vector<4x256xbf16> -> vector<36x256xbf16>
    %c0_47 = arith.constant 0 : index
    %c0_48 = arith.constant 0 : index
    %31 = vector.load %arg2[%c0_47, %c0_48] : memref<4x36xbf16, #tpu.memory_space<vmem>>, vector<4x36xbf16>
    %cst = arith.constant dense<0.000000e+00> : vector<4x256xf32>
    %32 = tpu.matmul %31, %30, %cst {dimension_numbers = #tpu.dot_dimension_numbers<[1], [0], [0], [1], [0, 0, 1, 1], [], []>} : vector<4x36xbf16>, vector<36x256xbf16>, vector<4x256xf32> -> vector<4x256xf32>
    %c0_49 = arith.constant 0 : index
    %c0_50 = arith.constant 0 : index
    %33 = vector.load %arg3[%c0_49, %c0_50] : memref<4x1xf32, #tpu.memory_space<vmem>>, vector<4x1xf32>
    %34 = vector.broadcast %33 : vector<4x1xf32> to vector<4x256xf32>
    %35 = arith.addf %32, %34 : vector<4x256xf32>
    %c0_51 = arith.constant 0 : index
    %c0_52 = arith.constant 0 : index
    %c0_53 = arith.constant 0 : index
    %36 = vector.load %arg4[%c0_51, %c0_52, %c0_53] : memref<1x4x256xf32, #tpu.memory_space<vmem>>, vector<1x4x256xf32>
    %37 = vector.shape_cast %36 : vector<1x4x256xf32> to vector<4x256xf32>
    %38 = vector.shape_cast %35 : vector<4x256xf32> to vector<1x4x256xf32>
    tpu.vector_store %arg4[%c0_51, %c0_52, %c0_53], %38 {strides = array<i32>} : memref<1x4x256xf32, #tpu.memory_space<vmem>>, vector<1x4x256xf32>,
    %cst_54 = arith.constant dense<0.000000e+00> : vector<4xf32>
    %39 = vector.multi_reduction <add>, %35, %cst_54 [1] : vector<4x256xf32> to vector<4xf32>
    %40 = vector.shape_cast %39 : vector<4xf32> to vector<4x1xf32>
    %cst_55 = arith.constant 3.906250e-03 : f32
    %41 = vector.broadcast %cst_55 : f32 to vector<4x1xf32>
    %42 = arith.mulf %40, %41 : vector<4x1xf32>
    %43 = vector.broadcast %42 : vector<4x1xf32> to vector<4x256xf32>
    %44 = arith.subf %35, %43 : vector<4x256xf32>
    %45 = arith.mulf %44, %44 : vector<4x256xf32>
    %cst_56 = arith.constant dense<0.000000e+00> : vector<4xf32>
    %46 = vector.multi_reduction <add>, %45, %cst_56 [1] : vector<4x256xf32> to vector<4xf32>
    %47 = vector.shape_cast %46 : vector<4xf32> to vector<4x1xf32>
    %48 = tpu.concatenate %40, %47 in 1 : vector<4x1xf32>, vector<4x1xf32> -> vector<4x2xf32>
    %c0_57 = arith.constant 0 : index
    %c0_58 = arith.constant 0 : index
    %c0_59 = arith.constant 0 : index
    %49 = vector.load %arg5[%c0_57, %c0_58, %c0_59] : memref<1x4x2xf32, #tpu.memory_space<vmem>>, vector<1x4x2xf32>
    %50 = vector.shape_cast %49 : vector<1x4x2xf32> to vector<4x2xf32>
    %51 = vector.shape_cast %48 : vector<4x2xf32> to vector<1x4x2xf32>
    tpu.vector_store %arg5[%c0_57, %c0_58, %c0_59], %51 {strides = array<i32>} : memref<1x4x2xf32, #tpu.memory_space<vmem>>, vector<1x4x2xf32>,
    return
  }
  func.func @transform_0(%arg0: i32) -> (i32, i32, i32, i32) {
    %c0_i32 = arith.constant 0 : i32
    %c0_i32_0 = arith.constant 0 : i32
    %c0_i32_1 = arith.constant 0 : i32
    %c0_i32_2 = arith.constant 0 : i32
    return %arg0, %c0_i32, %c0_i32_0, %c0_i32_1 : i32, i32, i32, i32
  }
  func.func @transform_1(%arg0: i32) -> (i32, i32) {
    %c0_i32 = arith.constant 0 : i32
    %c0_i32_0 = arith.constant 0 : i32
    %c0_i32_1 = arith.constant 0 : i32
    return %c0_i32, %c0_i32_0 : i32, i32
  }
  func.func @transform_2(%arg0: i32) -> (i32, i32) {
    %c0_i32 = arith.constant 0 : i32
    %c0_i32_0 = arith.constant 0 : i32
    %c0_i32_1 = arith.constant 0 : i32
    return %c0_i32, %c0_i32_0 : i32, i32
  }
  func.func @transform_3(%arg0: i32) -> (i32, i32, i32) {
    %c0_i32 = arith.constant 0 : i32
    %c0_i32_0 = arith.constant 0 : i32
    %c0_i32_1 = arith.constant 0 : i32
    return %arg0, %c0_i32, %c0_i32_0 : i32, i32, i32
  }
  func.func @transform_4(%arg0: i32) -> (i32, i32, i32) {
    %c0_i32 = arith.constant 0 : i32
    %c0_i32_0 = arith.constant 0 : i32
    %c0_i32_1 = arith.constant 0 : i32
    return %arg0, %c0_i32, %c0_i32_0 : i32, i32, i32
  }
}

module attributes {stable_mosaic.version = 11 : i64} {
  func.func @bn2_residual_kernel(%arg0: i32, %arg1: memref<1x4x256xf32, #tpu.memory_space<vmem>>, %arg2: memref<1x4x256xf32, #tpu.memory_space<vmem>>, %arg3: memref<4x1xf32, #tpu.memory_space<vmem>>, %arg4: memref<4x1xf32, #tpu.memory_space<vmem>>, %arg5: memref<1x4x256xf32, #tpu.memory_space<vmem>>) attributes {dimension_semantics = [#tpu.dimension_semantics<parallel>], iteration_bounds = array<i64: 2>, scalar_prefetch = 0 : i64, scratch_operands = 0 : i64, tpu.core_type = #tpu.core_type<tc>, window_params = [{transform_indices = @transform_0, window_bounds = array<i64: 1, 4, 256>}, {transform_indices = @transform_1, window_bounds = array<i64: 1, 4, 256>}, {pipeline_mode = #tpu.pipeline_mode<synchronous>, transform_indices = @transform_2, window_bounds = array<i64: 4, 1>}, {pipeline_mode = #tpu.pipeline_mode<synchronous>, transform_indices = @transform_3, window_bounds = array<i64: 4, 1>}, {transform_indices = @transform_4, window_bounds = array<i64: 1, 4, 256>}]} {
    %c0 = arith.constant 0 : index
    %c0_0 = arith.constant 0 : index
    %c0_1 = arith.constant 0 : index
    %0 = vector.load %arg1[%c0, %c0_0, %c0_1] : memref<1x4x256xf32, #tpu.memory_space<vmem>>, vector<1x4x256xf32>
    %1 = vector.shape_cast %0 : vector<1x4x256xf32> to vector<4x256xf32>
    %c0_2 = arith.constant 0 : index
    %c0_3 = arith.constant 0 : index
    %2 = vector.load %arg3[%c0_2, %c0_3] : memref<4x1xf32, #tpu.memory_space<vmem>>, vector<4x1xf32>
    %3 = vector.broadcast %2 : vector<4x1xf32> to vector<4x256xf32>
    %4 = arith.mulf %1, %3 : vector<4x256xf32>
    %c0_4 = arith.constant 0 : index
    %c0_5 = arith.constant 0 : index
    %5 = vector.load %arg4[%c0_4, %c0_5] : memref<4x1xf32, #tpu.memory_space<vmem>>, vector<4x1xf32>
    %6 = vector.broadcast %5 : vector<4x1xf32> to vector<4x256xf32>
    %7 = arith.addf %4, %6 : vector<4x256xf32>
    %c0_6 = arith.constant 0 : index
    %c0_7 = arith.constant 0 : index
    %c0_8 = arith.constant 0 : index
    %8 = vector.load %arg2[%c0_6, %c0_7, %c0_8] : memref<1x4x256xf32, #tpu.memory_space<vmem>>, vector<1x4x256xf32>
    %9 = vector.shape_cast %8 : vector<1x4x256xf32> to vector<4x256xf32>
    %10 = arith.addf %7, %9 : vector<4x256xf32>
    %c0_9 = arith.constant 0 : index
    %c0_10 = arith.constant 0 : index
    %c0_11 = arith.constant 0 : index
    %11 = vector.load %arg5[%c0_9, %c0_10, %c0_11] : memref<1x4x256xf32, #tpu.memory_space<vmem>>, vector<1x4x256xf32>
    %12 = vector.shape_cast %11 : vector<1x4x256xf32> to vector<4x256xf32>
    %13 = vector.shape_cast %10 : vector<4x256xf32> to vector<1x4x256xf32>
    tpu.vector_store %arg5[%c0_9, %c0_10, %c0_11], %13 {strides = array<i32>} : memref<1x4x256xf32, #tpu.memory_space<vmem>>, vector<1x4x256xf32>,
    return
  }
  func.func @transform_0(%arg0: i32) -> (i32, i32, i32) {
    %c0_i32 = arith.constant 0 : i32
    %c0_i32_0 = arith.constant 0 : i32
    %c0_i32_1 = arith.constant 0 : i32
    return %arg0, %c0_i32, %c0_i32_0 : i32, i32, i32
  }
  func.func @transform_1(%arg0: i32) -> (i32, i32, i32) {
    %c0_i32 = arith.constant 0 : i32
    %c0_i32_0 = arith.constant 0 : i32
    %c0_i32_1 = arith.constant 0 : i32
    return %arg0, %c0_i32, %c0_i32_0 : i32, i32, i32
  }
  func.func @transform_2(%arg0: i32) -> (i32, i32) {
    %c0_i32 = arith.constant 0 : i32
    %c0_i32_0 = arith.constant 0 : i32
    %c0_i32_1 = arith.constant 0 : i32
    return %c0_i32, %c0_i32_0 : i32, i32
  }
  func.func @transform_3(%arg0: i32) -> (i32, i32) {
    %c0_i32 = arith.constant 0 : i32
    %c0_i32_0 = arith.constant 0 : i32
    %c0_i32_1 = arith.constant 0 : i32
    return %c0_i32, %c0_i32_0 : i32, i32
  }
  func.func @transform_4(%arg0: i32) -> (i32, i32, i32) {
    %c0_i32 = arith.constant 0 : i32
    %c0_i32_0 = arith.constant 0 : i32
    %c0_i32_1 = arith.constant 0 : i32
    return %arg0, %c0_i32, %c0_i32_0 : i32, i32, i32
  }
}

module attributes {stable_mosaic.version = 11 : i64} {
  func.func @conv2_kernel(%arg0: i32, %arg1: memref<1x4x256xf32, #tpu.memory_space<vmem>>, %arg2: memref<4x1xf32, #tpu.memory_space<vmem>>, %arg3: memref<4x1xf32, #tpu.memory_space<vmem>>, %arg4: memref<4x1xf32, #tpu.memory_space<vmem>>, %arg5: memref<4x36xbf16, #tpu.memory_space<vmem>>, %arg6: memref<4x1xf32, #tpu.memory_space<vmem>>, %arg7: memref<1x4x256xf32, #tpu.memory_space<vmem>>, %arg8: memref<1x4x2xf32, #tpu.memory_space<vmem>>, %arg9: memref<4x18x18xbf16, #tpu.memory_space<vmem>>) attributes {dimension_semantics = [#tpu.dimension_semantics<parallel>], iteration_bounds = array<i64: 2>, scalar_prefetch = 0 : i64, scratch_operands = 1 : i64, tpu.core_type = #tpu.core_type<tc>, window_params = [{transform_indices = @transform_0, window_bounds = array<i64: 1, 4, 256>}, {pipeline_mode = #tpu.pipeline_mode<synchronous>, transform_indices = @transform_1, window_bounds = array<i64: 4, 1>}, {pipeline_mode = #tpu.pipeline_mode<synchronous>, transform_indices = @transform_2, window_bounds = array<i64: 4, 1>}, {pipeline_mode = #tpu.pipeline_mode<synchronous>, transform_indices = @transform_3, window_bounds = array<i64: 4, 1>}, {pipeline_mode = #tpu.pipeline_mode<synchronous>, transform_indices = @transform_4, window_bounds = array<i64: 4, 36>}, {pipeline_mode = #tpu.pipeline_mode<synchronous>, transform_indices = @transform_5, window_bounds = array<i64: 4, 1>}, {transform_indices = @transform_6, window_bounds = array<i64: 1, 4, 256>}, {transform_indices = @transform_7, window_bounds = array<i64: 1, 4, 2>}]} {
    %c0 = arith.constant 0 : index
    %c0_0 = arith.constant 0 : index
    %c0_1 = arith.constant 0 : index
    %0 = vector.load %arg1[%c0, %c0_0, %c0_1] : memref<1x4x256xf32, #tpu.memory_space<vmem>>, vector<1x4x256xf32>
    %1 = vector.shape_cast %0 : vector<1x4x256xf32> to vector<4x256xf32>
    %c0_2 = arith.constant 0 : index
    %c0_3 = arith.constant 0 : index
    %2 = vector.load %arg2[%c0_2, %c0_3] : memref<4x1xf32, #tpu.memory_space<vmem>>, vector<4x1xf32>
    %3 = vector.broadcast %2 : vector<4x1xf32> to vector<4x256xf32>
    %4 = arith.mulf %1, %3 : vector<4x256xf32>
    %c0_4 = arith.constant 0 : index
    %c0_5 = arith.constant 0 : index
    %5 = vector.load %arg3[%c0_4, %c0_5] : memref<4x1xf32, #tpu.memory_space<vmem>>, vector<4x1xf32>
    %6 = vector.broadcast %5 : vector<4x1xf32> to vector<4x256xf32>
    %7 = arith.addf %4, %6 : vector<4x256xf32>
    %cst = arith.constant 0.000000e+00 : f32
    %8 = vector.broadcast %cst : f32 to vector<4x256xf32>
    %9 = arith.cmpf ogt, %7, %8 : vector<4x256xf32>
    %c0_6 = arith.constant 0 : index
    %c0_7 = arith.constant 0 : index
    %10 = vector.load %arg4[%c0_6, %c0_7] : memref<4x1xf32, #tpu.memory_space<vmem>>, vector<4x1xf32>
    %11 = vector.broadcast %10 : vector<4x1xf32> to vector<4x256xf32>
    %12 = arith.mulf %11, %7 : vector<4x256xf32>
    %13 = arith.select %9, %7, %12 : vector<4x256xi1>, vector<4x256xf32>
    %14 = arith.truncf %13 : vector<4x256xf32> to vector<4x256xbf16>
    %15 = vector.shape_cast %14 : vector<4x256xbf16> to vector<4x16x16xbf16>
    %c0_8 = arith.constant 0 : index
    %c1 = arith.constant 1 : index
    %c1_9 = arith.constant 1 : index
    %16 = vector.load %arg9[%c0_8, %c1, %c1_9] : memref<4x18x18xbf16, #tpu.memory_space<vmem>>, vector<4x16x16xbf16>
    tpu.vector_store %arg9[%c0_8, %c1, %c1_9], %15 {strides = array<i32>} : memref<4x18x18xbf16, #tpu.memory_space<vmem>>, vector<4x16x16xbf16>,
    %17 = vector.extract_strided_slice %15 {offsets = [0, 0, 0], sizes = [4, 1, 16], strides = [1, 1, 1]} : vector<4x16x16xbf16> to vector<4x1x16xbf16>
    %c0_10 = arith.constant 0 : index
    %c0_11 = arith.constant 0 : index
    %c1_12 = arith.constant 1 : index
    %18 = vector.load %arg9[%c0_10, %c0_11, %c1_12] : memref<4x18x18xbf16, #tpu.memory_space<vmem>>, vector<4x1x16xbf16>
    tpu.vector_store %arg9[%c0_10, %c0_11, %c1_12], %17 {strides = array<i32>} : memref<4x18x18xbf16, #tpu.memory_space<vmem>>, vector<4x1x16xbf16>,
    %19 = vector.extract_strided_slice %15 {offsets = [0, 15, 0], sizes = [4, 1, 16], strides = [1, 1, 1]} : vector<4x16x16xbf16> to vector<4x1x16xbf16>
    %c0_13 = arith.constant 0 : index
    %c17 = arith.constant 17 : index
    %c1_14 = arith.constant 1 : index
    %20 = vector.load %arg9[%c0_13, %c17, %c1_14] : memref<4x18x18xbf16, #tpu.memory_space<vmem>>, vector<4x1x16xbf16>
    tpu.vector_store %arg9[%c0_13, %c17, %c1_14], %19 {strides = array<i32>} : memref<4x18x18xbf16, #tpu.memory_space<vmem>>, vector<4x1x16xbf16>,
    %c0_15 = arith.constant 0 : index
    %c0_16 = arith.constant 0 : index
    %c1_17 = arith.constant 1 : index
    %21 = vector.load %arg9[%c0_15, %c0_16, %c1_17] : memref<4x18x18xbf16, #tpu.memory_space<vmem>>, vector<4x18x1xbf16>
    %c0_18 = arith.constant 0 : index
    %c0_19 = arith.constant 0 : index
    %c0_20 = arith.constant 0 : index
    %22 = vector.load %arg9[%c0_18, %c0_19, %c0_20] : memref<4x18x18xbf16, #tpu.memory_space<vmem>>, vector<4x18x1xbf16>
    tpu.vector_store %arg9[%c0_18, %c0_19, %c0_20], %21 {strides = array<i32>} : memref<4x18x18xbf16, #tpu.memory_space<vmem>>, vector<4x18x1xbf16>,
    %c0_21 = arith.constant 0 : index
    %c0_22 = arith.constant 0 : index
    %c16 = arith.constant 16 : index
    %23 = vector.load %arg9[%c0_21, %c0_22, %c16] : memref<4x18x18xbf16, #tpu.memory_space<vmem>>, vector<4x18x1xbf16>
    %c0_23 = arith.constant 0 : index
    %c0_24 = arith.constant 0 : index
    %c17_25 = arith.constant 17 : index
    %24 = vector.load %arg9[%c0_23, %c0_24, %c17_25] : memref<4x18x18xbf16, #tpu.memory_space<vmem>>, vector<4x18x1xbf16>
    tpu.vector_store %arg9[%c0_23, %c0_24, %c17_25], %23 {strides = array<i32>} : memref<4x18x18xbf16, #tpu.memory_space<vmem>>, vector<4x18x1xbf16>,
    %c0_26 = arith.constant 0 : index
    %c0_27 = arith.constant 0 : index
    %c0_28 = arith.constant 0 : index
    %25 = vector.load %arg9[%c0_26, %c0_27, %c0_28] : memref<4x18x18xbf16, #tpu.memory_space<vmem>>, vector<4x16x16xbf16>
    %26 = vector.shape_cast %25 : vector<4x16x16xbf16> to vector<4x256xbf16>
    %c0_29 = arith.constant 0 : index
    %c0_30 = arith.constant 0 : index
    %c1_31 = arith.constant 1 : index
    %27 = vector.load %arg9[%c0_29, %c0_30, %c1_31] : memref<4x18x18xbf16, #tpu.memory_space<vmem>>, vector<4x16x16xbf16>
    %28 = vector.shape_cast %27 : vector<4x16x16xbf16> to vector<4x256xbf16>
    %c0_32 = arith.constant 0 : index
    %c0_33 = arith.constant 0 : index
    %c2 = arith.constant 2 : index
    %29 = vector.load %arg9[%c0_32, %c0_33, %c2] : memref<4x18x18xbf16, #tpu.memory_space<vmem>>, vector<4x16x16xbf16>
    %30 = vector.shape_cast %29 : vector<4x16x16xbf16> to vector<4x256xbf16>
    %c0_34 = arith.constant 0 : index
    %c1_35 = arith.constant 1 : index
    %c0_36 = arith.constant 0 : index
    %31 = vector.load %arg9[%c0_34, %c1_35, %c0_36] : memref<4x18x18xbf16, #tpu.memory_space<vmem>>, vector<4x16x16xbf16>
    %32 = vector.shape_cast %31 : vector<4x16x16xbf16> to vector<4x256xbf16>
    %c0_37 = arith.constant 0 : index
    %c1_38 = arith.constant 1 : index
    %c1_39 = arith.constant 1 : index
    %33 = vector.load %arg9[%c0_37, %c1_38, %c1_39] : memref<4x18x18xbf16, #tpu.memory_space<vmem>>, vector<4x16x16xbf16>
    %34 = vector.shape_cast %33 : vector<4x16x16xbf16> to vector<4x256xbf16>
    %c0_40 = arith.constant 0 : index
    %c1_41 = arith.constant 1 : index
    %c2_42 = arith.constant 2 : index
    %35 = vector.load %arg9[%c0_40, %c1_41, %c2_42] : memref<4x18x18xbf16, #tpu.memory_space<vmem>>, vector<4x16x16xbf16>
    %36 = vector.shape_cast %35 : vector<4x16x16xbf16> to vector<4x256xbf16>
    %c0_43 = arith.constant 0 : index
    %c2_44 = arith.constant 2 : index
    %c0_45 = arith.constant 0 : index
    %37 = vector.load %arg9[%c0_43, %c2_44, %c0_45] : memref<4x18x18xbf16, #tpu.memory_space<vmem>>, vector<4x16x16xbf16>
    %38 = vector.shape_cast %37 : vector<4x16x16xbf16> to vector<4x256xbf16>
    %c0_46 = arith.constant 0 : index
    %c2_47 = arith.constant 2 : index
    %c1_48 = arith.constant 1 : index
    %39 = vector.load %arg9[%c0_46, %c2_47, %c1_48] : memref<4x18x18xbf16, #tpu.memory_space<vmem>>, vector<4x16x16xbf16>
    %40 = vector.shape_cast %39 : vector<4x16x16xbf16> to vector<4x256xbf16>
    %c0_49 = arith.constant 0 : index
    %c2_50 = arith.constant 2 : index
    %c2_51 = arith.constant 2 : index
    %41 = vector.load %arg9[%c0_49, %c2_50, %c2_51] : memref<4x18x18xbf16, #tpu.memory_space<vmem>>, vector<4x16x16xbf16>
    %42 = vector.shape_cast %41 : vector<4x16x16xbf16> to vector<4x256xbf16>
    %43 = tpu.concatenate %26, %28, %30, %32, %34, %36, %38, %40, %42 in 0 : vector<4x256xbf16>, vector<4x256xbf16>, vector<4x256xbf16>, vector<4x256xbf16>, vector<4x256xbf16>, vector<4x256xbf16>, vector<4x256xbf16>, vector<4x256xbf16>, vector<4x256xbf16> -> vector<36x256xbf16>
    %c0_52 = arith.constant 0 : index
    %c0_53 = arith.constant 0 : index
    %44 = vector.load %arg5[%c0_52, %c0_53] : memref<4x36xbf16, #tpu.memory_space<vmem>>, vector<4x36xbf16>
    %cst_54 = arith.constant dense<0.000000e+00> : vector<4x256xf32>
    %45 = tpu.matmul %44, %43, %cst_54 {dimension_numbers = #tpu.dot_dimension_numbers<[1], [0], [0], [1], [0, 0, 1, 1], [], []>} : vector<4x36xbf16>, vector<36x256xbf16>, vector<4x256xf32> -> vector<4x256xf32>
    %c0_55 = arith.constant 0 : index
    %c0_56 = arith.constant 0 : index
    %46 = vector.load %arg6[%c0_55, %c0_56] : memref<4x1xf32, #tpu.memory_space<vmem>>, vector<4x1xf32>
    %47 = vector.broadcast %46 : vector<4x1xf32> to vector<4x256xf32>
    %48 = arith.addf %45, %47 : vector<4x256xf32>
    %c0_57 = arith.constant 0 : index
    %c0_58 = arith.constant 0 : index
    %c0_59 = arith.constant 0 : index
    %49 = vector.load %arg7[%c0_57, %c0_58, %c0_59] : memref<1x4x256xf32, #tpu.memory_space<vmem>>, vector<1x4x256xf32>
    %50 = vector.shape_cast %49 : vector<1x4x256xf32> to vector<4x256xf32>
    %51 = vector.shape_cast %48 : vector<4x256xf32> to vector<1x4x256xf32>
    tpu.vector_store %arg7[%c0_57, %c0_58, %c0_59], %51 {strides = array<i32>} : memref<1x4x256xf32, #tpu.memory_space<vmem>>, vector<1x4x256xf32>,
    %cst_60 = arith.constant dense<0.000000e+00> : vector<4xf32>
    %52 = vector.multi_reduction <add>, %48, %cst_60 [1] : vector<4x256xf32> to vector<4xf32>
    %53 = vector.shape_cast %52 : vector<4xf32> to vector<4x1xf32>
    %cst_61 = arith.constant 3.906250e-03 : f32
    %54 = vector.broadcast %cst_61 : f32 to vector<4x1xf32>
    %55 = arith.mulf %53, %54 : vector<4x1xf32>
    %56 = vector.broadcast %55 : vector<4x1xf32> to vector<4x256xf32>
    %57 = arith.subf %48, %56 : vector<4x256xf32>
    %58 = arith.mulf %57, %57 : vector<4x256xf32>
    %cst_62 = arith.constant dense<0.000000e+00> : vector<4xf32>
    %59 = vector.multi_reduction <add>, %58, %cst_62 [1] : vector<4x256xf32> to vector<4xf32>
    %60 = vector.shape_cast %59 : vector<4xf32> to vector<4x1xf32>
    %61 = tpu.concatenate %53, %60 in 1 : vector<4x1xf32>, vector<4x1xf32> -> vector<4x2xf32>
    %c0_63 = arith.constant 0 : index
    %c0_64 = arith.constant 0 : index
    %c0_65 = arith.constant 0 : index
    %62 = vector.load %arg8[%c0_63, %c0_64, %c0_65] : memref<1x4x2xf32, #tpu.memory_space<vmem>>, vector<1x4x2xf32>
    %63 = vector.shape_cast %62 : vector<1x4x2xf32> to vector<4x2xf32>
    %64 = vector.shape_cast %61 : vector<4x2xf32> to vector<1x4x2xf32>
    tpu.vector_store %arg8[%c0_63, %c0_64, %c0_65], %64 {strides = array<i32>} : memref<1x4x2xf32, #tpu.memory_space<vmem>>, vector<1x4x2xf32>,
    return
  }
  func.func @transform_0(%arg0: i32) -> (i32, i32, i32) {
    %c0_i32 = arith.constant 0 : i32
    %c0_i32_0 = arith.constant 0 : i32
    %c0_i32_1 = arith.constant 0 : i32
    return %arg0, %c0_i32, %c0_i32_0 : i32, i32, i32
  }
  func.func @transform_1(%arg0: i32) -> (i32, i32) {
    %c0_i32 = arith.constant 0 : i32
    %c0_i32_0 = arith.constant 0 : i32
    %c0_i32_1 = arith.constant 0 : i32
    return %c0_i32, %c0_i32_0 : i32, i32
  }
  func.func @transform_2(%arg0: i32) -> (i32, i32) {
    %c0_i32 = arith.constant 0 : i32
    %c0_i32_0 = arith.constant 0 : i32
    %c0_i32_1 = arith.constant 0 : i32
    return %c0_i32, %c0_i32_0 : i32, i32
  }
  func.func @transform_3(%arg0: i32) -> (i32, i32) {
    %c0_i32 = arith.constant 0 : i32
    %c0_i32_0 = arith.constant 0 : i32
    %c0_i32_1 = arith.constant 0 : i32
    return %c0_i32, %c0_i32_0 : i32, i32
  }
  func.func @transform_4(%arg0: i32) -> (i32, i32) {
    %c0_i32 = arith.constant 0 : i32
    %c0_i32_0 = arith.constant 0 : i32
    %c0_i32_1 = arith.constant 0 : i32
    return %c0_i32, %c0_i32_0 : i32, i32
  }
  func.func @transform_5(%arg0: i32) -> (i32, i32) {
    %c0_i32 = arith.constant 0 : i32
    %c0_i32_0 = arith.constant 0 : i32
    %c0_i32_1 = arith.constant 0 : i32
    return %c0_i32, %c0_i32_0 : i32, i32
  }
  func.func @transform_6(%arg0: i32) -> (i32, i32, i32) {
    %c0_i32 = arith.constant 0 : i32
    %c0_i32_0 = arith.constant 0 : i32
    %c0_i32_1 = arith.constant 0 : i32
    return %arg0, %c0_i32, %c0_i32_0 : i32, i32, i32
  }
  func.func @transform_7(%arg0: i32) -> (i32, i32, i32) {
    %c0_i32 = arith.constant 0 : i32
    %c0_i32_0 = arith.constant 0 : i32
    %c0_i32_1 = arith.constant 0 : i32
    return %arg0, %c0_i32, %c0_i32_0 : i32, i32, i32
  }
}

</mosaic_0001>

<llo_original>
// kernel: residual_block.5
$region0: #{residual_block.5}
  #allocation0 [shape = 'u32[]', space=smem, size = 0x4, offset = 0x4, fixed_abs, tag = 'smem constant byte address 0x4 - core index']
  #allocation1 [shape = 'u32[144,128]{1,0:T(1,128)}', space=vmem, size = 0x12000, scoped, tag = 'internal scratch']
  %s0 = inlined_call_operand.vmem [shape: f32[2,4,256], index: 0, kind: input, shape index: {}]
  %s1 = inlined_call_operand.vmem [shape: f32[2,4,256], index: 1, kind: input, shape index: {}]
  %s2 = inlined_call_operand.vmem [shape: f32[4,1], index: 2, kind: input, shape index: {}]
  %s3 = inlined_call_operand.vmem [shape: f32[4,1], index: 3, kind: input, shape index: {}]
  %s4 = inlined_call_operand.vmem [shape: f32[2,4,256], index: 4, kind: output, shape index: {}]
  %s5 = sld [smem:[#allocation0]]
  $region49: #{residual_block.5} parent=0
    _
  %s7 = ssub.s32 1, %s5
  %s8 = scalar_select 0, %s7, %s5
  loop: start=0, step=1, limit=4
  $region2: #{residual_block.5} parent=0 // loop_pre_header
    _
  $region3: #{residual_block.5} parent=0 // loop_header
    %s10 = sphi 0, %s14
    %p11 = scmp.ge.s32.totalorder %s10, 4
    %s20 = sphi 0, %s22
    %s23 = sphi 0, %s20
    %s24 = sphi 0, %s23
    %s40 = sphi 0, %s24
    %s46 = sphi 0, %s48
    %s49 = sphi 0, %s46
    %s50 = sphi 0, %s49
    %s66 = sphi 0, %s50
    %s70 = sphi 0, %s70
    %s72 = sphi 0, %s70
    %s73 = sphi 0, %s72
    %s87 = sphi 0, %s73
    %s91 = sphi 0, %s91
    %s93 = sphi 0, %s91
    %s94 = sphi 0, %s93
    %s108 = sphi 0, %s94
    %s114 = sphi 0, %s116
    %s117 = sphi 0, %s114
    %s118 = sphi 0, %s117
    %s134 = sphi 0, %s118
  $region4: #{residual_block.5} parent=0 // loop_header_branch
    %13 = sbr.rel (%p11) target = $region8
  $region5: #{residual_block.5} parent=0 // loop_body
    %s15 = ssub.s32 %s10, 1
    %s16 = ssub.s32 %s10, 2
    %s17 = sadd.s32 %s10, 1
    %s18 = ssub.s32 %s10, %s17
    %p19 = scmp.eq.s32.totalorder %s18, 0
    %s21 = sadd.s32 %s20, 1
    %s22 = scalar_select %p19, %s20, %s21
    %p25 = pneg %p19
    %p26 = scmp.eq.s32.totalorder %s10, 1
    %p27 = por %p25, %p26
    %p28 = scmp.ne.s32.totalorder %s20, %s23
    %p29 = scmp.eq.s32.totalorder %s10, 0
    %p30 = por %p28, %p29
    %p31 = scmp.ne.s32.totalorder %s20, %s23
    %p32 = scmp.eq.s32.totalorder %s15, 1
    %p33 = por %p31, %p32
    %p34 = scmp.ne.s32.totalorder %s23, %s24
    %p35 = scmp.eq.s32.totalorder %s15, 0
    %p36 = por %p34, %p35
    %p37 = scmp.ne.s32.totalorder %s23, %s24
    %p38 = scmp.eq.s32.totalorder %s16, 1
    %p39 = por %p37, %p38
    %p41 = scmp.ne.s32.totalorder %s24, %s40
    %p42 = scmp.eq.s32.totalorder %s16, 0
    %p43 = por %p41, %p42
    %s44 = ssub.s32 %s10, %s17
    %p45 = scmp.eq.s32.totalorder %s44, 0
    %s47 = sadd.s32 %s46, 1
    %s48 = scalar_select %p45, %s46, %s47
    %p51 = pneg %p45
    %p52 = scmp.eq.s32.totalorder %s10, 1
    %p53 = por %p51, %p52
    %p54 = scmp.ne.s32.totalorder %s46, %s49
    %p55 = scmp.eq.s32.totalorder %s10, 0
    %p56 = por %p54, %p55
    %p57 = scmp.ne.s32.totalorder %s46, %s49
    %p58 = scmp.eq.s32.totalorder %s15, 1
    %p59 = por %p57, %p58
    %p60 = scmp.ne.s32.totalorder %s49, %s50
    %p61 = scmp.eq.s32.totalorder %s15, 0
    %p62 = por %p60, %p61
    %p63 = scmp.ne.s32.totalorder %s49, %s50
    %p64 = scmp.eq.s32.totalorder %s16, 1
    %p65 = por %p63, %p64
    %p67 = scmp.ne.s32.totalorder %s50, %s66
    %p68 = scmp.eq.s32.totalorder %s16, 0
    %p69 = por %p67, %p68
    %s71 = sadd.s32 %s70, 1
    %p74 = scmp.eq.s32.totalorder %s10, 1
    %p75 = scmp.ne.s32.totalorder %s70, %s72
    %p76 = scmp.eq.s32.totalorder %s10, 0
    %p77 = por %p75, %p76
    %p78 = scmp.ne.s32.totalorder %s70, %s72
    %p79 = scmp.eq.s32.totalorder %s15, 1
    %p80 = por %p78, %p79
    %p81 = scmp.ne.s32.totalorder %s72, %s73
    %p82 = scmp.eq.s32.totalorder %s15, 0
    %p83 = por %p81, %p82
    %p84 = scmp.ne.s32.totalorder %s72, %s73
    %p85 = scmp.eq.s32.totalorder %s16, 1
    %p86 = por %p84, %p85
    %p88 = scmp.ne.s32.totalorder %s73, %s87
    %p89 = scmp.eq.s32.totalorder %s16, 0
    %p90 = por %p88, %p89
    %s92 = sadd.s32 %s91, 1
    %p95 = scmp.eq.s32.totalorder %s10, 1
    %p96 = scmp.ne.s32.totalorder %s91, %s93
    %p97 = scmp.eq.s32.totalorder %s10, 0
    %p98 = por %p96, %p97
    %p99 = scmp.ne.s32.totalorder %s91, %s93
    %p100 = scmp.eq.s32.totalorder %s15, 1
    %p101 = por %p99, %p100
    %p102 = scmp.ne.s32.totalorder %s93, %s94
    %p103 = scmp.eq.s32.totalorder %s15, 0
    %p104 = por %p102, %p103
    %p105 = scmp.ne.s32.totalorder %s93, %s94
    %p106 = scmp.eq.s32.totalorder %s16, 1
    %p107 = por %p105, %p106
    %p109 = scmp.ne.s32.totalorder %s94, %s108
    %p110 = scmp.eq.s32.totalorder %s16, 0
    %p111 = por %p109, %p110
    %s112 = ssub.s32 %s10, %s17
    %p113 = scmp.eq.s32.totalorder %s112, 0
    %s115 = sadd.s32 %s114, 1
    %s116 = scalar_select %p113, %s114, %s115
    %p119 = pneg %p113
    %p120 = scmp.eq.s32.totalorder %s10, 1
    %p121 = por %p119, %p120
    %p122 = scmp.ne.s32.totalorder %s114, %s117
    %p123 = scmp.eq.s32.totalorder %s10, 0
    %p124 = por %p122, %p123
    %p125 = scmp.ne.s32.totalorder %s114, %s117
    %p126 = scmp.eq.s32.totalorder %s15, 1
    %p127 = por %p125, %p126
    %p128 = scmp.ne.s32.totalorder %s117, %s118
    %p129 = scmp.eq.s32.totalorder %s15, 0
    %p130 = por %p128, %p129
    %p131 = scmp.ne.s32.totalorder %s117, %s118
    %p132 = scmp.eq.s32.totalorder %s16, 1
    %p133 = por %p131, %p132
    %p135 = scmp.ne.s32.totalorder %s118, %s134
    %p136 = scmp.eq.s32.totalorder %s16, 0
    %p137 = por %p135, %p136
    %p138 = scmp.le.s32.totalorder 1, %s10
    %p139 = scmp.lt.s32.totalorder %s10, 3
    %p140 = pnand %p138, %p139
    %p141 = pneg %p140
    // Predicated region
    $region9: #{residual_block.5} parent=5 // pred_check
      _
    $region10: #{residual_block.5} parent=5 // pred_check_branch
      %143 = sbr.rel (%p140) target = $region12
    $region11: #{residual_block.5} parent=5 // pred_region
      %s144 = ssub.s32 %s10, 1
      // Predicated region
      $region13: #{residual_block.5} parent=11 // pred_check
        %p145 = pneg %p83
      $region14: #{residual_block.5} parent=11 // pred_check_branch
        %147 = sbr.rel (%p145) target = $region16
      $region15: #{residual_block.5} parent=11 // pred_region
        _
      $region16: #{residual_block.5} parent=11 // pred_fallthru
        _
      // Predicated region
      $region17: #{residual_block.5} parent=11 // pred_check
        %p148 = pneg %p104
      $region18: #{residual_block.5} parent=11 // pred_check_branch
        %150 = sbr.rel (%p148) target = $region20
      $region19: #{residual_block.5} parent=11 // pred_region
        _
      $region20: #{residual_block.5} parent=11 // pred_fallthru
        _
    $region12: #{residual_block.5} parent=5 // pred_fallthru
      _
    %p151 = scmp.lt.s32.totalorder %s10, 2
    // Predicated region
    $region21: #{residual_block.5} parent=5 // pred_check
      %p152 = pneg %p151
    $region22: #{residual_block.5} parent=5 // pred_check_branch
      %154 = sbr.rel (%p152) target = $region24
    $region23: #{residual_block.5} parent=5 // pred_region
      // Predicated region
      $region25: #{residual_block.5} parent=23 // pred_check
        %p155 = pneg %p30
      $region26: #{residual_block.5} parent=23 // pred_check_branch
        %157 = sbr.rel (%p155) target = $region28
      $region27: #{residual_block.5} parent=23 // pred_region
        %p158 = scmp.lt.s32.totalorder %s10, 1
        %s159 = scalar_select %p158, %s10, 1
        %s160 = smul.addr %s159, 2
        %s161 = smul.addr %s160, 4
        %s162 = scalar_lea.vmem %s0, %s161
      $region28: #{residual_block.5} parent=23 // pred_fallthru
        _
      // Predicated region
      $region29: #{residual_block.5} parent=23 // pred_check
        %p163 = pneg %p56
      $region30: #{residual_block.5} parent=23 // pred_check_branch
        %165 = sbr.rel (%p163) target = $region32
      $region31: #{residual_block.5} parent=23 // pred_region
        %p166 = scmp.lt.s32.totalorder %s10, 1
        %s167 = scalar_select %p166, %s10, 1
        %s168 = smul.addr %s167, 2
        %s169 = smul.addr %s168, 4
        %s170 = scalar_lea.vmem %s1, %s169
      $region32: #{residual_block.5} parent=23 // pred_fallthru
        _
    $region24: #{residual_block.5} parent=5 // pred_fallthru
      _
    %p171 = scmp.le.s32.totalorder 1, %s10
    %p172 = scmp.lt.s32.totalorder %s10, 3
    %p173 = pnand %p171, %p172
    %p174 = pneg %p173
    // Predicated region
    $region33: #{residual_block.5} parent=5 // pred_check
      _
    $region34: #{residual_block.5} parent=5 // pred_check_branch
      %176 = sbr.rel (%p173) target = $region36
    $region35: #{residual_block.5} parent=5 // pred_region
      %s177 = ssub.s32 %s10, 1
      %p178 = scmp.lt.s32.totalorder %s15, 1
      %s179 = scalar_select %p178, %s15, 1
      %s180 = smul.addr %s179, 2
      %s181 = smul.addr %s180, 4
      %s182 = scalar_lea.vmem %s0, %s181
      %p183 = pneg %p36
      %p184 = pneg %p33
      %p185 = scmp.lt.s32.totalorder %s15, 1
      %s186 = scalar_select %p185, %s15, 1
      %s187 = smul.addr %s186, 2
      %s188 = smul.addr %s187, 4
      %s189 = scalar_lea.vmem %s1, %s188
      %p190 = pneg %p62
      %p191 = pneg %p59
      %p192 = pneg %p83
      %p193 = pneg %p80
      %p194 = pneg %p104
      %p195 = pneg %p101
      %p196 = pneg %p130
      %p197 = pneg %p127
      %p198 = scmp.lt.s32.totalorder %s15, 1
      %s199 = scalar_select %p198, %s15, 1
      %s200 = smul.addr %s199, 2
      %s201 = smul.addr %s200, 4
      %s202 = scalar_lea.vmem %s4, %s201
      %p203 = scmp.lt.s32.totalorder %s15, 1
      %s204 = scalar_select %p203, %s15, 1
      %s205 = smul.addr %s204, 2
      %s206 = smul.addr %s205, 4
      %s207 = scalar_lea.vmem %s0, %s206
      %p208 = scmp.lt.s32.totalorder %s15, 1
      %s209 = scalar_select %p208, %s15, 1
      %s210 = smul.addr %s209, 2
      %s211 = smul.addr %s210, 4
      %s212 = scalar_lea.vmem %s1, %s211
      %p213 = scmp.lt.s32.totalorder %s15, 1
      %s214 = scalar_select %p213, %s15, 1
      %s215 = smul.addr %s214, 2
      %s216 = smul.addr %s215, 4
      %s217 = scalar_lea.vmem %s4, %s216
      %v218 = vld [vmem:[%s207] sm:$0xff]
      %v219 = vld [vmem:[%s2] sm:$0xf]
      %221 = vset.pattern.permute.xlu0 0
      %222 = vperm.xlu0 %221, %v219
      %v223 = vpop.permute.xlu0 %222
      %v225 = vunpack.c.l.s4 839922192
      %v226 = vunpack.c.0.s8 %v225
      %v227 = vlaneseq
      %v228 = vshrl.u32 %v227, 7
      %v229 = vsub.s32 %v226, %v228
      %v230 = vrot.slane %v223, %v229
      %v232 = vmul.f32 %v218, %v230
      %v233 = vld [vmem:[%s3] sm:$0xf]
      %235 = vset.pattern.permute.xlu0 0
      %236 = vperm.xlu0 %235, %v233
      %v237 = vpop.permute.xlu0 %236
      %v239 = vunpack.c.l.s4 839922192
      %v240 = vunpack.c.0.s8 %v239
      %v241 = vlaneseq
      %v242 = vshrl.u32 %v241, 7
      %v243 = vsub.s32 %v240, %v242
      %v244 = vrot.slane %v237, %v243
      %v246 = vadd.f32 %v232, %v244
      %v247 = vld [vmem:[%s212] sm:$0xff]
      %v248 = vadd.f32 %v246, %v247
      %249 = vst [vmem:[%s217] sm:$0xff] %v248
      %p250 = scmp.lt.s32.totalorder %s15, 1
      %s251 = scalar_select %p250, %s15, 1
      %s252 = smul.addr %s251, 2
      %s253 = smul.addr %s252, 4
      %s254 = scalar_lea.vmem %s4, %s253
      // Predicated region
      $region37: #{residual_block.5} parent=35 // pred_check
        %p255 = pneg %p127
      $region38: #{residual_block.5} parent=35 // pred_check_branch
        %257 = sbr.rel (%p255) target = $region40
      $region39: #{residual_block.5} parent=35 // pred_region
        _
      $region40: #{residual_block.5} parent=35 // pred_fallthru
        _
    $region36: #{residual_block.5} parent=5 // pred_fallthru
      _
    %p258 = scmp.le.s32.totalorder 2, %s10
    // Predicated region
    $region41: #{residual_block.5} parent=5 // pred_check
      %p259 = pneg %p258
    $region42: #{residual_block.5} parent=5 // pred_check_branch
      %261 = sbr.rel (%p259) target = $region44
    $region43: #{residual_block.5} parent=5 // pred_region
      %s262 = ssub.s32 %s10, 2
      // Predicated region
      $region45: #{residual_block.5} parent=43 // pred_check
        %p263 = pneg %p133
      $region46: #{residual_block.5} parent=43 // pred_check_branch
        %265 = sbr.rel (%p263) target = $region48
      $region47: #{residual_block.5} parent=43 // pred_region
        %p266 = scmp.lt.s32.totalorder %s16, 1
        %s267 = scalar_select %p266, %s16, 1
        %s268 = smul.addr %s267, 2
        %s269 = smul.addr %s268, 4
        %s270 = scalar_lea.vmem %s4, %s269
      $region48: #{residual_block.5} parent=43 // pred_fallthru
        _
    $region44: #{residual_block.5} parent=5 // pred_fallthru
      _
  $region6: #{residual_block.5} parent=0 // loop_footer
    %s14 = sadd.s32 1, %s10
  $region7: #{residual_block.5} parent=0 // loop_footer_branch
    %9 = sbr.rel target = $region3
  $region8: #{residual_block.5} parent=0 // loop_exit
    _

// kernel: residual_block.3
$region0: #{residual_block.3}
  #allocation0 [shape = 'u32[]', space=smem, size = 0x4, offset = 0x4, fixed_abs, tag = 'smem constant byte address 0x4 - core index']
  #allocation1 [shape = 'u32[144,128]{1,0:T(1,128)}', space=vmem, size = 0x12000, scoped, tag = 'internal scratch']
  #allocation2 [shape = 'bf16[4,18,18]{2,1,0:T(8,128)(2,1)}', space=vmem, size = 0x6000, scoped, tag = 'scratch operand']
  %s0 = inlined_call_operand.vmem [shape: f32[2,4,16,16], index: 0, kind: input, shape index: {}]
  %s1 = inlined_call_operand.vmem [shape: bf16[4,36], index: 1, kind: input, shape index: {}]
  %s2 = inlined_call_operand.vmem [shape: f32[4,1], index: 2, kind: input, shape index: {}]
  %s3 = inlined_call_operand.vmem [shape: f32[2,4,256], index: 3, kind: output, shape index: {0}]
  %s4 = inlined_call_operand.vmem [shape: f32[2,4,2], index: 4, kind: output, shape index: {1}]
  %5 = xla_tuple %s3, %s4
  %s6 = sld [smem:[#allocation0]]
  $region53: #{residual_block.3} parent=0
    _
  %s8 = ssub.s32 1, %s6
  %s9 = scalar_select 0, %s8, %s6
  loop: start=0, step=1, limit=4
  $region2: #{residual_block.3} parent=0 // loop_pre_header
    _
  $region3: #{residual_block.3} parent=0 // loop_header
    %s11 = sphi 0, %s15
    %p12 = scmp.ge.s32.totalorder %s11, 4
    %s21 = sphi 0, %s23
    %s24 = sphi 0, %s21
    %s25 = sphi 0, %s24
    %s41 = sphi 0, %s25
    %s45 = sphi 0, %s45
    %s47 = sphi 0, %s45
    %s48 = sphi 0, %s47
    %s62 = sphi 0, %s48
    %s66 = sphi 0, %s66
    %s68 = sphi 0, %s66
    %s69 = sphi 0, %s68
    %s83 = sphi 0, %s69
    %s89 = sphi 0, %s91
    %s92 = sphi 0, %s89
    %s93 = sphi 0, %s92
    %s109 = sphi 0, %s93
    %s115 = sphi 0, %s117
    %s118 = sphi 0, %s115
    %s119 = sphi 0, %s118
    %s135 = sphi 0, %s119
  $region4: #{residual_block.3} parent=0 // loop_header_branch
    %14 = sbr.rel (%p12) target = $region8
  $region5: #{residual_block.3} parent=0 // loop_body
    %s16 = ssub.s32 %s11, 1
    %s17 = ssub.s32 %s11, 2
    %s18 = sadd.s32 %s11, 1
    %s19 = ssub.s32 %s11, %s18
    %p20 = scmp.eq.s32.totalorder %s19, 0
    %s22 = sadd.s32 %s21, 1
    %s23 = scalar_select %p20, %s21, %s22
    %p26 = pneg %p20
    %p27 = scmp.eq.s32.totalorder %s11, 1
    %p28 = por %p26, %p27
    %p29 = scmp.ne.s32.totalorder %s21, %s24
    %p30 = scmp.eq.s32.totalorder %s11, 0
    %p31 = por %p29, %p30
    %p32 = scmp.ne.s32.totalorder %s21, %s24
    %p33 = scmp.eq.s32.totalorder %s16, 1
    %p34 = por %p32, %p33
    %p35 = scmp.ne.s32.totalorder %s24, %s25
    %p36 = scmp.eq.s32.totalorder %s16, 0
    %p37 = por %p35, %p36
    %p38 = scmp.ne.s32.totalorder %s24, %s25
    %p39 = scmp.eq.s32.totalorder %s17, 1
    %p40 = por %p38, %p39
    %p42 = scmp.ne.s32.totalorder %s25, %s41
    %p43 = scmp.eq.s32.totalorder %s17, 0
    %p44 = por %p42, %p43
    %s46 = sadd.s32 %s45, 1
    %p49 = scmp.eq.s32.totalorder %s11, 1
    %p50 = scmp.ne.s32.totalorder %s45, %s47
    %p51 = scmp.eq.s32.totalorder %s11, 0
    %p52 = por %p50, %p51
    %p53 = scmp.ne.s32.totalorder %s45, %s47
    %p54 = scmp.eq.s32.totalorder %s16, 1
    %p55 = por %p53, %p54
    %p56 = scmp.ne.s32.totalorder %s47, %s48
    %p57 = scmp.eq.s32.totalorder %s16, 0
    %p58 = por %p56, %p57
    %p59 = scmp.ne.s32.totalorder %s47, %s48
    %p60 = scmp.eq.s32.totalorder %s17, 1
    %p61 = por %p59, %p60
    %p63 = scmp.ne.s32.totalorder %s48, %s62
    %p64 = scmp.eq.s32.totalorder %s17, 0
    %p65 = por %p63, %p64
    %s67 = sadd.s32 %s66, 1
    %p70 = scmp.eq.s32.totalorder %s11, 1
    %p71 = scmp.ne.s32.totalorder %s66, %s68
    %p72 = scmp.eq.s32.totalorder %s11, 0
    %p73 = por %p71, %p72
    %p74 = scmp.ne.s32.totalorder %s66, %s68
    %p75 = scmp.eq.s32.totalorder %s16, 1
    %p76 = por %p74, %p75
    %p77 = scmp.ne.s32.totalorder %s68, %s69
    %p78 = scmp.eq.s32.totalorder %s16, 0
    %p79 = por %p77, %p78
    %p80 = scmp.ne.s32.totalorder %s68, %s69
    %p81 = scmp.eq.s32.totalorder %s17, 1
    %p82 = por %p80, %p81
    %p84 = scmp.ne.s32.totalorder %s69, %s83
    %p85 = scmp.eq.s32.totalorder %s17, 0
    %p86 = por %p84, %p85
    %s87 = ssub.s32 %s11, %s18
    %p88 = scmp.eq.s32.totalorder %s87, 0
    %s90 = sadd.s32 %s89, 1
    %s91 = scalar_select %p88, %s89, %s90
    %p94 = pneg %p88
    %p95 = scmp.eq.s32.totalorder %s11, 1
    %p96 = por %p94, %p95
    %p97 = scmp.ne.s32.totalorder %s89, %s92
    %p98 = scmp.eq.s32.totalorder %s11, 0
    %p99 = por %p97, %p98
    %p100 = scmp.ne.s32.totalorder %s89, %s92
    %p101 = scmp.eq.s32.totalorder %s16, 1
    %p102 = por %p100, %p101
    %p103 = scmp.ne.s32.totalorder %s92, %s93
    %p104 = scmp.eq.s32.totalorder %s16, 0
    %p105 = por %p103, %p104
    %p106 = scmp.ne.s32.totalorder %s92, %s93
    %p107 = scmp.eq.s32.totalorder %s17, 1
    %p108 = por %p106, %p107
    %p110 = scmp.ne.s32.totalorder %s93, %s109
    %p111 = scmp.eq.s32.totalorder %s17, 0
    %p112 = por %p110, %p111
    %s113 = ssub.s32 %s11, %s18
    %p114 = scmp.eq.s32.totalorder %s113, 0
    %s116 = sadd.s32 %s115, 1
    %s117 = scalar_select %p114, %s115, %s116
    %p120 = pneg %p114
    %p121 = scmp.eq.s32.totalorder %s11, 1
    %p122 = por %p120, %p121
    %p123 = scmp.ne.s32.totalorder %s115, %s118
    %p124 = scmp.eq.s32.totalorder %s11, 0
    %p125 = por %p123, %p124
    %p126 = scmp.ne.s32.totalorder %s115, %s118
    %p127 = scmp.eq.s32.totalorder %s16, 1
    %p128 = por %p126, %p127
    %p129 = scmp.ne.s32.totalorder %s118, %s119
    %p130 = scmp.eq.s32.totalorder %s16, 0
    %p131 = por %p129, %p130
    %p132 = scmp.ne.s32.totalorder %s118, %s119
    %p133 = scmp.eq.s32.totalorder %s17, 1
    %p134 = por %p132, %p133
    %p136 = scmp.ne.s32.totalorder %s119, %s135
    %p137 = scmp.eq.s32.totalorder %s17, 0
    %p138 = por %p136, %p137
    %p139 = scmp.le.s32.totalorder 1, %s11
    %p140 = scmp.lt.s32.totalorder %s11, 3
    %p141 = pnand %p139, %p140
    %p142 = pneg %p141
    // Predicated region
    $region9: #{residual_block.3} parent=5 // pred_check
      _
    $region10: #{residual_block.3} parent=5 // pred_check_branch
      %144 = sbr.rel (%p141) target = $region12
    $region11: #{residual_block.3} parent=5 // pred_region
      %s145 = ssub.s32 %s11, 1
      // Predicated region
      $region13: #{residual_block.3} parent=11 // pred_check
        %p146 = pneg %p58
      $region14: #{residual_block.3} parent=11 // pred_check_branch
        %148 = sbr.rel (%p146) target = $region16
      $region15: #{residual_block.3} parent=11 // pred_region
        _
      $region16: #{residual_block.3} parent=11 // pred_fallthru
        _
      // Predicated region
      $region17: #{residual_block.3} parent=11 // pred_check
        %p149 = pneg %p79
      $region18: #{residual_block.3} parent=11 // pred_check_branch
        %151 = sbr.rel (%p149) target = $region20
      $region19: #{residual_block.3} parent=11 // pred_region
        _
      $region20: #{residual_block.3} parent=11 // pred_fallthru
        _
    $region12: #{residual_block.3} parent=5 // pred_fallthru
      _
    %p152 = scmp.lt.s32.totalorder %s11, 2
    // Predicated region
    $region21: #{residual_block.3} parent=5 // pred_check
      %p153 = pneg %p152
    $region22: #{residual_block.3} parent=5 // pred_check_branch
      %155 = sbr.rel (%p153) target = $region24
    $region23: #{residual_block.3} parent=5 // pred_region
      // Predicated region
      $region25: #{residual_block.3} parent=23 // pred_check
        %p156 = pneg %p31
      $region26: #{residual_block.3} parent=23 // pred_check_branch
        %158 = sbr.rel (%p156) target = $region28
      $region27: #{residual_block.3} parent=23 // pred_region
        %p159 = scmp.lt.s32.totalorder %s11, 1
        %s160 = scalar_select %p159, %s11, 1
        %s161 = smul.addr %s160, 8
        %s162 = smul.addr %s161, 8
        %s163 = scalar_lea.vmem %s0, %s162
      $region28: #{residual_block.3} parent=23 // pred_fallthru
        _
    $region24: #{residual_block.3} parent=5 // pred_fallthru
      _
    %p164 = scmp.le.s32.totalorder 1, %s11
    %p165 = scmp.lt.s32.totalorder %s11, 3
    %p166 = pnand %p164, %p165
    %p167 = pneg %p166
    // Predicated region
    $region29: #{residual_block.3} parent=5 // pred_check
      _
    $region30: #{residual_block.3} parent=5 // pred_check_branch
      %169 = sbr.rel (%p166) target = $region32
    $region31: #{residual_block.3} parent=5 // pred_region
      %s170 = ssub.s32 %s11, 1
      %p171 = scmp.lt.s32.totalorder %s16, 1
      %s172 = scalar_select %p171, %s16, 1
      %s173 = smul.addr %s172, 8
      %s174 = smul.addr %s173, 8
      %s175 = scalar_lea.vmem %s0, %s174
      %p176 = pneg %p37
      %p177 = pneg %p34
      %p178 = pneg %p58
      %p179 = pneg %p55
      %p180 = pneg %p79
      %p181 = pneg %p76
      %p182 = pneg %p105
      %p183 = pneg %p102
      %p184 = scmp.lt.s32.totalorder %s16, 1
      %s185 = scalar_select %p184, %s16, 1
      %s186 = smul.addr %s185, 2
      %s187 = smul.addr %s186, 4
      %s188 = scalar_lea.vmem %s3, %s187
      %p189 = pneg %p131
      %p190 = pneg %p128
      %p191 = scmp.lt.s32.totalorder %s16, 1
      %s192 = scalar_select %p191, %s16, 1
      %s193 = smul.addr %s192, 4
      %s194 = scalar_lea.vmem %s4, %s193
      %p195 = scmp.lt.s32.totalorder %s16, 1
      %s196 = scalar_select %p195, %s16, 1
      %s197 = smul.addr %s196, 8
      %s198 = smul.addr %s197, 8
      %s199 = scalar_lea.vmem %s0, %s198
      %p200 = scmp.lt.s32.totalorder %s16, 1
      %s201 = scalar_select %p200, %s16, 1
      %s202 = smul.addr %s201, 2
      %s203 = smul.addr %s202, 4
      %s204 = scalar_lea.vmem %s3, %s203
      %p205 = scmp.lt.s32.totalorder %s16, 1
      %s206 = scalar_select %p205, %s16, 1
      %s207 = smul.addr %s206, 4
      %s208 = scalar_lea.vmem %s4, %s207
      %v210 = vld [vmem:[%s199] sm:$0xff]
      %v211 = vld [vmem:[%s199 + $0x8] sm:$0xff]
      %v212 = vld [vmem:[%s199 + $0x10] sm:$0xff]
      %v213 = vld [vmem:[%s199 + $0x18] sm:$0xff]
      %v214 = vld [vmem:[%s199 + $0x20] sm:$0xff]
      %v215 = vld [vmem:[%s199 + $0x28] sm:$0xff]
      %v216 = vld [vmem:[%s199 + $0x30] sm:$0xff]
      %v217 = vld [vmem:[%s199 + $0x38] sm:$0xff]
      %v218 = vpack.c.bf16 %v211, %v210
      %v219 = vpack.c.bf16 %v213, %v212
      %v220 = vpack.c.bf16 %v215, %v214
      %v221 = vpack.c.bf16 %v217, %v216
      %v226 = vunpack.c.l.b16 %v218
      %v227 = vunpack.c.h.b16 %v218
      %v228 = vunpack.c.l.b16 %v219
      %v229 = vunpack.c.h.b16 %v219
      %v230 = vunpack.c.l.b16 %v220
      %v231 = vunpack.c.h.b16 %v220
      %v232 = vunpack.c.l.b16 %v221
      %v233 = vunpack.c.h.b16 %v221
      %v234 = vpack.c.b16 %v226, %v226
      %v235 = vpack.c.b16 %v227, %v227
      %v236 = vpack.c.b16 %v228, %v228
      %v237 = vpack.c.b16 %v229, %v229
      %v238 = vpack.c.b16 %v230, %v230
      %v239 = vpack.c.b16 %v231, %v231
      %v240 = vpack.c.b16 %v232, %v232
      %v241 = vpack.c.b16 %v233, %v233
      %vm242 = vsmask.f32 256
      %vm243 = vsmask.f32 4368
      %vm244 = vmor %vm242, %vm243
      %v246 = vshrl.u32 %v234, 16
      %v248 = vrot.slane %v246, 7
      %v249 = vshll.u32 %v234, 16
      %v251 = vor.u32 %v248, %v249
      %v252 = vrot.slane %v248, 4
      %v254 = vshrl.u32 %v235, 16
      %v256 = vrot.slane %v254, 7
      %v257 = vshll.u32 %v235, 16
      %v259 = vor.u32 %v256, %v257
      %v260 = vsel %vm244, %v252, %v259
      %v261 = vrot.slane %v256, 4
      %v263 = vshrl.u32 %v236, 16
      %v265 = vrot.slane %v263, 7
      %v266 = vshll.u32 %v236, 16
      %v268 = vor.u32 %v265, %v266
      %v269 = vrot.slane %v265, 4
      %v271 = vshrl.u32 %v237, 16
      %v273 = vrot.slane %v271, 7
      %v274 = vshll.u32 %v237, 16
      %v276 = vor.u32 %v273, %v274
      %v277 = vsel %vm244, %v269, %v276
      %v278 = vrot.slane %v273, 4
      %v280 = vshrl.u32 %v238, 16
      %v282 = vrot.slane %v280, 7
      %v283 = vshll.u32 %v238, 16
      %v285 = vor.u32 %v282, %v283
      %v286 = vrot.slane %v282, 4
      %v288 = vshrl.u32 %v239, 16
      %v290 = vrot.slane %v288, 7
      %v291 = vshll.u32 %v239, 16
      %v293 = vor.u32 %v290, %v291
      %v294 = vsel %vm244, %v286, %v293
      %v295 = vrot.slane %v290, 4
      %v297 = vshrl.u32 %v240, 16
      %v299 = vrot.slane %v297, 7
      %v300 = vshll.u32 %v240, 16
      %v302 = vor.u32 %v299, %v300
      %v303 = vrot.slane %v299, 4
      %v305 = vshrl.u32 %v241, 16
      %v307 = vrot.slane %v305, 7
      %v308 = vshll.u32 %v241, 16
      %v310 = vor.u32 %v307, %v308
      %v311 = vsel %vm244, %v303, %v310
      %v312 = vrot.slane %v307, 4
      %313 = vrot.lane.b32.xlu0 %v251, 1
      %v314 = vpop.permute.xlu0 %313
      %315 = vrot.lane.b32.xlu0 %v260, 1
      %v316 = vpop.permute.xlu0 %315
      %317 = vrot.lane.b32.xlu0 %v261, 1
      %v318 = vpop.permute.xlu0 %317
      %319 = vrot.lane.b32.xlu0 %v268, 1
      %v320 = vpop.permute.xlu0 %319
      %321 = vrot.lane.b32.xlu0 %v277, 1
      %v322 = vpop.permute.xlu0 %321
      %323 = vrot.lane.b32.xlu0 %v278, 1
      %v324 = vpop.permute.xlu0 %323
      %325 = vrot.lane.b32.xlu0 %v285, 1
      %v326 = vpop.permute.xlu0 %325
      %327 = vrot.lane.b32.xlu0 %v294, 1
      %v328 = vpop.permute.xlu0 %327
      %329 = vrot.lane.b32.xlu0 %v295, 1
      %v330 = vpop.permute.xlu0 %329
      %331 = vrot.lane.b32.xlu0 %v302, 1
      %v332 = vpop.permute.xlu0 %331
      %333 = vrot.lane.b32.xlu0 %v311, 1
      %v334 = vpop.permute.xlu0 %333
      %335 = vrot.lane.b32.xlu0 %v312, 1
      %v336 = vpop.permute.xlu0 %335
      %vm349 = vcmask 134152
      %vm350 = vsmask.f32 7938
      %vm351 = vmand %vm349, %vm350
      %v352 = vld [vmem:[#allocation2] sm:$0xf]
      %v353 = vsel %vm351, %v314, %v352
      %354 = vst [vmem:[#allocation2] sm:$0xf] %v353
      %vm355 = vcmask 134152
      %356 = vst.msk [vmem:[#allocation2 + $0x4] sm:$0xf] %vm355, %v316
      %vm357 = vcmask 131080
      %vm358 = vmand %vm357, %vm242
      %v359 = vld [vmem:[#allocation2 + $0x8] sm:$0x1]
      %v360 = vsel %vm358, %v318, %v359
      %361 = vst [vmem:[#allocation2 + $0x8] sm:$0x1] %v360
      %v362 = vld [vmem:[#allocation2 + $0xc] sm:$0xf]
      %v363 = vsel %vm351, %v320, %v362
      %364 = vst [vmem:[#allocation2 + $0xc] sm:$0xf] %v363
      %365 = vst.msk [vmem:[#allocation2 + $0x10] sm:$0xf] %vm355, %v322
      %v366 = vld [vmem:[#allocation2 + $0x14] sm:$0x1]
      %v367 = vsel %vm358, %v324, %v366
      %368 = vst [vmem:[#allocation2 + $0x14] sm:$0x1] %v367
      %v369 = vld [vmem:[#allocation2 + $0x18] sm:$0xf]
      %v370 = vsel %vm351, %v326, %v369
      %371 = vst [vmem:[#allocation2 + $0x18] sm:$0xf] %v370
      %372 = vst.msk [vmem:[#allocation2 + $0x1c] sm:$0xf] %vm355, %v328
      %v373 = vld [vmem:[#allocation2 + $0x20] sm:$0x1]
      %v374 = vsel %vm358, %v330, %v373
      %375 = vst [vmem:[#allocation2 + $0x20] sm:$0x1] %v374
      %v376 = vld [vmem:[#allocation2 + $0x24] sm:$0xf]
      %v377 = vsel %vm351, %v332, %v376
      %378 = vst [vmem:[#allocation2 + $0x24] sm:$0xf] %v377
      %379 = vst.msk [vmem:[#allocation2 + $0x28] sm:$0xf] %vm355, %v334
      %v380 = vld [vmem:[#allocation2 + $0x2c] sm:$0x1]
      %v381 = vsel %vm358, %v336, %v380
      %382 = vst [vmem:[#allocation2 + $0x2c] sm:$0x1] %v381
      %383 = vrot.lane.b32.xlu0 %v234, 1
      %v384 = vpop.permute.xlu0 %383
      %385 = vrot.lane.b32.xlu0 %v236, 1
      %v386 = vpop.permute.xlu0 %385
      %387 = vrot.lane.b32.xlu0 %v238, 1
      %v388 = vpop.permute.xlu0 %387
      %389 = vrot.lane.b32.xlu0 %v240, 1
      %v390 = vpop.permute.xlu0 %389
      %v395 = vld [vmem:[#allocation2] sm:$0x1]
      %v396 = vsel %vm358, %v384, %v395
      %397 = vst [vmem:[#allocation2] sm:$0x1] %v396
      %v398 = vld [vmem:[#allocation2 + $0xc] sm:$0x1]
      %v399 = vsel %vm358, %v386, %v398
      %400 = vst [vmem:[#allocation2 + $0xc] sm:$0x1] %v399
      %v401 = vld [vmem:[#allocation2 + $0x18] sm:$0x1]
      %v402 = vsel %vm358, %v388, %v401
      %403 = vst [vmem:[#allocation2 + $0x18] sm:$0x1] %v402
      %v404 = vld [vmem:[#allocation2 + $0x24] sm:$0x1]
      %v405 = vsel %vm358, %v390, %v404
      %406 = vst [vmem:[#allocation2 + $0x24] sm:$0x1] %v405
      %v407 = vrot.slane %v235, 7
      %v408 = vrot.slane %v407, 4
      %v409 = vrot.slane %v237, 7
      %v410 = vrot.slane %v409, 4
      %v411 = vrot.slane %v239, 7
      %v412 = vrot.slane %v411, 4
      %v413 = vrot.slane %v241, 7
      %v414 = vrot.slane %v413, 4
      %415 = vrot.lane.b32.xlu0 %v408, 1
      %v416 = vpop.permute.xlu0 %415
      %417 = vrot.lane.b32.xlu0 %v410, 1
      %v418 = vpop.permute.xlu0 %417
      %419 = vrot.lane.b32.xlu0 %v412, 1
      %v420 = vpop.permute.xlu0 %419
      %421 = vrot.lane.b32.xlu0 %v414, 1
      %v422 = vpop.permute.xlu0 %421
      %vm427 = vmand %vm357, %vm350
      %v428 = vld [vmem:[#allocation2 + $0x8] sm:$0x1]
      %v429 = vsel %vm427, %v416, %v428
      %430 = vst [vmem:[#allocation2 + $0x8] sm:$0x1] %v429
      %v431 = vld [vmem:[#allocation2 + $0x14] sm:$0x1]
      %v432 = vsel %vm427, %v418, %v431
      %433 = vst [vmem:[#allocation2 + $0x14] sm:$0x1] %v432
      %v434 = vld [vmem:[#allocation2 + $0x20] sm:$0x1]
      %v435 = vsel %vm427, %v420, %v434
      %436 = vst [vmem:[#allocation2 + $0x20] sm:$0x1] %v435
      %v437 = vld [vmem:[#allocation2 + $0x2c] sm:$0x1]
      %v438 = vsel %vm427, %v422, %v437
      %439 = vst [vmem:[#allocation2 + $0x2c] sm:$0x1] %v438
      %v440 = vld [vmem:[#allocation2] sm:$0xf]
      %v441 = vld [vmem:[#allocation2 + $0x4] sm:$0xf]
      %v442 = vld [vmem:[#allocation2 + $0x8] sm:$0x1]
      %v443 = vld [vmem:[#allocation2 + $0xc] sm:$0xf]
      %v444 = vld [vmem:[#allocation2 + $0x10] sm:$0xf]
      %v445 = vld [vmem:[#allocation2 + $0x14] sm:$0x1]
      %v446 = vld [vmem:[#allocation2 + $0x18] sm:$0xf]
      %v447 = vld [vmem:[#allocation2 + $0x1c] sm:$0xf]
      %v448 = vld [vmem:[#allocation2 + $0x20] sm:$0x1]
      %v449 = vld [vmem:[#allocation2 + $0x24] sm:$0xf]
      %v450 = vld [vmem:[#allocation2 + $0x28] sm:$0xf]
      %v451 = vld [vmem:[#allocation2 + $0x2c] sm:$0x1]
      %464 = vrot.lane.b32.xlu0 %v440, 127
      %v465 = vpop.permute.xlu0 %464
      %466 = vrot.lane.b32.xlu0 %v441, 127
      %v467 = vpop.permute.xlu0 %466
      %468 = vrot.lane.b32.xlu0 %v442, 127
      %v469 = vpop.permute.xlu0 %468
      %470 = vrot.lane.b32.xlu0 %v443, 127
      %v471 = vpop.permute.xlu0 %470
      %472 = vrot.lane.b32.xlu0 %v444, 127
      %v473 = vpop.permute.xlu0 %472
      %474 = vrot.lane.b32.xlu0 %v445, 127
      %v475 = vpop.permute.xlu0 %474
      %476 = vrot.lane.b32.xlu0 %v446, 127
      %v477 = vpop.permute.xlu0 %476
      %478 = vrot.lane.b32.xlu0 %v447, 127
      %v479 = vpop.permute.xlu0 %478
      %480 = vrot.lane.b32.xlu0 %v448, 127
      %v481 = vpop.permute.xlu0 %480
      %482 = vrot.lane.b32.xlu0 %v449, 127
      %v483 = vpop.permute.xlu0 %482
      %484 = vrot.lane.b32.xlu0 %v450, 127
      %v485 = vpop.permute.xlu0 %484
      %486 = vrot.lane.b32.xlu0 %v451, 127
      %v487 = vpop.permute.xlu0 %486
      %vm500 = vcmask 3072
      %501 = vst.msk [vmem:[#allocation2] sm:$0xf] %vm500, %v465
      %502 = vst.msk [vmem:[#allocation2 + $0x4] sm:$0xf] %vm500, %v467
      %vm503 = vcmask 0
      %504 = vst.msk [vmem:[#allocation2 + $0x8] sm:$0x1] %vm503, %v469
      %505 = vst.msk [vmem:[#allocation2 + $0xc] sm:$0xf] %vm500, %v471
      %506 = vst.msk [vmem:[#allocation2 + $0x10] sm:$0xf] %vm500, %v473
      %507 = vst.msk [vmem:[#allocation2 + $0x14] sm:$0x1] %vm503, %v475
      %508 = vst.msk [vmem:[#allocation2 + $0x18] sm:$0xf] %vm500, %v477
      %509 = vst.msk [vmem:[#allocation2 + $0x1c] sm:$0xf] %vm500, %v479
      %510 = vst.msk [vmem:[#allocation2 + $0x20] sm:$0x1] %vm503, %v481
      %511 = vst.msk [vmem:[#allocation2 + $0x24] sm:$0xf] %vm500, %v483
      %512 = vst.msk [vmem:[#allocation2 + $0x28] sm:$0xf] %vm500, %v485
      %513 = vst.msk [vmem:[#allocation2 + $0x2c] sm:$0x1] %vm503, %v487
      %v514 = vld [vmem:[#allocation2] sm:$0xf]
      %v515 = vld [vmem:[#allocation2 + $0x4] sm:$0xf]
      %v516 = vld [vmem:[#allocation2 + $0x8] sm:$0x1]
      %v517 = vld [vmem:[#allocation2 + $0xc] sm:$0xf]
      %v518 = vld [vmem:[#allocation2 + $0x10] sm:$0xf]
      %v519 = vld [vmem:[#allocation2 + $0x14] sm:$0x1]
      %v520 = vld [vmem:[#allocation2 + $0x18] sm:$0xf]
      %v521 = vld [vmem:[#allocation2 + $0x1c] sm:$0xf]
      %v522 = vld [vmem:[#allocation2 + $0x20] sm:$0x1]
      %v523 = vld [vmem:[#allocation2 + $0x24] sm:$0xf]
      %v524 = vld [vmem:[#allocation2 + $0x28] sm:$0xf]
      %v525 = vld [vmem:[#allocation2 + $0x2c] sm:$0x1]
      %538 = vrot.lane.b32.xlu0 %v514, 1
      %v539 = vpop.permute.xlu0 %538
      %540 = vrot.lane.b32.xlu0 %v515, 1
      %v541 = vpop.permute.xlu0 %540
      %542 = vrot.lane.b32.xlu0 %v516, 1
      %v543 = vpop.permute.xlu0 %542
      %544 = vrot.lane.b32.xlu0 %v517, 1
      %v545 = vpop.permute.xlu0 %544
      %546 = vrot.lane.b32.xlu0 %v518, 1
      %v547 = vpop.permute.xlu0 %546
      %548 = vrot.lane.b32.xlu0 %v519, 1
      %v549 = vpop.permute.xlu0 %548
      %550 = vrot.lane.b32.xlu0 %v520, 1
      %v551 = vpop.permute.xlu0 %550
      %552 = vrot.lane.b32.xlu0 %v521, 1
      %v553 = vpop.permute.xlu0 %552
      %554 = vrot.lane.b32.xlu0 %v522, 1
      %v555 = vpop.permute.xlu0 %554
      %556 = vrot.lane.b32.xlu0 %v523, 1
      %v557 = vpop.permute.xlu0 %556
      %558 = vrot.lane.b32.xlu0 %v524, 1
      %v559 = vpop.permute.xlu0 %558
      %560 = vrot.lane.b32.xlu0 %v525, 1
      %v561 = vpop.permute.xlu0 %560
      %vm574 = vcmask 142472
      %575 = vst.msk [vmem:[#allocation2] sm:$0xf] %vm574, %v539
      %576 = vst.msk [vmem:[#allocation2 + $0x4] sm:$0xf] %vm574, %v541
      %vm577 = vcmask 139400
      %578 = vst.msk [vmem:[#allocation2 + $0x8] sm:$0x1] %vm577, %v543
      %579 = vst.msk [vmem:[#allocation2 + $0xc] sm:$0xf] %vm574, %v545
      %580 = vst.msk [vmem:[#allocation2 + $0x10] sm:$0xf] %vm574, %v547
      %581 = vst.msk [vmem:[#allocation2 + $0x14] sm:$0x1] %vm577, %v549
      %582 = vst.msk [vmem:[#allocation2 + $0x18] sm:$0xf] %vm574, %v551
      %583 = vst.msk [vmem:[#allocation2 + $0x1c] sm:$0xf] %vm574, %v553
      %584 = vst.msk [vmem:[#allocation2 + $0x20] sm:$0x1] %vm577, %v555
      %585 = vst.msk [vmem:[#allocation2 + $0x24] sm:$0xf] %vm574, %v557
      %586 = vst.msk [vmem:[#allocation2 + $0x28] sm:$0xf] %vm574, %v559
      %587 = vst.msk [vmem:[#allocation2 + $0x2c] sm:$0x1] %vm577, %v561
      %v588 = vld [vmem:[#allocation2] sm:$0xf]
      %v589 = vld [vmem:[#allocation2 + $0x4] sm:$0xf]
      %v590 = vld [vmem:[#allocation2 + $0xc] sm:$0xf]
      %v591 = vld [vmem:[#allocation2 + $0x10] sm:$0xf]
      %v592 = vld [vmem:[#allocation2 + $0x18] sm:$0xf]
      %v593 = vld [vmem:[#allocation2 + $0x1c] sm:$0xf]
      %v594 = vld [vmem:[#allocation2 + $0x24] sm:$0xf]
      %v595 = vld [vmem:[#allocation2 + $0x28] sm:$0xf]
      %v598 = vpack.i.b16 %v590, %v588
      %v599 = vshrl.u32 %v588, 16
      %v600 = vshrl.u32 %v590, 16
      %v601 = vpack.i.b16 %v600, %v599
      %v604 = vpack.i.b16 %v594, %v592
      %v605 = vshrl.u32 %v592, 16
      %v606 = vshrl.u32 %v594, 16
      %v607 = vpack.i.b16 %v606, %v605
      %v610 = vpack.i.b16 %v591, %v589
      %v611 = vshrl.u32 %v589, 16
      %v612 = vshrl.u32 %v591, 16
      %v613 = vpack.i.b16 %v612, %v611
      %v616 = vpack.i.b16 %v595, %v593
      %v617 = vshrl.u32 %v593, 16
      %v618 = vshrl.u32 %v595, 16
      %v619 = vpack.i.b16 %v618, %v617
      %v622 = vunpack.c.l.s4 1983009808
      %v623 = vunpack.c.0.s8 %v622
      %v624 = vlaneseq
      %v625 = vshrl.u32 %v624, 7
      %v626 = vsub.s32 %v623, %v625
      %v627 = vrot.slane %v598, %v626
      %v630 = vunpack.c.l.s4 1983009808
      %v631 = vunpack.c.0.s8 %v630
      %v632 = vlaneseq
      %v633 = vshrl.u32 %v632, 7
      %v634 = vsub.s32 %v631, %v633
      %v635 = vrot.slane %v604, %v634
      %v636 = vcombine.low %v627, %v635
      %v637 = vcombine.high %v627, %v635
      %v639 = vunpack.c.l.s4 1934713408
      %v640 = vunpack.c.0.s8 %v639
      %v641 = vlaneseq
      %v642 = vshrl.u32 %v641, 7
      %v643 = vsub.s32 %v640, %v642
      %v644 = vrot.slane %v636, %v643
      %v646 = vunpack.c.l.s4 1934713408
      %v647 = vunpack.c.0.s8 %v646
      %v648 = vlaneseq
      %v649 = vshrl.u32 %v648, 7
      %v650 = vsub.s32 %v647, %v649
      %v651 = vrot.slane %v637, %v650
      %v652 = vcombine.high %v644, 0
      %v653 = vcombine.high %v651, 0
      %v656 = vunpack.c.l.s4 1983009808
      %v657 = vunpack.c.0.s8 %v656
      %v658 = vlaneseq
      %v659 = vshrl.u32 %v658, 7
      %v660 = vsub.s32 %v657, %v659
      %v661 = vrot.slane %v601, %v660
      %v664 = vunpack.c.l.s4 1983009808
      %v665 = vunpack.c.0.s8 %v664
      %v666 = vlaneseq
      %v667 = vshrl.u32 %v666, 7
      %v668 = vsub.s32 %v665, %v667
      %v669 = vrot.slane %v607, %v668
      %v670 = vcombine.low %v661, %v669
      %v671 = vcombine.high %v661, %v669
      %v673 = vunpack.c.l.s4 1934713408
      %v674 = vunpack.c.0.s8 %v673
      %v675 = vlaneseq
      %v676 = vshrl.u32 %v675, 7
      %v677 = vsub.s32 %v674, %v676
      %v678 = vrot.slane %v670, %v677
      %v680 = vunpack.c.l.s4 1934713408
      %v681 = vunpack.c.0.s8 %v680
      %v682 = vlaneseq
      %v683 = vshrl.u32 %v682, 7
      %v684 = vsub.s32 %v681, %v683
      %v685 = vrot.slane %v671, %v684
      %v686 = vcombine.high %v678, 0
      %v687 = vcombine.high %v685, 0
      %v690 = vunpack.c.l.s4 1983009808
      %v691 = vunpack.c.0.s8 %v690
      %v692 = vlaneseq
      %v693 = vshrl.u32 %v692, 7
      %v694 = vsub.s32 %v691, %v693
      %v695 = vrot.slane %v610, %v694
      %v698 = vunpack.c.l.s4 1983009808
      %v699 = vunpack.c.0.s8 %v698
      %v700 = vlaneseq
      %v701 = vshrl.u32 %v700, 7
      %v702 = vsub.s32 %v699, %v701
      %v703 = vrot.slane %v616, %v702
      %v704 = vcombine.low %v695, %v703
      %v705 = vcombine.high %v695, %v703
      %v707 = vunpack.c.l.s4 1934713408
      %v708 = vunpack.c.0.s8 %v707
      %v709 = vlaneseq
      %v710 = vshrl.u32 %v709, 7
      %v711 = vsub.s32 %v708, %v710
      %v712 = vrot.slane %v704, %v711
      %v714 = vunpack.c.l.s4 1934713408
      %v715 = vunpack.c.0.s8 %v714
      %v716 = vlaneseq
      %v717 = vshrl.u32 %v716, 7
      %v718 = vsub.s32 %v715, %v717
      %v719 = vrot.slane %v705, %v718
      %v720 = vcombine.high %v712, 0
      %v721 = vcombine.high %v719, 0
      %v724 = vunpack.c.l.s4 1983009808
      %v725 = vunpack.c.0.s8 %v724
      %v726 = vlaneseq
      %v727 = vshrl.u32 %v726, 7
      %v728 = vsub.s32 %v725, %v727
      %v729 = vrot.slane %v613, %v728
      %v732 = vunpack.c.l.s4 1983009808
      %v733 = vunpack.c.0.s8 %v732
      %v734 = vlaneseq
      %v735 = vshrl.u32 %v734, 7
      %v736 = vsub.s32 %v733, %v735
      %v737 = vrot.slane %v619, %v736
      %v738 = vcombine.low %v729, %v737
      %v739 = vcombine.high %v729, %v737
      %v741 = vunpack.c.l.s4 1934713408
      %v742 = vunpack.c.0.s8 %v741
      %v743 = vlaneseq
      %v744 = vshrl.u32 %v743, 7
      %v745 = vsub.s32 %v742, %v744
      %v746 = vrot.slane %v738, %v745
      %v748 = vunpack.c.l.s4 1934713408
      %v749 = vunpack.c.0.s8 %v748
      %v750 = vlaneseq
      %v751 = vshrl.u32 %v750, 7
      %v752 = vsub.s32 %v749, %v751
      %v753 = vrot.slane %v739, %v752
      %v754 = vcombine.high %v746, 0
      %v755 = vcombine.high %v753, 0
      %v757 = vunpack.c.l.b16 %v678
      %v758 = vpack.c.b16 %v757, %v757
      %759 = vrot.lane.b32.xlu0 %v758, 16
      %v760 = vpop.permute.xlu0 %759
      %v762 = vunpack.c.l.b16 %v652
      %v763 = vpack.c.b16 %v762, %v762
      %764 = vrot.lane.b32.xlu0 %v763, 32
      %v765 = vpop.permute.xlu0 %764
      %v767 = vunpack.c.l.b16 %v686
      %v768 = vpack.c.b16 %v767, %v767
      %769 = vrot.lane.b32.xlu0 %v768, 48
      %v770 = vpop.permute.xlu0 %769
      %v772 = vunpack.c.l.b16 %v651
      %v773 = vpack.c.b16 %v772, %v772
      %774 = vrot.lane.b32.xlu0 %v773, 64
      %v775 = vpop.permute.xlu0 %774
      %v777 = vunpack.c.l.b16 %v685
      %v778 = vpack.c.b16 %v777, %v777
      %779 = vrot.lane.b32.xlu0 %v778, 80
      %v780 = vpop.permute.xlu0 %779
      %v782 = vunpack.c.l.b16 %v653
      %v783 = vpack.c.b16 %v782, %v782
      %784 = vrot.lane.b32.xlu0 %v783, 96
      %v785 = vpop.permute.xlu0 %784
      %v787 = vunpack.c.l.b16 %v687
      %v788 = vpack.c.b16 %v787, %v787
      %789 = vrot.lane.b32.xlu0 %v788, 112
      %v790 = vpop.permute.xlu0 %789
      %v792 = vunpack.c.l.b16 %v746
      %v793 = vpack.c.b16 %v792, %v792
      %794 = vrot.lane.b32.xlu0 %v793, 16
      %v795 = vpop.permute.xlu0 %794
      %v797 = vunpack.c.l.b16 %v720
      %v798 = vpack.c.b16 %v797, %v797
      %799 = vrot.lane.b32.xlu0 %v798, 32
      %v800 = vpop.permute.xlu0 %799
      %v802 = vunpack.c.l.b16 %v754
      %v803 = vpack.c.b16 %v802, %v802
      %804 = vrot.lane.b32.xlu0 %v803, 48
      %v805 = vpop.permute.xlu0 %804
      %v807 = vunpack.c.l.b16 %v719
      %v808 = vpack.c.b16 %v807, %v807
      %809 = vrot.lane.b32.xlu0 %v808, 64
      %v810 = vpop.permute.xlu0 %809
      %v812 = vunpack.c.l.b16 %v753
      %v813 = vpack.c.b16 %v812, %v812
      %814 = vrot.lane.b32.xlu0 %v813, 80
      %v815 = vpop.permute.xlu0 %814
      %v817 = vunpack.c.l.b16 %v721
      %v818 = vpack.c.b16 %v817, %v817
      %819 = vrot.lane.b32.xlu0 %v818, 96
      %v820 = vpop.permute.xlu0 %819
      %v822 = vunpack.c.l.b16 %v755
      %v823 = vpack.c.b16 %v822, %v822
      %824 = vrot.lane.b32.xlu0 %v823, 112
      %v825 = vpop.permute.xlu0 %824
      %vm826 = vcmask 130048
      %v829 = vsel %vm826, %v644, %v760
      %vm830 = vcmask 261120
      %v832 = vsel %vm830, %v829, %v765
      %vm833 = vcmask 392192
      %v835 = vsel %vm833, %v832, %v770
      %vm836 = vcmask 523264
      %v838 = vsel %vm836, %v835, %v775
      %vm839 = vcmask 654336
      %v841 = vsel %vm839, %v838, %v780
      %vm842 = vcmask 785408
      %v844 = vsel %vm842, %v841, %v785
      %vm845 = vcmask 916480
      %v847 = vsel %vm845, %v844, %v790
      %v850 = vsel %vm826, %v712, %v795
      %v852 = vsel %vm830, %v850, %v800
      %v854 = vsel %vm833, %v852, %v805
      %v856 = vsel %vm836, %v854, %v810
      %v858 = vsel %vm839, %v856, %v815
      %v860 = vsel %vm842, %v858, %v820
      %v862 = vsel %vm845, %v860, %v825
      %871 = vrot.lane.b32.xlu0 %v588, 127
      %v872 = vpop.permute.xlu0 %871
      %873 = vrot.lane.b32.xlu0 %v589, 127
      %v874 = vpop.permute.xlu0 %873
      %875 = vrot.lane.b32.xlu0 %v590, 127
      %v876 = vpop.permute.xlu0 %875
      %877 = vrot.lane.b32.xlu0 %v591, 127
      %v878 = vpop.permute.xlu0 %877
      %879 = vrot.lane.b32.xlu0 %v592, 127
      %v880 = vpop.permute.xlu0 %879
      %881 = vrot.lane.b32.xlu0 %v593, 127
      %v882 = vpop.permute.xlu0 %881
      %883 = vrot.lane.b32.xlu0 %v594, 127
      %v884 = vpop.permute.xlu0 %883
      %885 = vrot.lane.b32.xlu0 %v595, 127
      %v886 = vpop.permute.xlu0 %885
      %v889 = vpack.i.b16 %v876, %v872
      %v890 = vshrl.u32 %v872, 16
      %v891 = vshrl.u32 %v876, 16
      %v892 = vpack.i.b16 %v891, %v890
      %v895 = vpack.i.b16 %v884, %v880
      %v896 = vshrl.u32 %v880, 16
      %v897 = vshrl.u32 %v884, 16
      %v898 = vpack.i.b16 %v897, %v896
      %v901 = vpack.i.b16 %v878, %v874
      %v902 = vshrl.u32 %v874, 16
      %v903 = vshrl.u32 %v878, 16
      %v904 = vpack.i.b16 %v903, %v902
      %v907 = vpack.i.b16 %v886, %v882
      %v908 = vshrl.u32 %v882, 16
      %v909 = vshrl.u32 %v886, 16
      %v910 = vpack.i.b16 %v909, %v908
      %v913 = vunpack.c.l.s4 1983009808
      %v914 = vunpack.c.0.s8 %v913
      %v915 = vlaneseq
      %v916 = vshrl.u32 %v915, 7
      %v917 = vsub.s32 %v914, %v916
      %v918 = vrot.slane %v889, %v917
      %v921 = vunpack.c.l.s4 1983009808
      %v922 = vunpack.c.0.s8 %v921
      %v923 = vlaneseq
      %v924 = vshrl.u32 %v923, 7
      %v925 = vsub.s32 %v922, %v924
      %v926 = vrot.slane %v895, %v925
      %v927 = vcombine.low %v918, %v926
      %v928 = vcombine.high %v918, %v926
      %v930 = vunpack.c.l.s4 1934713408
      %v931 = vunpack.c.0.s8 %v930
      %v932 = vlaneseq
      %v933 = vshrl.u32 %v932, 7
      %v934 = vsub.s32 %v931, %v933
      %v935 = vrot.slane %v927, %v934
      %v937 = vunpack.c.l.s4 1934713408
      %v938 = vunpack.c.0.s8 %v937
      %v939 = vlaneseq
      %v940 = vshrl.u32 %v939, 7
      %v941 = vsub.s32 %v938, %v940
      %v942 = vrot.slane %v928, %v941
      %v943 = vcombine.high %v935, 0
      %v944 = vcombine.high %v942, 0
      %v947 = vunpack.c.l.s4 1983009808
      %v948 = vunpack.c.0.s8 %v947
      %v949 = vlaneseq
      %v950 = vshrl.u32 %v949, 7
      %v951 = vsub.s32 %v948, %v950
      %v952 = vrot.slane %v892, %v951
      %v955 = vunpack.c.l.s4 1983009808
      %v956 = vunpack.c.0.s8 %v955
      %v957 = vlaneseq
      %v958 = vshrl.u32 %v957, 7
      %v959 = vsub.s32 %v956, %v958
      %v960 = vrot.slane %v898, %v959
      %v961 = vcombine.low %v952, %v960
      %v962 = vcombine.high %v952, %v960
      %v964 = vunpack.c.l.s4 1934713408
      %v965 = vunpack.c.0.s8 %v964
      %v966 = vlaneseq
      %v967 = vshrl.u32 %v966, 7
      %v968 = vsub.s32 %v965, %v967
      %v969 = vrot.slane %v961, %v968
      %v971 = vunpack.c.l.s4 1934713408
      %v972 = vunpack.c.0.s8 %v971
      %v973 = vlaneseq
      %v974 = vshrl.u32 %v973, 7
      %v975 = vsub.s32 %v972, %v974
      %v976 = vrot.slane %v962, %v975
      %v977 = vcombine.high %v969, 0
      %v978 = vcombine.high %v976, 0
      %v981 = vunpack.c.l.s4 1983009808
      %v982 = vunpack.c.0.s8 %v981
      %v983 = vlaneseq
      %v984 = vshrl.u32 %v983, 7
      %v985 = vsub.s32 %v982, %v984
      %v986 = vrot.slane %v901, %v985
      %v989 = vunpack.c.l.s4 1983009808
      %v990 = vunpack.c.0.s8 %v989
      %v991 = vlaneseq
      %v992 = vshrl.u32 %v991, 7
      %v993 = vsub.s32 %v990, %v992
      %v994 = vrot.slane %v907, %v993
      %v995 = vcombine.low %v986, %v994
      %v996 = vcombine.high %v986, %v994
      %v998 = vunpack.c.l.s4 1934713408
      %v999 = vunpack.c.0.s8 %v998
      %v1000 = vlaneseq
      %v1001 = vshrl.u32 %v1000, 7
      %v1002 = vsub.s32 %v999, %v1001
      %v1003 = vrot.slane %v995, %v1002
      %v1005 = vunpack.c.l.s4 1934713408
      %v1006 = vunpack.c.0.s8 %v1005
      %v1007 = vlaneseq
      %v1008 = vshrl.u32 %v1007, 7
      %v1009 = vsub.s32 %v1006, %v1008
      %v1010 = vrot.slane %v996, %v1009
      %v1011 = vcombine.high %v1003, 0
      %v1012 = vcombine.high %v1010, 0
      %v1015 = vunpack.c.l.s4 1983009808
      %v1016 = vunpack.c.0.s8 %v1015
      %v1017 = vlaneseq
      %v1018 = vshrl.u32 %v1017, 7
      %v1019 = vsub.s32 %v1016, %v1018
      %v1020 = vrot.slane %v904, %v1019
      %v1023 = vunpack.c.l.s4 1983009808
      %v1024 = vunpack.c.0.s8 %v1023
      %v1025 = vlaneseq
      %v1026 = vshrl.u32 %v1025, 7
      %v1027 = vsub.s32 %v1024, %v1026
      %v1028 = vrot.slane %v910, %v1027
      %v1029 = vcombine.low %v1020, %v1028
      %v1030 = vcombine.high %v1020, %v1028
      %v1032 = vunpack.c.l.s4 1934713408
      %v1033 = vunpack.c.0.s8 %v1032
      %v1034 = vlaneseq
      %v1035 = vshrl.u32 %v1034, 7
      %v1036 = vsub.s32 %v1033, %v1035
      %v1037 = vrot.slane %v1029, %v1036
      %v1039 = vunpack.c.l.s4 1934713408
      %v1040 = vunpack.c.0.s8 %v1039
      %v1041 = vlaneseq
      %v1042 = vshrl.u32 %v1041, 7
      %v1043 = vsub.s32 %v1040, %v1042
      %v1044 = vrot.slane %v1030, %v1043
      %v1045 = vcombine.high %v1037, 0
      %v1046 = vcombine.high %v1044, 0
      %v1048 = vunpack.c.l.b16 %v969
      %v1049 = vpack.c.b16 %v1048, %v1048
      %1050 = vrot.lane.b32.xlu0 %v1049, 16
      %v1051 = vpop.permute.xlu0 %1050
      %v1053 = vunpack.c.l.b16 %v943
      %v1054 = vpack.c.b16 %v1053, %v1053
      %1055 = vrot.lane.b32.xlu0 %v1054, 32
      %v1056 = vpop.permute.xlu0 %1055
      %v1058 = vunpack.c.l.b16 %v977
      %v1059 = vpack.c.b16 %v1058, %v1058
      %1060 = vrot.lane.b32.xlu0 %v1059, 48
      %v1061 = vpop.permute.xlu0 %1060
      %v1063 = vunpack.c.l.b16 %v942
      %v1064 = vpack.c.b16 %v1063, %v1063
      %1065 = vrot.lane.b32.xlu0 %v1064, 64
      %v1066 = vpop.permute.xlu0 %1065
      %v1068 = vunpack.c.l.b16 %v976
      %v1069 = vpack.c.b16 %v1068, %v1068
      %1070 = vrot.lane.b32.xlu0 %v1069, 80
      %v1071 = vpop.permute.xlu0 %1070
      %v1073 = vunpack.c.l.b16 %v944
      %v1074 = vpack.c.b16 %v1073, %v1073
      %1075 = vrot.lane.b32.xlu0 %v1074, 96
      %v1076 = vpop.permute.xlu0 %1075
      %v1078 = vunpack.c.l.b16 %v978
      %v1079 = vpack.c.b16 %v1078, %v1078
      %1080 = vrot.lane.b32.xlu0 %v1079, 112
      %v1081 = vpop.permute.xlu0 %1080
      %v1083 = vunpack.c.l.b16 %v1037
      %v1084 = vpack.c.b16 %v1083, %v1083
      %1085 = vrot.lane.b32.xlu0 %v1084, 16
      %v1086 = vpop.permute.xlu0 %1085
      %v1088 = vunpack.c.l.b16 %v1011
      %v1089 = vpack.c.b16 %v1088, %v1088
      %1090 = vrot.lane.b32.xlu0 %v1089, 32
      %v1091 = vpop.permute.xlu0 %1090
      %v1093 = vunpack.c.l.b16 %v1045
      %v1094 = vpack.c.b16 %v1093, %v1093
      %1095 = vrot.lane.b32.xlu0 %v1094, 48
      %v1096 = vpop.permute.xlu0 %1095
      %v1098 = vunpack.c.l.b16 %v1010
      %v1099 = vpack.c.b16 %v1098, %v1098
      %1100 = vrot.lane.b32.xlu0 %v1099, 64
      %v1101 = vpop.permute.xlu0 %1100
      %v1103 = vunpack.c.l.b16 %v1044
      %v1104 = vpack.c.b16 %v1103, %v1103
      %1105 = vrot.lane.b32.xlu0 %v1104, 80
      %v1106 = vpop.permute.xlu0 %1105
      %v1108 = vunpack.c.l.b16 %v1012
      %v1109 = vpack.c.b16 %v1108, %v1108
      %1110 = vrot.lane.b32.xlu0 %v1109, 96
      %v1111 = vpop.permute.xlu0 %1110
      %v1113 = vunpack.c.l.b16 %v1046
      %v1114 = vpack.c.b16 %v1113, %v1113
      %1115 = vrot.lane.b32.xlu0 %v1114, 112
      %v1116 = vpop.permute.xlu0 %1115
      %v1119 = vsel %vm826, %v935, %v1051
      %v1121 = vsel %vm830, %v1119, %v1056
      %v1123 = vsel %vm833, %v1121, %v1061
      %v1125 = vsel %vm836, %v1123, %v1066
      %v1127 = vsel %vm839, %v1125, %v1071
      %v1129 = vsel %vm842, %v1127, %v1076
      %v1131 = vsel %vm845, %v1129, %v1081
      %v1134 = vsel %vm826, %v1003, %v1086
      %v1136 = vsel %vm830, %v1134, %v1091
      %v1138 = vsel %vm833, %v1136, %v1096
      %v1140 = vsel %vm836, %v1138, %v1101
      %v1142 = vsel %vm839, %v1140, %v1106
      %v1144 = vsel %vm842, %v1142, %v1111
      %v1146 = vsel %vm845, %v1144, %v1116
      %1147 = vrot.lane.b32.xlu0 %v588, 126
      %v1148 = vpop.permute.xlu0 %1147
      %1149 = vrot.lane.b32.xlu0 %v589, 126
      %v1150 = vpop.permute.xlu0 %1149
      %1151 = vrot.lane.b32.xlu0 %v590, 126
      %v1152 = vpop.permute.xlu0 %1151
      %1153 = vrot.lane.b32.xlu0 %v591, 126
      %v1154 = vpop.permute.xlu0 %1153
      %1155 = vrot.lane.b32.xlu0 %v592, 126
      %v1156 = vpop.permute.xlu0 %1155
      %1157 = vrot.lane.b32.xlu0 %v593, 126
      %v1158 = vpop.permute.xlu0 %1157
      %1159 = vrot.lane.b32.xlu0 %v594, 126
      %v1160 = vpop.permute.xlu0 %1159
      %1161 = vrot.lane.b32.xlu0 %v595, 126
      %v1162 = vpop.permute.xlu0 %1161
      %v1165 = vpack.i.b16 %v1152, %v1148
      %v1166 = vshrl.u32 %v1148, 16
      %v1167 = vshrl.u32 %v1152, 16
      %v1168 = vpack.i.b16 %v1167, %v1166
      %v1171 = vpack.i.b16 %v1160, %v1156
      %v1172 = vshrl.u32 %v1156, 16
      %v1173 = vshrl.u32 %v1160, 16
      %v1174 = vpack.i.b16 %v1173, %v1172
      %v1177 = vpack.i.b16 %v1154, %v1150
      %v1178 = vshrl.u32 %v1150, 16
      %v1179 = vshrl.u32 %v1154, 16
      %v1180 = vpack.i.b16 %v1179, %v1178
      %v1183 = vpack.i.b16 %v1162, %v1158
      %v1184 = vshrl.u32 %v1158, 16
      %v1185 = vshrl.u32 %v1162, 16
      %v1186 = vpack.i.b16 %v1185, %v1184
      %v1189 = vunpack.c.l.s4 1983009808
      %v1190 = vunpack.c.0.s8 %v1189
      %v1191 = vlaneseq
      %v1192 = vshrl.u32 %v1191, 7
      %v1193 = vsub.s32 %v1190, %v1192
      %v1194 = vrot.slane %v1165, %v1193
      %v1197 = vunpack.c.l.s4 1983009808
      %v1198 = vunpack.c.0.s8 %v1197
      %v1199 = vlaneseq
      %v1200 = vshrl.u32 %v1199, 7
      %v1201 = vsub.s32 %v1198, %v1200
      %v1202 = vrot.slane %v1171, %v1201
      %v1203 = vcombine.low %v1194, %v1202
      %v1204 = vcombine.high %v1194, %v1202
      %v1206 = vunpack.c.l.s4 1934713408
      %v1207 = vunpack.c.0.s8 %v1206
      %v1208 = vlaneseq
      %v1209 = vshrl.u32 %v1208, 7
      %v1210 = vsub.s32 %v1207, %v1209
      %v1211 = vrot.slane %v1203, %v1210
      %v1213 = vunpack.c.l.s4 1934713408
      %v1214 = vunpack.c.0.s8 %v1213
      %v1215 = vlaneseq
      %v1216 = vshrl.u32 %v1215, 7
      %v1217 = vsub.s32 %v1214, %v1216
      %v1218 = vrot.slane %v1204, %v1217
      %v1219 = vcombine.high %v1211, 0
      %v1220 = vcombine.high %v1218, 0
      %v1223 = vunpack.c.l.s4 1983009808
      %v1224 = vunpack.c.0.s8 %v1223
      %v1225 = vlaneseq
      %v1226 = vshrl.u32 %v1225, 7
      %v1227 = vsub.s32 %v1224, %v1226
      %v1228 = vrot.slane %v1168, %v1227
      %v1231 = vunpack.c.l.s4 1983009808
      %v1232 = vunpack.c.0.s8 %v1231
      %v1233 = vlaneseq
      %v1234 = vshrl.u32 %v1233, 7
      %v1235 = vsub.s32 %v1232, %v1234
      %v1236 = vrot.slane %v1174, %v1235
      %v1237 = vcombine.low %v1228, %v1236
      %v1238 = vcombine.high %v1228, %v1236
      %v1240 = vunpack.c.l.s4 1934713408
      %v1241 = vunpack.c.0.s8 %v1240
      %v1242 = vlaneseq
      %v1243 = vshrl.u32 %v1242, 7
      %v1244 = vsub.s32 %v1241, %v1243
      %v1245 = vrot.slane %v1237, %v1244
      %v1247 = vunpack.c.l.s4 1934713408
      %v1248 = vunpack.c.0.s8 %v1247
      %v1249 = vlaneseq
      %v1250 = vshrl.u32 %v1249, 7
      %v1251 = vsub.s32 %v1248, %v1250
      %v1252 = vrot.slane %v1238, %v1251
      %v1253 = vcombine.high %v1245, 0
      %v1254 = vcombine.high %v1252, 0
      %v1257 = vunpack.c.l.s4 1983009808
      %v1258 = vunpack.c.0.s8 %v1257
      %v1259 = vlaneseq
      %v1260 = vshrl.u32 %v1259, 7
      %v1261 = vsub.s32 %v1258, %v1260
      %v1262 = vrot.slane %v1177, %v1261
      %v1265 = vunpack.c.l.s4 1983009808
      %v1266 = vunpack.c.0.s8 %v1265
      %v1267 = vlaneseq
      %v1268 = vshrl.u32 %v1267, 7
      %v1269 = vsub.s32 %v1266, %v1268
      %v1270 = vrot.slane %v1183, %v1269
      %v1271 = vcombine.low %v1262, %v1270
      %v1272 = vcombine.high %v1262, %v1270
      %v1274 = vunpack.c.l.s4 1934713408
      %v1275 = vunpack.c.0.s8 %v1274
      %v1276 = vlaneseq
      %v1277 = vshrl.u32 %v1276, 7
      %v1278 = vsub.s32 %v1275, %v1277
      %v1279 = vrot.slane %v1271, %v1278
      %v1281 = vunpack.c.l.s4 1934713408
      %v1282 = vunpack.c.0.s8 %v1281
      %v1283 = vlaneseq
      %v1284 = vshrl.u32 %v1283, 7
      %v1285 = vsub.s32 %v1282, %v1284
      %v1286 = vrot.slane %v1272, %v1285
      %v1287 = vcombine.high %v1279, 0
      %v1288 = vcombine.high %v1286, 0
      %v1291 = vunpack.c.l.s4 1983009808
      %v1292 = vunpack.c.0.s8 %v1291
      %v1293 = vlaneseq
      %v1294 = vshrl.u32 %v1293, 7
      %v1295 = vsub.s32 %v1292, %v1294
      %v1296 = vrot.slane %v1180, %v1295
      %v1299 = vunpack.c.l.s4 1983009808
      %v1300 = vunpack.c.0.s8 %v1299
      %v1301 = vlaneseq
      %v1302 = vshrl.u32 %v1301, 7
      %v1303 = vsub.s32 %v1300, %v1302
      %v1304 = vrot.slane %v1186, %v1303
      %v1305 = vcombine.low %v1296, %v1304
      %v1306 = vcombine.high %v1296, %v1304
      %v1308 = vunpack.c.l.s4 1934713408
      %v1309 = vunpack.c.0.s8 %v1308
      %v1310 = vlaneseq
      %v1311 = vshrl.u32 %v1310, 7
      %v1312 = vsub.s32 %v1309, %v1311
      %v1313 = vrot.slane %v1305, %v1312
      %v1315 = vunpack.c.l.s4 1934713408
      %v1316 = vunpack.c.0.s8 %v1315
      %v1317 = vlaneseq
      %v1318 = vshrl.u32 %v1317, 7
      %v1319 = vsub.s32 %v1316, %v1318
      %v1320 = vrot.slane %v1306, %v1319
      %v1321 = vcombine.high %v1313, 0
      %v1322 = vcombine.high %v1320, 0
      %v1324 = vunpack.c.l.b16 %v1245
      %v1325 = vpack.c.b16 %v1324, %v1324
      %1326 = vrot.lane.b32.xlu0 %v1325, 16
      %v1327 = vpop.permute.xlu0 %1326
      %v1329 = vunpack.c.l.b16 %v1219
      %v1330 = vpack.c.b16 %v1329, %v1329
      %1331 = vrot.lane.b32.xlu0 %v1330, 32
      %v1332 = vpop.permute.xlu0 %1331
      %v1334 = vunpack.c.l.b16 %v1253
      %v1335 = vpack.c.b16 %v1334, %v1334
      %1336 = vrot.lane.b32.xlu0 %v1335, 48
      %v1337 = vpop.permute.xlu0 %1336
      %v1339 = vunpack.c.l.b16 %v1218
      %v1340 = vpack.c.b16 %v1339, %v1339
      %1341 = vrot.lane.b32.xlu0 %v1340, 64
      %v1342 = vpop.permute.xlu0 %1341
      %v1344 = vunpack.c.l.b16 %v1252
      %v1345 = vpack.c.b16 %v1344, %v1344
      %1346 = vrot.lane.b32.xlu0 %v1345, 80
      %v1347 = vpop.permute.xlu0 %1346
      %v1349 = vunpack.c.l.b16 %v1220
      %v1350 = vpack.c.b16 %v1349, %v1349
      %1351 = vrot.lane.b32.xlu0 %v1350, 96
      %v1352 = vpop.permute.xlu0 %1351
      %v1354 = vunpack.c.l.b16 %v1254
      %v1355 = vpack.c.b16 %v1354, %v1354
      %1356 = vrot.lane.b32.xlu0 %v1355, 112
      %v1357 = vpop.permute.xlu0 %1356
      %v1359 = vunpack.c.l.b16 %v1313
      %v1360 = vpack.c.b16 %v1359, %v1359
      %1361 = vrot.lane.b32.xlu0 %v1360, 16
      %v1362 = vpop.permute.xlu0 %1361
      %v1364 = vunpack.c.l.b16 %v1287
      %v1365 = vpack.c.b16 %v1364, %v1364
      %1366 = vrot.lane.b32.xlu0 %v1365, 32
      %v1367 = vpop.permute.xlu0 %1366
      %v1369 = vunpack.c.l.b16 %v1321
      %v1370 = vpack.c.b16 %v1369, %v1369
      %1371 = vrot.lane.b32.xlu0 %v1370, 48
      %v1372 = vpop.permute.xlu0 %1371
      %v1374 = vunpack.c.l.b16 %v1286
      %v1375 = vpack.c.b16 %v1374, %v1374
      %1376 = vrot.lane.b32.xlu0 %v1375, 64
      %v1377 = vpop.permute.xlu0 %1376
      %v1379 = vunpack.c.l.b16 %v1320
      %v1380 = vpack.c.b16 %v1379, %v1379
      %1381 = vrot.lane.b32.xlu0 %v1380, 80
      %v1382 = vpop.permute.xlu0 %1381
      %v1384 = vunpack.c.l.b16 %v1288
      %v1385 = vpack.c.b16 %v1384, %v1384
      %1386 = vrot.lane.b32.xlu0 %v1385, 96
      %v1387 = vpop.permute.xlu0 %1386
      %v1389 = vunpack.c.l.b16 %v1322
      %v1390 = vpack.c.b16 %v1389, %v1389
      %1391 = vrot.lane.b32.xlu0 %v1390, 112
      %v1392 = vpop.permute.xlu0 %1391
      %v1395 = vsel %vm826, %v1211, %v1327
      %v1397 = vsel %vm830, %v1395, %v1332
      %v1399 = vsel %vm833, %v1397, %v1337
      %v1401 = vsel %vm836, %v1399, %v1342
      %v1403 = vsel %vm839, %v1401, %v1347
      %v1405 = vsel %vm842, %v1403, %v1352
      %v1407 = vsel %vm845, %v1405, %v1357
      %v1410 = vsel %vm826, %v1279, %v1362
      %v1412 = vsel %vm830, %v1410, %v1367
      %v1414 = vsel %vm833, %v1412, %v1372
      %v1416 = vsel %vm836, %v1414, %v1377
      %v1418 = vsel %vm839, %v1416, %v1382
      %v1420 = vsel %vm842, %v1418, %v1387
      %v1422 = vsel %vm845, %v1420, %v1392
      %v1423 = vld [vmem:[#allocation2 + $0x8] sm:$0x1]
      %v1424 = vld [vmem:[#allocation2 + $0x14] sm:$0x1]
      %v1425 = vld [vmem:[#allocation2 + $0x20] sm:$0x1]
      %v1426 = vld [vmem:[#allocation2 + $0x2c] sm:$0x1]
      %vm1427 = vsmask.f32 3328
      %vm1428 = vsmask.f32 7440
      %vm1429 = vmor %vm1427, %vm1428
      %v1431 = vrot.slane %v599, 4
      %v1432 = vshll.u32 %v588, 16
      %v1434 = vrot.slane %v1432, 5
      %v1435 = vor.u32 %v1431, %v1434
      %v1436 = vrot.slane %v1435, 4
      %v1437 = vshll.u32 %v589, 16
      %v1439 = vrot.slane %v1437, 5
      %v1440 = vsel %vm1429, %v1436, %v1439
      %v1442 = vrot.slane %v611, 4
      %v1443 = vor.u32 %v1442, %v1439
      %v1444 = vrot.slane %v1443, 4
      %v1446 = vshll.u32 %v1423, 16
      %v1448 = vrot.slane %v1446, 5
      %v1449 = vsel %vm1429, %v1444, %v1448
      %v1451 = vrot.slane %v600, 4
      %v1452 = vshll.u32 %v590, 16
      %v1454 = vrot.slane %v1452, 5
      %v1455 = vor.u32 %v1451, %v1454
      %v1456 = vrot.slane %v1455, 4
      %v1457 = vshll.u32 %v591, 16
      %v1459 = vrot.slane %v1457, 5
      %v1460 = vsel %vm1429, %v1456, %v1459
      %v1462 = vrot.slane %v612, 4
      %v1463 = vor.u32 %v1462, %v1459
      %v1464 = vrot.slane %v1463, 4
      %v1466 = vshll.u32 %v1424, 16
      %v1468 = vrot.slane %v1466, 5
      %v1469 = vsel %vm1429, %v1464, %v1468
      %v1471 = vrot.slane %v605, 4
      %v1472 = vshll.u32 %v592, 16
      %v1474 = vrot.slane %v1472, 5
      %v1475 = vor.u32 %v1471, %v1474
      %v1476 = vrot.slane %v1475, 4
      %v1477 = vshll.u32 %v593, 16
      %v1479 = vrot.slane %v1477, 5
      %v1480 = vsel %vm1429, %v1476, %v1479
      %v1482 = vrot.slane %v617, 4
      %v1483 = vor.u32 %v1482, %v1479
      %v1484 = vrot.slane %v1483, 4
      %v1486 = vshll.u32 %v1425, 16
      %v1488 = vrot.slane %v1486, 5
      %v1489 = vsel %vm1429, %v1484, %v1488
      %v1491 = vrot.slane %v606, 4
      %v1492 = vshll.u32 %v594, 16
      %v1494 = vrot.slane %v1492, 5
      %v1495 = vor.u32 %v1491, %v1494
      %v1496 = vrot.slane %v1495, 4
      %v1497 = vshll.u32 %v595, 16
      %v1499 = vrot.slane %v1497, 5
      %v1500 = vsel %vm1429, %v1496, %v1499
      %v1502 = vrot.slane %v618, 4
      %v1503 = vor.u32 %v1502, %v1499
      %v1504 = vrot.slane %v1503, 4
      %v1506 = vshll.u32 %v1426, 16
      %v1508 = vrot.slane %v1506, 5
      %v1509 = vsel %vm1429, %v1504, %v1508
      %v1512 = vpack.i.b16 %v1460, %v1440
      %v1513 = vshrl.u32 %v1440, 16
      %v1514 = vshrl.u32 %v1460, 16
      %v1515 = vpack.i.b16 %v1514, %v1513
      %v1518 = vpack.i.b16 %v1500, %v1480
      %v1519 = vshrl.u32 %v1480, 16
      %v1520 = vshrl.u32 %v1500, 16
      %v1521 = vpack.i.b16 %v1520, %v1519
      %v1524 = vpack.i.b16 %v1469, %v1449
      %v1525 = vshrl.u32 %v1449, 16
      %v1526 = vshrl.u32 %v1469, 16
      %v1527 = vpack.i.b16 %v1526, %v1525
      %v1530 = vpack.i.b16 %v1509, %v1489
      %v1531 = vshrl.u32 %v1489, 16
      %v1532 = vshrl.u32 %v1509, 16
      %v1533 = vpack.i.b16 %v1532, %v1531
      %v1536 = vunpack.c.l.s4 1983009808
      %v1537 = vunpack.c.0.s8 %v1536
      %v1538 = vlaneseq
      %v1539 = vshrl.u32 %v1538, 7
      %v1540 = vsub.s32 %v1537, %v1539
      %v1541 = vrot.slane %v1512, %v1540
      %v1544 = vunpack.c.l.s4 1983009808
      %v1545 = vunpack.c.0.s8 %v1544
      %v1546 = vlaneseq
      %v1547 = vshrl.u32 %v1546, 7
      %v1548 = vsub.s32 %v1545, %v1547
      %v1549 = vrot.slane %v1518, %v1548
      %v1550 = vcombine.low %v1541, %v1549
      %v1551 = vcombine.high %v1541, %v1549
      %v1553 = vunpack.c.l.s4 1934713408
      %v1554 = vunpack.c.0.s8 %v1553
      %v1555 = vlaneseq
      %v1556 = vshrl.u32 %v1555, 7
      %v1557 = vsub.s32 %v1554, %v1556
      %v1558 = vrot.slane %v1550, %v1557
      %v1560 = vunpack.c.l.s4 1934713408
      %v1561 = vunpack.c.0.s8 %v1560
      %v1562 = vlaneseq
      %v1563 = vshrl.u32 %v1562, 7
      %v1564 = vsub.s32 %v1561, %v1563
      %v1565 = vrot.slane %v1551, %v1564
      %v1566 = vcombine.high %v1558, 0
      %v1567 = vcombine.high %v1565, 0
      %v1570 = vunpack.c.l.s4 1983009808
      %v1571 = vunpack.c.0.s8 %v1570
      %v1572 = vlaneseq
      %v1573 = vshrl.u32 %v1572, 7
      %v1574 = vsub.s32 %v1571, %v1573
      %v1575 = vrot.slane %v1515, %v1574
      %v1578 = vunpack.c.l.s4 1983009808
      %v1579 = vunpack.c.0.s8 %v1578
      %v1580 = vlaneseq
      %v1581 = vshrl.u32 %v1580, 7
      %v1582 = vsub.s32 %v1579, %v1581
      %v1583 = vrot.slane %v1521, %v1582
      %v1584 = vcombine.low %v1575, %v1583
      %v1585 = vcombine.high %v1575, %v1583
      %v1587 = vunpack.c.l.s4 1934713408
      %v1588 = vunpack.c.0.s8 %v1587
      %v1589 = vlaneseq
      %v1590 = vshrl.u32 %v1589, 7
      %v1591 = vsub.s32 %v1588, %v1590
      %v1592 = vrot.slane %v1584, %v1591
      %v1594 = vunpack.c.l.s4 1934713408
      %v1595 = vunpack.c.0.s8 %v1594
      %v1596 = vlaneseq
      %v1597 = vshrl.u32 %v1596, 7
      %v1598 = vsub.s32 %v1595, %v1597
      %v1599 = vrot.slane %v1585, %v1598
      %v1600 = vcombine.high %v1592, 0
      %v1601 = vcombine.high %v1599, 0
      %v1604 = vunpack.c.l.s4 1983009808
      %v1605 = vunpack.c.0.s8 %v1604
      %v1606 = vlaneseq
      %v1607 = vshrl.u32 %v1606, 7
      %v1608 = vsub.s32 %v1605, %v1607
      %v1609 = vrot.slane %v1524, %v1608
      %v1612 = vunpack.c.l.s4 1983009808
      %v1613 = vunpack.c.0.s8 %v1612
      %v1614 = vlaneseq
      %v1615 = vshrl.u32 %v1614, 7
      %v1616 = vsub.s32 %v1613, %v1615
      %v1617 = vrot.slane %v1530, %v1616
      %v1618 = vcombine.low %v1609, %v1617
      %v1619 = vcombine.high %v1609, %v1617
      %v1621 = vunpack.c.l.s4 1934713408
      %v1622 = vunpack.c.0.s8 %v1621
      %v1623 = vlaneseq
      %v1624 = vshrl.u32 %v1623, 7
      %v1625 = vsub.s32 %v1622, %v1624
      %v1626 = vrot.slane %v1618, %v1625
      %v1628 = vunpack.c.l.s4 1934713408
      %v1629 = vunpack.c.0.s8 %v1628
      %v1630 = vlaneseq
      %v1631 = vshrl.u32 %v1630, 7
      %v1632 = vsub.s32 %v1629, %v1631
      %v1633 = vrot.slane %v1619, %v1632
      %v1634 = vcombine.high %v1626, 0
      %v1635 = vcombine.high %v1633, 0
      %v1638 = vunpack.c.l.s4 1983009808
      %v1639 = vunpack.c.0.s8 %v1638
      %v1640 = vlaneseq
      %v1641 = vshrl.u32 %v1640, 7
      %v1642 = vsub.s32 %v1639, %v1641
      %v1643 = vrot.slane %v1527, %v1642
      %v1646 = vunpack.c.l.s4 1983009808
      %v1647 = vunpack.c.0.s8 %v1646
      %v1648 = vlaneseq
      %v1649 = vshrl.u32 %v1648, 7
      %v1650 = vsub.s32 %v1647, %v1649
      %v1651 = vrot.slane %v1533, %v1650
      %v1652 = vcombine.low %v1643, %v1651
      %v1653 = vcombine.high %v1643, %v1651
      %v1655 = vunpack.c.l.s4 1934713408
      %v1656 = vunpack.c.0.s8 %v1655
      %v1657 = vlaneseq
      %v1658 = vshrl.u32 %v1657, 7
      %v1659 = vsub.s32 %v1656, %v1658
      %v1660 = vrot.slane %v1652, %v1659
      %v1662 = vunpack.c.l.s4 1934713408
      %v1663 = vunpack.c.0.s8 %v1662
      %v1664 = vlaneseq
      %v1665 = vshrl.u32 %v1664, 7
      %v1666 = vsub.s32 %v1663, %v1665
      %v1667 = vrot.slane %v1653, %v1666
      %v1668 = vcombine.high %v1660, 0
      %v1669 = vcombine.high %v1667, 0
      %v1671 = vunpack.c.l.b16 %v1592
      %v1672 = vpack.c.b16 %v1671, %v1671
      %1673 = vrot.lane.b32.xlu0 %v1672, 16
      %v1674 = vpop.permute.xlu0 %1673
      %v1676 = vunpack.c.l.b16 %v1566
      %v1677 = vpack.c.b16 %v1676, %v1676
      %1678 = vrot.lane.b32.xlu0 %v1677, 32
      %v1679 = vpop.permute.xlu0 %1678
      %v1681 = vunpack.c.l.b16 %v1600
      %v1682 = vpack.c.b16 %v1681, %v1681
      %1683 = vrot.lane.b32.xlu0 %v1682, 48
      %v1684 = vpop.permute.xlu0 %1683
      %v1686 = vunpack.c.l.b16 %v1565
      %v1687 = vpack.c.b16 %v1686, %v1686
      %1688 = vrot.lane.b32.xlu0 %v1687, 64
      %v1689 = vpop.permute.xlu0 %1688
      %v1691 = vunpack.c.l.b16 %v1599
      %v1692 = vpack.c.b16 %v1691, %v1691
      %1693 = vrot.lane.b32.xlu0 %v1692, 80
      %v1694 = vpop.permute.xlu0 %1693
      %v1696 = vunpack.c.l.b16 %v1567
      %v1697 = vpack.c.b16 %v1696, %v1696
      %1698 = vrot.lane.b32.xlu0 %v1697, 96
      %v1699 = vpop.permute.xlu0 %1698
      %v1701 = vunpack.c.l.b16 %v1601
      %v1702 = vpack.c.b16 %v1701, %v1701
      %1703 = vrot.lane.b32.xlu0 %v1702, 112
      %v1704 = vpop.permute.xlu0 %1703
      %v1706 = vunpack.c.l.b16 %v1660
      %v1707 = vpack.c.b16 %v1706, %v1706
      %1708 = vrot.lane.b32.xlu0 %v1707, 16
      %v1709 = vpop.permute.xlu0 %1708
      %v1711 = vunpack.c.l.b16 %v1634
      %v1712 = vpack.c.b16 %v1711, %v1711
      %1713 = vrot.lane.b32.xlu0 %v1712, 32
      %v1714 = vpop.permute.xlu0 %1713
      %v1716 = vunpack.c.l.b16 %v1668
      %v1717 = vpack.c.b16 %v1716, %v1716
      %1718 = vrot.lane.b32.xlu0 %v1717, 48
      %v1719 = vpop.permute.xlu0 %1718
      %v1721 = vunpack.c.l.b16 %v1633
      %v1722 = vpack.c.b16 %v1721, %v1721
      %1723 = vrot.lane.b32.xlu0 %v1722, 64
      %v1724 = vpop.permute.xlu0 %1723
      %v1726 = vunpack.c.l.b16 %v1667
      %v1727 = vpack.c.b16 %v1726, %v1726
      %1728 = vrot.lane.b32.xlu0 %v1727, 80
      %v1729 = vpop.permute.xlu0 %1728
      %v1731 = vunpack.c.l.b16 %v1635
      %v1732 = vpack.c.b16 %v1731, %v1731
      %1733 = vrot.lane.b32.xlu0 %v1732, 96
      %v1734 = vpop.permute.xlu0 %1733
      %v1736 = vunpack.c.l.b16 %v1669
      %v1737 = vpack.c.b16 %v1736, %v1736
      %1738 = vrot.lane.b32.xlu0 %v1737, 112
      %v1739 = vpop.permute.xlu0 %1738
      %v1742 = vsel %vm826, %v1558, %v1674
      %v1744 = vsel %vm830, %v1742, %v1679
      %v1746 = vsel %vm833, %v1744, %v1684
      %v1748 = vsel %vm836, %v1746, %v1689
      %v1750 = vsel %vm839, %v1748, %v1694
      %v1752 = vsel %vm842, %v1750, %v1699
      %v1754 = vsel %vm845, %v1752, %v1704
      %v1757 = vsel %vm826, %v1626, %v1709
      %v1759 = vsel %vm830, %v1757, %v1714
      %v1761 = vsel %vm833, %v1759, %v1719
      %v1763 = vsel %vm836, %v1761, %v1724
      %v1765 = vsel %vm839, %v1763, %v1729
      %v1767 = vsel %vm842, %v1765, %v1734
      %v1769 = vsel %vm845, %v1767, %v1739
      %1770 = vrot.lane.b32.xlu0 %v1440, 127
      %v1771 = vpop.permute.xlu0 %1770
      %1772 = vrot.lane.b32.xlu0 %v1449, 127
      %v1773 = vpop.permute.xlu0 %1772
      %1774 = vrot.lane.b32.xlu0 %v1460, 127
      %v1775 = vpop.permute.xlu0 %1774
      %1776 = vrot.lane.b32.xlu0 %v1469, 127
      %v1777 = vpop.permute.xlu0 %1776
      %1778 = vrot.lane.b32.xlu0 %v1480, 127
      %v1779 = vpop.permute.xlu0 %1778
      %1780 = vrot.lane.b32.xlu0 %v1489, 127
      %v1781 = vpop.permute.xlu0 %1780
      %1782 = vrot.lane.b32.xlu0 %v1500, 127
      %v1783 = vpop.permute.xlu0 %1782
      %1784 = vrot.lane.b32.xlu0 %v1509, 127
      %v1785 = vpop.permute.xlu0 %1784
      %v1788 = vpack.i.b16 %v1775, %v1771
      %v1789 = vshrl.u32 %v1771, 16
      %v1790 = vshrl.u32 %v1775, 16
      %v1791 = vpack.i.b16 %v1790, %v1789
      %v1794 = vpack.i.b16 %v1783, %v1779
      %v1795 = vshrl.u32 %v1779, 16
      %v1796 = vshrl.u32 %v1783, 16
      %v1797 = vpack.i.b16 %v1796, %v1795
      %v1800 = vpack.i.b16 %v1777, %v1773
      %v1801 = vshrl.u32 %v1773, 16
      %v1802 = vshrl.u32 %v1777, 16
      %v1803 = vpack.i.b16 %v1802, %v1801
      %v1806 = vpack.i.b16 %v1785, %v1781
      %v1807 = vshrl.u32 %v1781, 16
      %v1808 = vshrl.u32 %v1785, 16
      %v1809 = vpack.i.b16 %v1808, %v1807
      %v1812 = vunpack.c.l.s4 1983009808
      %v1813 = vunpack.c.0.s8 %v1812
      %v1814 = vlaneseq
      %v1815 = vshrl.u32 %v1814, 7
      %v1816 = vsub.s32 %v1813, %v1815
      %v1817 = vrot.slane %v1788, %v1816
      %v1820 = vunpack.c.l.s4 1983009808
      %v1821 = vunpack.c.0.s8 %v1820
      %v1822 = vlaneseq
      %v1823 = vshrl.u32 %v1822, 7
      %v1824 = vsub.s32 %v1821, %v1823
      %v1825 = vrot.slane %v1794, %v1824
      %v1826 = vcombine.low %v1817, %v1825
      %v1827 = vcombine.high %v1817, %v1825
      %v1829 = vunpack.c.l.s4 1934713408
      %v1830 = vunpack.c.0.s8 %v1829
      %v1831 = vlaneseq
      %v1832 = vshrl.u32 %v1831, 7
      %v1833 = vsub.s32 %v1830, %v1832
      %v1834 = vrot.slane %v1826, %v1833
      %v1836 = vunpack.c.l.s4 1934713408
      %v1837 = vunpack.c.0.s8 %v1836
      %v1838 = vlaneseq
      %v1839 = vshrl.u32 %v1838, 7
      %v1840 = vsub.s32 %v1837, %v1839
      %v1841 = vrot.slane %v1827, %v1840
      %v1842 = vcombine.high %v1834, 0
      %v1843 = vcombine.high %v1841, 0
      %v1846 = vunpack.c.l.s4 1983009808
      %v1847 = vunpack.c.0.s8 %v1846
      %v1848 = vlaneseq
      %v1849 = vshrl.u32 %v1848, 7
      %v1850 = vsub.s32 %v1847, %v1849
      %v1851 = vrot.slane %v1791, %v1850
      %v1854 = vunpack.c.l.s4 1983009808
      %v1855 = vunpack.c.0.s8 %v1854
      %v1856 = vlaneseq
      %v1857 = vshrl.u32 %v1856, 7
      %v1858 = vsub.s32 %v1855, %v1857
      %v1859 = vrot.slane %v1797, %v1858
      %v1860 = vcombine.low %v1851, %v1859
      %v1861 = vcombine.high %v1851, %v1859
      %v1863 = vunpack.c.l.s4 1934713408
      %v1864 = vunpack.c.0.s8 %v1863
      %v1865 = vlaneseq
      %v1866 = vshrl.u32 %v1865, 7
      %v1867 = vsub.s32 %v1864, %v1866
      %v1868 = vrot.slane %v1860, %v1867
      %v1870 = vunpack.c.l.s4 1934713408
      %v1871 = vunpack.c.0.s8 %v1870
      %v1872 = vlaneseq
      %v1873 = vshrl.u32 %v1872, 7
      %v1874 = vsub.s32 %v1871, %v1873
      %v1875 = vrot.slane %v1861, %v1874
      %v1876 = vcombine.high %v1868, 0
      %v1877 = vcombine.high %v1875, 0
      %v1880 = vunpack.c.l.s4 1983009808
      %v1881 = vunpack.c.0.s8 %v1880
      %v1882 = vlaneseq
      %v1883 = vshrl.u32 %v1882, 7
      %v1884 = vsub.s32 %v1881, %v1883
      %v1885 = vrot.slane %v1800, %v1884
      %v1888 = vunpack.c.l.s4 1983009808
      %v1889 = vunpack.c.0.s8 %v1888
      %v1890 = vlaneseq
      %v1891 = vshrl.u32 %v1890, 7
      %v1892 = vsub.s32 %v1889, %v1891
      %v1893 = vrot.slane %v1806, %v1892
      %v1894 = vcombine.low %v1885, %v1893
      %v1895 = vcombine.high %v1885, %v1893
      %v1897 = vunpack.c.l.s4 1934713408
      %v1898 = vunpack.c.0.s8 %v1897
      %v1899 = vlaneseq
      %v1900 = vshrl.u32 %v1899, 7
      %v1901 = vsub.s32 %v1898, %v1900
      %v1902 = vrot.slane %v1894, %v1901
      %v1904 = vunpack.c.l.s4 1934713408
      %v1905 = vunpack.c.0.s8 %v1904
      %v1906 = vlaneseq
      %v1907 = vshrl.u32 %v1906, 7
      %v1908 = vsub.s32 %v1905, %v1907
      %v1909 = vrot.slane %v1895, %v1908
      %v1910 = vcombine.high %v1902, 0
      %v1911 = vcombine.high %v1909, 0
      %v1914 = vunpack.c.l.s4 1983009808
      %v1915 = vunpack.c.0.s8 %v1914
      %v1916 = vlaneseq
      %v1917 = vshrl.u32 %v1916, 7
      %v1918 = vsub.s32 %v1915, %v1917
      %v1919 = vrot.slane %v1803, %v1918
      %v1922 = vunpack.c.l.s4 1983009808
      %v1923 = vunpack.c.0.s8 %v1922
      %v1924 = vlaneseq
      %v1925 = vshrl.u32 %v1924, 7
      %v1926 = vsub.s32 %v1923, %v1925
      %v1927 = vrot.slane %v1809, %v1926
      %v1928 = vcombine.low %v1919, %v1927
      %v1929 = vcombine.high %v1919, %v1927
      %v1931 = vunpack.c.l.s4 1934713408
      %v1932 = vunpack.c.0.s8 %v1931
      %v1933 = vlaneseq
      %v1934 = vshrl.u32 %v1933, 7
      %v1935 = vsub.s32 %v1932, %v1934
      %v1936 = vrot.slane %v1928, %v1935
      %v1938 = vunpack.c.l.s4 1934713408
      %v1939 = vunpack.c.0.s8 %v1938
      %v1940 = vlaneseq
      %v1941 = vshrl.u32 %v1940, 7
      %v1942 = vsub.s32 %v1939, %v1941
      %v1943 = vrot.slane %v1929, %v1942
      %v1944 = vcombine.high %v1936, 0
      %v1945 = vcombine.high %v1943, 0
      %v1947 = vunpack.c.l.b16 %v1868
      %v1948 = vpack.c.b16 %v1947, %v1947
      %1949 = vrot.lane.b32.xlu0 %v1948, 16
      %v1950 = vpop.permute.xlu0 %1949
      %v1952 = vunpack.c.l.b16 %v1842
      %v1953 = vpack.c.b16 %v1952, %v1952
      %1954 = vrot.lane.b32.xlu0 %v1953, 32
      %v1955 = vpop.permute.xlu0 %1954
      %v1957 = vunpack.c.l.b16 %v1876
      %v1958 = vpack.c.b16 %v1957, %v1957
      %1959 = vrot.lane.b32.xlu0 %v1958, 48
      %v1960 = vpop.permute.xlu0 %1959
      %v1962 = vunpack.c.l.b16 %v1841
      %v1963 = vpack.c.b16 %v1962, %v1962
      %1964 = vrot.lane.b32.xlu0 %v1963, 64
      %v1965 = vpop.permute.xlu0 %1964
      %v1967 = vunpack.c.l.b16 %v1875
      %v1968 = vpack.c.b16 %v1967, %v1967
      %1969 = vrot.lane.b32.xlu0 %v1968, 80
      %v1970 = vpop.permute.xlu0 %1969
      %v1972 = vunpack.c.l.b16 %v1843
      %v1973 = vpack.c.b16 %v1972, %v1972
      %1974 = vrot.lane.b32.xlu0 %v1973, 96
      %v1975 = vpop.permute.xlu0 %1974
      %v1977 = vunpack.c.l.b16 %v1877
      %v1978 = vpack.c.b16 %v1977, %v1977
      %1979 = vrot.lane.b32.xlu0 %v1978, 112
      %v1980 = vpop.permute.xlu0 %1979
      %v1982 = vunpack.c.l.b16 %v1936
      %v1983 = vpack.c.b16 %v1982, %v1982
      %1984 = vrot.lane.b32.xlu0 %v1983, 16
      %v1985 = vpop.permute.xlu0 %1984
      %v1987 = vunpack.c.l.b16 %v1910
      %v1988 = vpack.c.b16 %v1987, %v1987
      %1989 = vrot.lane.b32.xlu0 %v1988, 32
      %v1990 = vpop.permute.xlu0 %1989
      %v1992 = vunpack.c.l.b16 %v1944
      %v1993 = vpack.c.b16 %v1992, %v1992
      %1994 = vrot.lane.b32.xlu0 %v1993, 48
      %v1995 = vpop.permute.xlu0 %1994
      %v1997 = vunpack.c.l.b16 %v1909
      %v1998 = vpack.c.b16 %v1997, %v1997
      %1999 = vrot.lane.b32.xlu0 %v1998, 64
      %v2000 = vpop.permute.xlu0 %1999
      %v2002 = vunpack.c.l.b16 %v1943
      %v2003 = vpack.c.b16 %v2002, %v2002
      %2004 = vrot.lane.b32.xlu0 %v2003, 80
      %v2005 = vpop.permute.xlu0 %2004
      %v2007 = vunpack.c.l.b16 %v1911
      %v2008 = vpack.c.b16 %v2007, %v2007
      %2009 = vrot.lane.b32.xlu0 %v2008, 96
      %v2010 = vpop.permute.xlu0 %2009
      %v2012 = vunpack.c.l.b16 %v1945
      %v2013 = vpack.c.b16 %v2012, %v2012
      %2014 = vrot.lane.b32.xlu0 %v2013, 112
      %v2015 = vpop.permute.xlu0 %2014
      %v2018 = vsel %vm826, %v1834, %v1950
      %v2020 = vsel %vm830, %v2018, %v1955
      %v2022 = vsel %vm833, %v2020, %v1960
      %v2024 = vsel %vm836, %v2022, %v1965
      %v2026 = vsel %vm839, %v2024, %v1970
      %v2028 = vsel %vm842, %v2026, %v1975
      %v2030 = vsel %vm845, %v2028, %v1980
      %v2033 = vsel %vm826, %v1902, %v1985
      %v2035 = vsel %vm830, %v2033, %v1990
      %v2037 = vsel %vm833, %v2035, %v1995
      %v2039 = vsel %vm836, %v2037, %v2000
      %v2041 = vsel %vm839, %v2039, %v2005
      %v2043 = vsel %vm842, %v2041, %v2010
      %v2045 = vsel %vm845, %v2043, %v2015
      %2046 = vrot.lane.b32.xlu0 %v1440, 126
      %v2047 = vpop.permute.xlu0 %2046
      %2048 = vrot.lane.b32.xlu0 %v1449, 126
      %v2049 = vpop.permute.xlu0 %2048
      %2050 = vrot.lane.b32.xlu0 %v1460, 126
      %v2051 = vpop.permute.xlu0 %2050
      %2052 = vrot.lane.b32.xlu0 %v1469, 126
      %v2053 = vpop.permute.xlu0 %2052
      %2054 = vrot.lane.b32.xlu0 %v1480, 126
      %v2055 = vpop.permute.xlu0 %2054
      %2056 = vrot.lane.b32.xlu0 %v1489, 126
      %v2057 = vpop.permute.xlu0 %2056
      %2058 = vrot.lane.b32.xlu0 %v1500, 126
      %v2059 = vpop.permute.xlu0 %2058
      %2060 = vrot.lane.b32.xlu0 %v1509, 126
      %v2061 = vpop.permute.xlu0 %2060
      %v2064 = vpack.i.b16 %v2051, %v2047
      %v2065 = vshrl.u32 %v2047, 16
      %v2066 = vshrl.u32 %v2051, 16
      %v2067 = vpack.i.b16 %v2066, %v2065
      %v2070 = vpack.i.b16 %v2059, %v2055
      %v2071 = vshrl.u32 %v2055, 16
      %v2072 = vshrl.u32 %v2059, 16
      %v2073 = vpack.i.b16 %v2072, %v2071
      %v2076 = vpack.i.b16 %v2053, %v2049
      %v2077 = vshrl.u32 %v2049, 16
      %v2078 = vshrl.u32 %v2053, 16
      %v2079 = vpack.i.b16 %v2078, %v2077
      %v2082 = vpack.i.b16 %v2061, %v2057
      %v2083 = vshrl.u32 %v2057, 16
      %v2084 = vshrl.u32 %v2061, 16
      %v2085 = vpack.i.b16 %v2084, %v2083
      %v2088 = vunpack.c.l.s4 1983009808
      %v2089 = vunpack.c.0.s8 %v2088
      %v2090 = vlaneseq
      %v2091 = vshrl.u32 %v2090, 7
      %v2092 = vsub.s32 %v2089, %v2091
      %v2093 = vrot.slane %v2064, %v2092
      %v2096 = vunpack.c.l.s4 1983009808
      %v2097 = vunpack.c.0.s8 %v2096
      %v2098 = vlaneseq
      %v2099 = vshrl.u32 %v2098, 7
      %v2100 = vsub.s32 %v2097, %v2099
      %v2101 = vrot.slane %v2070, %v2100
      %v2102 = vcombine.low %v2093, %v2101
      %v2103 = vcombine.high %v2093, %v2101
      %v2105 = vunpack.c.l.s4 1934713408
      %v2106 = vunpack.c.0.s8 %v2105
      %v2107 = vlaneseq
      %v2108 = vshrl.u32 %v2107, 7
      %v2109 = vsub.s32 %v2106, %v2108
      %v2110 = vrot.slane %v2102, %v2109
      %v2112 = vunpack.c.l.s4 1934713408
      %v2113 = vunpack.c.0.s8 %v2112
      %v2114 = vlaneseq
      %v2115 = vshrl.u32 %v2114, 7
      %v2116 = vsub.s32 %v2113, %v2115
      %v2117 = vrot.slane %v2103, %v2116
      %v2118 = vcombine.high %v2110, 0
      %v2119 = vcombine.high %v2117, 0
      %v2122 = vunpack.c.l.s4 1983009808
      %v2123 = vunpack.c.0.s8 %v2122
      %v2124 = vlaneseq
      %v2125 = vshrl.u32 %v2124, 7
      %v2126 = vsub.s32 %v2123, %v2125
      %v2127 = vrot.slane %v2067, %v2126
      %v2130 = vunpack.c.l.s4 1983009808
      %v2131 = vunpack.c.0.s8 %v2130
      %v2132 = vlaneseq
      %v2133 = vshrl.u32 %v2132, 7
      %v2134 = vsub.s32 %v2131, %v2133
      %v2135 = vrot.slane %v2073, %v2134
      %v2136 = vcombine.low %v2127, %v2135
      %v2137 = vcombine.high %v2127, %v2135
      %v2139 = vunpack.c.l.s4 1934713408
      %v2140 = vunpack.c.0.s8 %v2139
      %v2141 = vlaneseq
      %v2142 = vshrl.u32 %v2141, 7
      %v2143 = vsub.s32 %v2140, %v2142
      %v2144 = vrot.slane %v2136, %v2143
      %v2146 = vunpack.c.l.s4 1934713408
      %v2147 = vunpack.c.0.s8 %v2146
      %v2148 = vlaneseq
      %v2149 = vshrl.u32 %v2148, 7
      %v2150 = vsub.s32 %v2147, %v2149
      %v2151 = vrot.slane %v2137, %v2150
      %v2152 = vcombine.high %v2144, 0
      %v2153 = vcombine.high %v2151, 0
      %v2156 = vunpack.c.l.s4 1983009808
      %v2157 = vunpack.c.0.s8 %v2156
      %v2158 = vlaneseq
      %v2159 = vshrl.u32 %v2158, 7
      %v2160 = vsub.s32 %v2157, %v2159
      %v2161 = vrot.slane %v2076, %v2160
      %v2164 = vunpack.c.l.s4 1983009808
      %v2165 = vunpack.c.0.s8 %v2164
      %v2166 = vlaneseq
      %v2167 = vshrl.u32 %v2166, 7
      %v2168 = vsub.s32 %v2165, %v2167
      %v2169 = vrot.slane %v2082, %v2168
      %v2170 = vcombine.low %v2161, %v2169
      %v2171 = vcombine.high %v2161, %v2169
      %v2173 = vunpack.c.l.s4 1934713408
      %v2174 = vunpack.c.0.s8 %v2173
      %v2175 = vlaneseq
      %v2176 = vshrl.u32 %v2175, 7
      %v2177 = vsub.s32 %v2174, %v2176
      %v2178 = vrot.slane %v2170, %v2177
      %v2180 = vunpack.c.l.s4 1934713408
      %v2181 = vunpack.c.0.s8 %v2180
      %v2182 = vlaneseq
      %v2183 = vshrl.u32 %v2182, 7
      %v2184 = vsub.s32 %v2181, %v2183
      %v2185 = vrot.slane %v2171, %v2184
      %v2186 = vcombine.high %v2178, 0
      %v2187 = vcombine.high %v2185, 0
      %v2190 = vunpack.c.l.s4 1983009808
      %v2191 = vunpack.c.0.s8 %v2190
      %v2192 = vlaneseq
      %v2193 = vshrl.u32 %v2192, 7
      %v2194 = vsub.s32 %v2191, %v2193
      %v2195 = vrot.slane %v2079, %v2194
      %v2198 = vunpack.c.l.s4 1983009808
      %v2199 = vunpack.c.0.s8 %v2198
      %v2200 = vlaneseq
      %v2201 = vshrl.u32 %v2200, 7
      %v2202 = vsub.s32 %v2199, %v2201
      %v2203 = vrot.slane %v2085, %v2202
      %v2204 = vcombine.low %v2195, %v2203
      %v2205 = vcombine.high %v2195, %v2203
      %v2207 = vunpack.c.l.s4 1934713408
      %v2208 = vunpack.c.0.s8 %v2207
      %v2209 = vlaneseq
      %v2210 = vshrl.u32 %v2209, 7
      %v2211 = vsub.s32 %v2208, %v2210
      %v2212 = vrot.slane %v2204, %v2211
      %v2214 = vunpack.c.l.s4 1934713408
      %v2215 = vunpack.c.0.s8 %v2214
      %v2216 = vlaneseq
      %v2217 = vshrl.u32 %v2216, 7
      %v2218 = vsub.s32 %v2215, %v2217
      %v2219 = vrot.slane %v2205, %v2218
      %v2220 = vcombine.high %v2212, 0
      %v2221 = vcombine.high %v2219, 0
      %v2223 = vunpack.c.l.b16 %v2144
      %v2224 = vpack.c.b16 %v2223, %v2223
      %2225 = vrot.lane.b32.xlu0 %v2224, 16
      %v2226 = vpop.permute.xlu0 %2225
      %v2228 = vunpack.c.l.b16 %v2118
      %v2229 = vpack.c.b16 %v2228, %v2228
      %2230 = vrot.lane.b32.xlu0 %v2229, 32
      %v2231 = vpop.permute.xlu0 %2230
      %v2233 = vunpack.c.l.b16 %v2152
      %v2234 = vpack.c.b16 %v2233, %v2233
      %2235 = vrot.lane.b32.xlu0 %v2234, 48
      %v2236 = vpop.permute.xlu0 %2235
      %v2238 = vunpack.c.l.b16 %v2117
      %v2239 = vpack.c.b16 %v2238, %v2238
      %2240 = vrot.lane.b32.xlu0 %v2239, 64
      %v2241 = vpop.permute.xlu0 %2240
      %v2243 = vunpack.c.l.b16 %v2151
      %v2244 = vpack.c.b16 %v2243, %v2243
      %2245 = vrot.lane.b32.xlu0 %v2244, 80
      %v2246 = vpop.permute.xlu0 %2245
      %v2248 = vunpack.c.l.b16 %v2119
      %v2249 = vpack.c.b16 %v2248, %v2248
      %2250 = vrot.lane.b32.xlu0 %v2249, 96
      %v2251 = vpop.permute.xlu0 %2250
      %v2253 = vunpack.c.l.b16 %v2153
      %v2254 = vpack.c.b16 %v2253, %v2253
      %2255 = vrot.lane.b32.xlu0 %v2254, 112
      %v2256 = vpop.permute.xlu0 %2255
      %v2258 = vunpack.c.l.b16 %v2212
      %v2259 = vpack.c.b16 %v2258, %v2258
      %2260 = vrot.lane.b32.xlu0 %v2259, 16
      %v2261 = vpop.permute.xlu0 %2260
      %v2263 = vunpack.c.l.b16 %v2186
      %v2264 = vpack.c.b16 %v2263, %v2263
      %2265 = vrot.lane.b32.xlu0 %v2264, 32
      %v2266 = vpop.permute.xlu0 %2265
      %v2268 = vunpack.c.l.b16 %v2220
      %v2269 = vpack.c.b16 %v2268, %v2268
      %2270 = vrot.lane.b32.xlu0 %v2269, 48
      %v2271 = vpop.permute.xlu0 %2270
      %v2273 = vunpack.c.l.b16 %v2185
      %v2274 = vpack.c.b16 %v2273, %v2273
      %2275 = vrot.lane.b32.xlu0 %v2274, 64
      %v2276 = vpop.permute.xlu0 %2275
      %v2278 = vunpack.c.l.b16 %v2219
      %v2279 = vpack.c.b16 %v2278, %v2278
      %2280 = vrot.lane.b32.xlu0 %v2279, 80
      %v2281 = vpop.permute.xlu0 %2280
      %v2283 = vunpack.c.l.b16 %v2187
      %v2284 = vpack.c.b16 %v2283, %v2283
      %2285 = vrot.lane.b32.xlu0 %v2284, 96
      %v2286 = vpop.permute.xlu0 %2285
      %v2288 = vunpack.c.l.b16 %v2221
      %v2289 = vpack.c.b16 %v2288, %v2288
      %2290 = vrot.lane.b32.xlu0 %v2289, 112
      %v2291 = vpop.permute.xlu0 %2290
      %v2294 = vsel %vm826, %v2110, %v2226
      %v2296 = vsel %vm830, %v2294, %v2231
      %v2298 = vsel %vm833, %v2296, %v2236
      %v2300 = vsel %vm836, %v2298, %v2241
      %v2302 = vsel %vm839, %v2300, %v2246
      %v2304 = vsel %vm842, %v2302, %v2251
      %v2306 = vsel %vm845, %v2304, %v2256
      %v2309 = vsel %vm826, %v2178, %v2261
      %v2311 = vsel %vm830, %v2309, %v2266
      %v2313 = vsel %vm833, %v2311, %v2271
      %v2315 = vsel %vm836, %v2313, %v2276
      %v2317 = vsel %vm839, %v2315, %v2281
      %v2319 = vsel %vm842, %v2317, %v2286
      %v2321 = vsel %vm845, %v2319, %v2291
      %v2322 = vld [vmem:[#allocation2] sm:$0xe]
      %v2323 = vld [vmem:[#allocation2 + $0xc] sm:$0xe]
      %v2324 = vld [vmem:[#allocation2 + $0x18] sm:$0xe]
      %v2325 = vld [vmem:[#allocation2 + $0x24] sm:$0xe]
      %vm2334 = vcmask 1042432
      %vm2335 = vcmask 1046532
      %vm2336 = vmor %vm2334, %vm2335
      %v2337 = vrot.slane %v2322, 5
      %v2338 = vrot.slane %v2337, 4
      %v2339 = vrot.slane %v589, 5
      %v2340 = vsel %vm2336, %v2338, %v2339
      %v2341 = vrot.slane %v2339, 4
      %v2342 = vrot.slane %v1423, 5
      %v2343 = vsel %vm2336, %v2341, %v2342
      %v2344 = vrot.slane %v2323, 5
      %v2345 = vrot.slane %v2344, 4
      %v2346 = vrot.slane %v591, 5
      %v2347 = vsel %vm2336, %v2345, %v2346
      %v2348 = vrot.slane %v2346, 4
      %v2349 = vrot.slane %v1424, 5
      %v2350 = vsel %vm2336, %v2348, %v2349
      %v2351 = vrot.slane %v2324, 5
      %v2352 = vrot.slane %v2351, 4
      %v2353 = vrot.slane %v593, 5
      %v2354 = vsel %vm2336, %v2352, %v2353
      %v2355 = vrot.slane %v2353, 4
      %v2356 = vrot.slane %v1425, 5
      %v2357 = vsel %vm2336, %v2355, %v2356
      %v2358 = vrot.slane %v2325, 5
      %v2359 = vrot.slane %v2358, 4
      %v2360 = vrot.slane %v595, 5
      %v2361 = vsel %vm2336, %v2359, %v2360
      %v2362 = vrot.slane %v2360, 4
      %v2363 = vrot.slane %v1426, 5
      %v2364 = vsel %vm2336, %v2362, %v2363
      %v2367 = vpack.i.b16 %v2347, %v2340
      %v2368 = vshrl.u32 %v2340, 16
      %v2369 = vshrl.u32 %v2347, 16
      %v2370 = vpack.i.b16 %v2369, %v2368
      %v2373 = vpack.i.b16 %v2361, %v2354
      %v2374 = vshrl.u32 %v2354, 16
      %v2375 = vshrl.u32 %v2361, 16
      %v2376 = vpack.i.b16 %v2375, %v2374
      %v2379 = vpack.i.b16 %v2350, %v2343
      %v2380 = vshrl.u32 %v2343, 16
      %v2381 = vshrl.u32 %v2350, 16
      %v2382 = vpack.i.b16 %v2381, %v2380
      %v2385 = vpack.i.b16 %v2364, %v2357
      %v2386 = vshrl.u32 %v2357, 16
      %v2387 = vshrl.u32 %v2364, 16
      %v2388 = vpack.i.b16 %v2387, %v2386
      %v2391 = vunpack.c.l.s4 1983009808
      %v2392 = vunpack.c.0.s8 %v2391
      %v2393 = vlaneseq
      %v2394 = vshrl.u32 %v2393, 7
      %v2395 = vsub.s32 %v2392, %v2394
      %v2396 = vrot.slane %v2367, %v2395
      %v2399 = vunpack.c.l.s4 1983009808
      %v2400 = vunpack.c.0.s8 %v2399
      %v2401 = vlaneseq
      %v2402 = vshrl.u32 %v2401, 7
      %v2403 = vsub.s32 %v2400, %v2402
      %v2404 = vrot.slane %v2373, %v2403
      %v2405 = vcombine.low %v2396, %v2404
      %v2406 = vcombine.high %v2396, %v2404
      %v2408 = vunpack.c.l.s4 1934713408
      %v2409 = vunpack.c.0.s8 %v2408
      %v2410 = vlaneseq
      %v2411 = vshrl.u32 %v2410, 7
      %v2412 = vsub.s32 %v2409, %v2411
      %v2413 = vrot.slane %v2405, %v2412
      %v2415 = vunpack.c.l.s4 1934713408
      %v2416 = vunpack.c.0.s8 %v2415
      %v2417 = vlaneseq
      %v2418 = vshrl.u32 %v2417, 7
      %v2419 = vsub.s32 %v2416, %v2418
      %v2420 = vrot.slane %v2406, %v2419
      %v2421 = vcombine.high %v2413, 0
      %v2422 = vcombine.high %v2420, 0
      %v2425 = vunpack.c.l.s4 1983009808
      %v2426 = vunpack.c.0.s8 %v2425
      %v2427 = vlaneseq
      %v2428 = vshrl.u32 %v2427, 7
      %v2429 = vsub.s32 %v2426, %v2428
      %v2430 = vrot.slane %v2370, %v2429
      %v2433 = vunpack.c.l.s4 1983009808
      %v2434 = vunpack.c.0.s8 %v2433
      %v2435 = vlaneseq
      %v2436 = vshrl.u32 %v2435, 7
      %v2437 = vsub.s32 %v2434, %v2436
      %v2438 = vrot.slane %v2376, %v2437
      %v2439 = vcombine.low %v2430, %v2438
      %v2440 = vcombine.high %v2430, %v2438
      %v2442 = vunpack.c.l.s4 1934713408
      %v2443 = vunpack.c.0.s8 %v2442
      %v2444 = vlaneseq
      %v2445 = vshrl.u32 %v2444, 7
      %v2446 = vsub.s32 %v2443, %v2445
      %v2447 = vrot.slane %v2439, %v2446
      %v2449 = vunpack.c.l.s4 1934713408
      %v2450 = vunpack.c.0.s8 %v2449
      %v2451 = vlaneseq
      %v2452 = vshrl.u32 %v2451, 7
      %v2453 = vsub.s32 %v2450, %v2452
      %v2454 = vrot.slane %v2440, %v2453
      %v2455 = vcombine.high %v2447, 0
      %v2456 = vcombine.high %v2454, 0
      %v2459 = vunpack.c.l.s4 1983009808
      %v2460 = vunpack.c.0.s8 %v2459
      %v2461 = vlaneseq
      %v2462 = vshrl.u32 %v2461, 7
      %v2463 = vsub.s32 %v2460, %v2462
      %v2464 = vrot.slane %v2379, %v2463
      %v2467 = vunpack.c.l.s4 1983009808
      %v2468 = vunpack.c.0.s8 %v2467
      %v2469 = vlaneseq
      %v2470 = vshrl.u32 %v2469, 7
      %v2471 = vsub.s32 %v2468, %v2470
      %v2472 = vrot.slane %v2385, %v2471
      %v2473 = vcombine.low %v2464, %v2472
      %v2474 = vcombine.high %v2464, %v2472
      %v2476 = vunpack.c.l.s4 1934713408
      %v2477 = vunpack.c.0.s8 %v2476
      %v2478 = vlaneseq
      %v2479 = vshrl.u32 %v2478, 7
      %v2480 = vsub.s32 %v2477, %v2479
      %v2481 = vrot.slane %v2473, %v2480
      %v2483 = vunpack.c.l.s4 1934713408
      %v2484 = vunpack.c.0.s8 %v2483
      %v2485 = vlaneseq
      %v2486 = vshrl.u32 %v2485, 7
      %v2487 = vsub.s32 %v2484, %v2486
      %v2488 = vrot.slane %v2474, %v2487
      %v2489 = vcombine.high %v2481, 0
      %v2490 = vcombine.high %v2488, 0
      %v2493 = vunpack.c.l.s4 1983009808
      %v2494 = vunpack.c.0.s8 %v2493
      %v2495 = vlaneseq
      %v2496 = vshrl.u32 %v2495, 7
      %v2497 = vsub.s32 %v2494, %v2496
      %v2498 = vrot.slane %v2382, %v2497
      %v2501 = vunpack.c.l.s4 1983009808
      %v2502 = vunpack.c.0.s8 %v2501
      %v2503 = vlaneseq
      %v2504 = vshrl.u32 %v2503, 7
      %v2505 = vsub.s32 %v2502, %v2504
      %v2506 = vrot.slane %v2388, %v2505
      %v2507 = vcombine.low %v2498, %v2506
      %v2508 = vcombine.high %v2498, %v2506
      %v2510 = vunpack.c.l.s4 1934713408
      %v2511 = vunpack.c.0.s8 %v2510
      %v2512 = vlaneseq
      %v2513 = vshrl.u32 %v2512, 7
      %v2514 = vsub.s32 %v2511, %v2513
      %v2515 = vrot.slane %v2507, %v2514
      %v2517 = vunpack.c.l.s4 1934713408
      %v2518 = vunpack.c.0.s8 %v2517
      %v2519 = vlaneseq
      %v2520 = vshrl.u32 %v2519, 7
      %v2521 = vsub.s32 %v2518, %v2520
      %v2522 = vrot.slane %v2508, %v2521
      %v2523 = vcombine.high %v2515, 0
      %v2524 = vcombine.high %v2522, 0
      %v2526 = vunpack.c.l.b16 %v2447
      %v2527 = vpack.c.b16 %v2526, %v2526
      %2528 = vrot.lane.b32.xlu0 %v2527, 16
      %v2529 = vpop.permute.xlu0 %2528
      %v2531 = vunpack.c.l.b16 %v2421
      %v2532 = vpack.c.b16 %v2531, %v2531
      %2533 = vrot.lane.b32.xlu0 %v2532, 32
      %v2534 = vpop.permute.xlu0 %2533
      %v2536 = vunpack.c.l.b16 %v2455
      %v2537 = vpack.c.b16 %v2536, %v2536
      %2538 = vrot.lane.b32.xlu0 %v2537, 48
      %v2539 = vpop.permute.xlu0 %2538
      %v2541 = vunpack.c.l.b16 %v2420
      %v2542 = vpack.c.b16 %v2541, %v2541
      %2543 = vrot.lane.b32.xlu0 %v2542, 64
      %v2544 = vpop.permute.xlu0 %2543
      %v2546 = vunpack.c.l.b16 %v2454
      %v2547 = vpack.c.b16 %v2546, %v2546
      %2548 = vrot.lane.b32.xlu0 %v2547, 80
      %v2549 = vpop.permute.xlu0 %2548
      %v2551 = vunpack.c.l.b16 %v2422
      %v2552 = vpack.c.b16 %v2551, %v2551
      %2553 = vrot.lane.b32.xlu0 %v2552, 96
      %v2554 = vpop.permute.xlu0 %2553
      %v2556 = vunpack.c.l.b16 %v2456
      %v2557 = vpack.c.b16 %v2556, %v2556
      %2558 = vrot.lane.b32.xlu0 %v2557, 112
      %v2559 = vpop.permute.xlu0 %2558
      %v2561 = vunpack.c.l.b16 %v2515
      %v2562 = vpack.c.b16 %v2561, %v2561
      %2563 = vrot.lane.b32.xlu0 %v2562, 16
      %v2564 = vpop.permute.xlu0 %2563
      %v2566 = vunpack.c.l.b16 %v2489
      %v2567 = vpack.c.b16 %v2566, %v2566
      %2568 = vrot.lane.b32.xlu0 %v2567, 32
      %v2569 = vpop.permute.xlu0 %2568
      %v2571 = vunpack.c.l.b16 %v2523
      %v2572 = vpack.c.b16 %v2571, %v2571
      %2573 = vrot.lane.b32.xlu0 %v2572, 48
      %v2574 = vpop.permute.xlu0 %2573
      %v2576 = vunpack.c.l.b16 %v2488
      %v2577 = vpack.c.b16 %v2576, %v2576
      %2578 = vrot.lane.b32.xlu0 %v2577, 64
      %v2579 = vpop.permute.xlu0 %2578
      %v2581 = vunpack.c.l.b16 %v2522
      %v2582 = vpack.c.b16 %v2581, %v2581
      %2583 = vrot.lane.b32.xlu0 %v2582, 80
      %v2584 = vpop.permute.xlu0 %2583
      %v2586 = vunpack.c.l.b16 %v2490
      %v2587 = vpack.c.b16 %v2586, %v2586
      %2588 = vrot.lane.b32.xlu0 %v2587, 96
      %v2589 = vpop.permute.xlu0 %2588
      %v2591 = vunpack.c.l.b16 %v2524
      %v2592 = vpack.c.b16 %v2591, %v2591
      %2593 = vrot.lane.b32.xlu0 %v2592, 112
      %v2594 = vpop.permute.xlu0 %2593
      %v2597 = vsel %vm826, %v2413, %v2529
      %v2599 = vsel %vm830, %v2597, %v2534
      %v2601 = vsel %vm833, %v2599, %v2539
      %v2603 = vsel %vm836, %v2601, %v2544
      %v2605 = vsel %vm839, %v2603, %v2549
      %v2607 = vsel %vm842, %v2605, %v2554
      %v2609 = vsel %vm845, %v2607, %v2559
      %v2612 = vsel %vm826, %v2481, %v2564
      %v2614 = vsel %vm830, %v2612, %v2569
      %v2616 = vsel %vm833, %v2614, %v2574
      %v2618 = vsel %vm836, %v2616, %v2579
      %v2620 = vsel %vm839, %v2618, %v2584
      %v2622 = vsel %vm842, %v2620, %v2589
      %v2624 = vsel %vm845, %v2622, %v2594
      %2625 = vrot.lane.b32.xlu0 %v2340, 127
      %v2626 = vpop.permute.xlu0 %2625
      %2627 = vrot.lane.b32.xlu0 %v2343, 127
      %v2628 = vpop.permute.xlu0 %2627
      %2629 = vrot.lane.b32.xlu0 %v2347, 127
      %v2630 = vpop.permute.xlu0 %2629
      %2631 = vrot.lane.b32.xlu0 %v2350, 127
      %v2632 = vpop.permute.xlu0 %2631
      %2633 = vrot.lane.b32.xlu0 %v2354, 127
      %v2634 = vpop.permute.xlu0 %2633
      %2635 = vrot.lane.b32.xlu0 %v2357, 127
      %v2636 = vpop.permute.xlu0 %2635
      %2637 = vrot.lane.b32.xlu0 %v2361, 127
      %v2638 = vpop.permute.xlu0 %2637
      %2639 = vrot.lane.b32.xlu0 %v2364, 127
      %v2640 = vpop.permute.xlu0 %2639
      %v2643 = vpack.i.b16 %v2630, %v2626
      %v2644 = vshrl.u32 %v2626, 16
      %v2645 = vshrl.u32 %v2630, 16
      %v2646 = vpack.i.b16 %v2645, %v2644
      %v2649 = vpack.i.b16 %v2638, %v2634
      %v2650 = vshrl.u32 %v2634, 16
      %v2651 = vshrl.u32 %v2638, 16
      %v2652 = vpack.i.b16 %v2651, %v2650
      %v2655 = vpack.i.b16 %v2632, %v2628
      %v2656 = vshrl.u32 %v2628, 16
      %v2657 = vshrl.u32 %v2632, 16
      %v2658 = vpack.i.b16 %v2657, %v2656
      %v2661 = vpack.i.b16 %v2640, %v2636
      %v2662 = vshrl.u32 %v2636, 16
      %v2663 = vshrl.u32 %v2640, 16
      %v2664 = vpack.i.b16 %v2663, %v2662
      %v2667 = vunpack.c.l.s4 1983009808
      %v2668 = vunpack.c.0.s8 %v2667
      %v2669 = vlaneseq
      %v2670 = vshrl.u32 %v2669, 7
      %v2671 = vsub.s32 %v2668, %v2670
      %v2672 = vrot.slane %v2643, %v2671
      %v2675 = vunpack.c.l.s4 1983009808
      %v2676 = vunpack.c.0.s8 %v2675
      %v2677 = vlaneseq
      %v2678 = vshrl.u32 %v2677, 7
      %v2679 = vsub.s32 %v2676, %v2678
      %v2680 = vrot.slane %v2649, %v2679
      %v2681 = vcombine.low %v2672, %v2680
      %v2682 = vcombine.high %v2672, %v2680
      %v2684 = vunpack.c.l.s4 1934713408
      %v2685 = vunpack.c.0.s8 %v2684
      %v2686 = vlaneseq
      %v2687 = vshrl.u32 %v2686, 7
      %v2688 = vsub.s32 %v2685, %v2687
      %v2689 = vrot.slane %v2681, %v2688
      %v2691 = vunpack.c.l.s4 1934713408
      %v2692 = vunpack.c.0.s8 %v2691
      %v2693 = vlaneseq
      %v2694 = vshrl.u32 %v2693, 7
      %v2695 = vsub.s32 %v2692, %v2694
      %v2696 = vrot.slane %v2682, %v2695
      %v2697 = vcombine.high %v2689, 0
      %v2698 = vcombine.high %v2696, 0
      %v2701 = vunpack.c.l.s4 1983009808
      %v2702 = vunpack.c.0.s8 %v2701
      %v2703 = vlaneseq
      %v2704 = vshrl.u32 %v2703, 7
      %v2705 = vsub.s32 %v2702, %v2704
      %v2706 = vrot.slane %v2646, %v2705
      %v2709 = vunpack.c.l.s4 1983009808
      %v2710 = vunpack.c.0.s8 %v2709
      %v2711 = vlaneseq
      %v2712 = vshrl.u32 %v2711, 7
      %v2713 = vsub.s32 %v2710, %v2712
      %v2714 = vrot.slane %v2652, %v2713
      %v2715 = vcombine.low %v2706, %v2714
      %v2716 = vcombine.high %v2706, %v2714
      %v2718 = vunpack.c.l.s4 1934713408
      %v2719 = vunpack.c.0.s8 %v2718
      %v2720 = vlaneseq
      %v2721 = vshrl.u32 %v2720, 7
      %v2722 = vsub.s32 %v2719, %v2721
      %v2723 = vrot.slane %v2715, %v2722
      %v2725 = vunpack.c.l.s4 1934713408
      %v2726 = vunpack.c.0.s8 %v2725
      %v2727 = vlaneseq
      %v2728 = vshrl.u32 %v2727, 7
      %v2729 = vsub.s32 %v2726, %v2728
      %v2730 = vrot.slane %v2716, %v2729
      %v2731 = vcombine.high %v2723, 0
      %v2732 = vcombine.high %v2730, 0
      %v2735 = vunpack.c.l.s4 1983009808
      %v2736 = vunpack.c.0.s8 %v2735
      %v2737 = vlaneseq
      %v2738 = vshrl.u32 %v2737, 7
      %v2739 = vsub.s32 %v2736, %v2738
      %v2740 = vrot.slane %v2655, %v2739
      %v2743 = vunpack.c.l.s4 1983009808
      %v2744 = vunpack.c.0.s8 %v2743
      %v2745 = vlaneseq
      %v2746 = vshrl.u32 %v2745, 7
      %v2747 = vsub.s32 %v2744, %v2746
      %v2748 = vrot.slane %v2661, %v2747
      %v2749 = vcombine.low %v2740, %v2748
      %v2750 = vcombine.high %v2740, %v2748
      %v2752 = vunpack.c.l.s4 1934713408
      %v2753 = vunpack.c.0.s8 %v2752
      %v2754 = vlaneseq
      %v2755 = vshrl.u32 %v2754, 7
      %v2756 = vsub.s32 %v2753, %v2755
      %v2757 = vrot.slane %v2749, %v2756
      %v2759 = vunpack.c.l.s4 1934713408
      %v2760 = vunpack.c.0.s8 %v2759
      %v2761 = vlaneseq
      %v2762 = vshrl.u32 %v2761, 7
      %v2763 = vsub.s32 %v2760, %v2762
      %v2764 = vrot.slane %v2750, %v2763
      %v2765 = vcombine.high %v2757, 0
      %v2766 = vcombine.high %v2764, 0
      %v2769 = vunpack.c.l.s4 1983009808
      %v2770 = vunpack.c.0.s8 %v2769
      %v2771 = vlaneseq
      %v2772 = vshrl.u32 %v2771, 7
      %v2773 = vsub.s32 %v2770, %v2772
      %v2774 = vrot.slane %v2658, %v2773
      %v2777 = vunpack.c.l.s4 1983009808
      %v2778 = vunpack.c.0.s8 %v2777
      %v2779 = vlaneseq
      %v2780 = vshrl.u32 %v2779, 7
      %v2781 = vsub.s32 %v2778, %v2780
      %v2782 = vrot.slane %v2664, %v2781
      %v2783 = vcombine.low %v2774, %v2782
      %v2784 = vcombine.high %v2774, %v2782
      %v2786 = vunpack.c.l.s4 1934713408
      %v2787 = vunpack.c.0.s8 %v2786
      %v2788 = vlaneseq
      %v2789 = vshrl.u32 %v2788, 7
      %v2790 = vsub.s32 %v2787, %v2789
      %v2791 = vrot.slane %v2783, %v2790
      %v2793 = vunpack.c.l.s4 1934713408
      %v2794 = vunpack.c.0.s8 %v2793
      %v2795 = vlaneseq
      %v2796 = vshrl.u32 %v2795, 7
      %v2797 = vsub.s32 %v2794, %v2796
      %v2798 = vrot.slane %v2784, %v2797
      %v2799 = vcombine.high %v2791, 0
      %v2800 = vcombine.high %v2798, 0
      %v2802 = vunpack.c.l.b16 %v2723
      %v2803 = vpack.c.b16 %v2802, %v2802
      %2804 = vrot.lane.b32.xlu0 %v2803, 16
      %v2805 = vpop.permute.xlu0 %2804
      %v2807 = vunpack.c.l.b16 %v2697
      %v2808 = vpack.c.b16 %v2807, %v2807
      %2809 = vrot.lane.b32.xlu0 %v2808, 32
      %v2810 = vpop.permute.xlu0 %2809
      %v2812 = vunpack.c.l.b16 %v2731
      %v2813 = vpack.c.b16 %v2812, %v2812
      %2814 = vrot.lane.b32.xlu0 %v2813, 48
      %v2815 = vpop.permute.xlu0 %2814
      %v2817 = vunpack.c.l.b16 %v2696
      %v2818 = vpack.c.b16 %v2817, %v2817
      %2819 = vrot.lane.b32.xlu0 %v2818, 64
      %v2820 = vpop.permute.xlu0 %2819
      %v2822 = vunpack.c.l.b16 %v2730
      %v2823 = vpack.c.b16 %v2822, %v2822
      %2824 = vrot.lane.b32.xlu0 %v2823, 80
      %v2825 = vpop.permute.xlu0 %2824
      %v2827 = vunpack.c.l.b16 %v2698
      %v2828 = vpack.c.b16 %v2827, %v2827
      %2829 = vrot.lane.b32.xlu0 %v2828, 96
      %v2830 = vpop.permute.xlu0 %2829
      %v2832 = vunpack.c.l.b16 %v2732
      %v2833 = vpack.c.b16 %v2832, %v2832
      %2834 = vrot.lane.b32.xlu0 %v2833, 112
      %v2835 = vpop.permute.xlu0 %2834
      %v2837 = vunpack.c.l.b16 %v2791
      %v2838 = vpack.c.b16 %v2837, %v2837
      %2839 = vrot.lane.b32.xlu0 %v2838, 16
      %v2840 = vpop.permute.xlu0 %2839
      %v2842 = vunpack.c.l.b16 %v2765
      %v2843 = vpack.c.b16 %v2842, %v2842
      %2844 = vrot.lane.b32.xlu0 %v2843, 32
      %v2845 = vpop.permute.xlu0 %2844
      %v2847 = vunpack.c.l.b16 %v2799
      %v2848 = vpack.c.b16 %v2847, %v2847
      %2849 = vrot.lane.b32.xlu0 %v2848, 48
      %v2850 = vpop.permute.xlu0 %2849
      %v2852 = vunpack.c.l.b16 %v2764
      %v2853 = vpack.c.b16 %v2852, %v2852
      %2854 = vrot.lane.b32.xlu0 %v2853, 64
      %v2855 = vpop.permute.xlu0 %2854
      %v2857 = vunpack.c.l.b16 %v2798
      %v2858 = vpack.c.b16 %v2857, %v2857
      %2859 = vrot.lane.b32.xlu0 %v2858, 80
      %v2860 = vpop.permute.xlu0 %2859
      %v2862 = vunpack.c.l.b16 %v2766
      %v2863 = vpack.c.b16 %v2862, %v2862
      %2864 = vrot.lane.b32.xlu0 %v2863, 96
      %v2865 = vpop.permute.xlu0 %2864
      %v2867 = vunpack.c.l.b16 %v2800
      %v2868 = vpack.c.b16 %v2867, %v2867
      %2869 = vrot.lane.b32.xlu0 %v2868, 112
      %v2870 = vpop.permute.xlu0 %2869
      %v2873 = vsel %vm826, %v2689, %v2805
      %v2875 = vsel %vm830, %v2873, %v2810
      %v2877 = vsel %vm833, %v2875, %v2815
      %v2879 = vsel %vm836, %v2877, %v2820
      %v2881 = vsel %vm839, %v2879, %v2825
      %v2883 = vsel %vm842, %v2881, %v2830
      %v2885 = vsel %vm845, %v2883, %v2835
      %v2888 = vsel %vm826, %v2757, %v2840
      %v2890 = vsel %vm830, %v2888, %v2845
      %v2892 = vsel %vm833, %v2890, %v2850
      %v2894 = vsel %vm836, %v2892, %v2855
      %v2896 = vsel %vm839, %v2894, %v2860
      %v2898 = vsel %vm842, %v2896, %v2865
      %v2900 = vsel %vm845, %v2898, %v2870
      %2901 = vrot.lane.b32.xlu0 %v2340, 126
      %v2902 = vpop.permute.xlu0 %2901
      %2903 = vrot.lane.b32.xlu0 %v2343, 126
      %v2904 = vpop.permute.xlu0 %2903
      %2905 = vrot.lane.b32.xlu0 %v2347, 126
      %v2906 = vpop.permute.xlu0 %2905
      %2907 = vrot.lane.b32.xlu0 %v2350, 126
      %v2908 = vpop.permute.xlu0 %2907
      %2909 = vrot.lane.b32.xlu0 %v2354, 126
      %v2910 = vpop.permute.xlu0 %2909
      %2911 = vrot.lane.b32.xlu0 %v2357, 126
      %v2912 = vpop.permute.xlu0 %2911
      %2913 = vrot.lane.b32.xlu0 %v2361, 126
      %v2914 = vpop.permute.xlu0 %2913
      %2915 = vrot.lane.b32.xlu0 %v2364, 126
      %v2916 = vpop.permute.xlu0 %2915
      %v2919 = vpack.i.b16 %v2906, %v2902
      %v2920 = vshrl.u32 %v2902, 16
      %v2921 = vshrl.u32 %v2906, 16
      %v2922 = vpack.i.b16 %v2921, %v2920
      %v2925 = vpack.i.b16 %v2914, %v2910
      %v2926 = vshrl.u32 %v2910, 16
      %v2927 = vshrl.u32 %v2914, 16
      %v2928 = vpack.i.b16 %v2927, %v2926
      %v2931 = vpack.i.b16 %v2908, %v2904
      %v2932 = vshrl.u32 %v2904, 16
      %v2933 = vshrl.u32 %v2908, 16
      %v2934 = vpack.i.b16 %v2933, %v2932
      %v2937 = vpack.i.b16 %v2916, %v2912
      %v2938 = vshrl.u32 %v2912, 16
      %v2939 = vshrl.u32 %v2916, 16
      %v2940 = vpack.i.b16 %v2939, %v2938
      %v2943 = vunpack.c.l.s4 1983009808
      %v2944 = vunpack.c.0.s8 %v2943
      %v2945 = vlaneseq
      %v2946 = vshrl.u32 %v2945, 7
      %v2947 = vsub.s32 %v2944, %v2946
      %v2948 = vrot.slane %v2919, %v2947
      %v2951 = vunpack.c.l.s4 1983009808
      %v2952 = vunpack.c.0.s8 %v2951
      %v2953 = vlaneseq
      %v2954 = vshrl.u32 %v2953, 7
      %v2955 = vsub.s32 %v2952, %v2954
      %v2956 = vrot.slane %v2925, %v2955
      %v2957 = vcombine.low %v2948, %v2956
      %v2958 = vcombine.high %v2948, %v2956
      %v2960 = vunpack.c.l.s4 1934713408
      %v2961 = vunpack.c.0.s8 %v2960
      %v2962 = vlaneseq
      %v2963 = vshrl.u32 %v2962, 7
      %v2964 = vsub.s32 %v2961, %v2963
      %v2965 = vrot.slane %v2957, %v2964
      %v2967 = vunpack.c.l.s4 1934713408
      %v2968 = vunpack.c.0.s8 %v2967
      %v2969 = vlaneseq
      %v2970 = vshrl.u32 %v2969, 7
      %v2971 = vsub.s32 %v2968, %v2970
      %v2972 = vrot.slane %v2958, %v2971
      %v2973 = vcombine.high %v2965, 0
      %v2974 = vcombine.high %v2972, 0
      %v2977 = vunpack.c.l.s4 1983009808
      %v2978 = vunpack.c.0.s8 %v2977
      %v2979 = vlaneseq
      %v2980 = vshrl.u32 %v2979, 7
      %v2981 = vsub.s32 %v2978, %v2980
      %v2982 = vrot.slane %v2922, %v2981
      %v2985 = vunpack.c.l.s4 1983009808
      %v2986 = vunpack.c.0.s8 %v2985
      %v2987 = vlaneseq
      %v2988 = vshrl.u32 %v2987, 7
      %v2989 = vsub.s32 %v2986, %v2988
      %v2990 = vrot.slane %v2928, %v2989
      %v2991 = vcombine.low %v2982, %v2990
      %v2992 = vcombine.high %v2982, %v2990
      %v2994 = vunpack.c.l.s4 1934713408
      %v2995 = vunpack.c.0.s8 %v2994
      %v2996 = vlaneseq
      %v2997 = vshrl.u32 %v2996, 7
      %v2998 = vsub.s32 %v2995, %v2997
      %v2999 = vrot.slane %v2991, %v2998
      %v3001 = vunpack.c.l.s4 1934713408
      %v3002 = vunpack.c.0.s8 %v3001
      %v3003 = vlaneseq
      %v3004 = vshrl.u32 %v3003, 7
      %v3005 = vsub.s32 %v3002, %v3004
      %v3006 = vrot.slane %v2992, %v3005
      %v3007 = vcombine.high %v2999, 0
      %v3008 = vcombine.high %v3006, 0
      %v3011 = vunpack.c.l.s4 1983009808
      %v3012 = vunpack.c.0.s8 %v3011
      %v3013 = vlaneseq
      %v3014 = vshrl.u32 %v3013, 7
      %v3015 = vsub.s32 %v3012, %v3014
      %v3016 = vrot.slane %v2931, %v3015
      %v3019 = vunpack.c.l.s4 1983009808
      %v3020 = vunpack.c.0.s8 %v3019
      %v3021 = vlaneseq
      %v3022 = vshrl.u32 %v3021, 7
      %v3023 = vsub.s32 %v3020, %v3022
      %v3024 = vrot.slane %v2937, %v3023
      %v3025 = vcombine.low %v3016, %v3024
      %v3026 = vcombine.high %v3016, %v3024
      %v3028 = vunpack.c.l.s4 1934713408
      %v3029 = vunpack.c.0.s8 %v3028
      %v3030 = vlaneseq
      %v3031 = vshrl.u32 %v3030, 7
      %v3032 = vsub.s32 %v3029, %v3031
      %v3033 = vrot.slane %v3025, %v3032
      %v3035 = vunpack.c.l.s4 1934713408
      %v3036 = vunpack.c.0.s8 %v3035
      %v3037 = vlaneseq
      %v3038 = vshrl.u32 %v3037, 7
      %v3039 = vsub.s32 %v3036, %v3038
      %v3040 = vrot.slane %v3026, %v3039
      %v3041 = vcombine.high %v3033, 0
      %v3042 = vcombine.high %v3040, 0
      %v3045 = vunpack.c.l.s4 1983009808
      %v3046 = vunpack.c.0.s8 %v3045
      %v3047 = vlaneseq
      %v3048 = vshrl.u32 %v3047, 7
      %v3049 = vsub.s32 %v3046, %v3048
      %v3050 = vrot.slane %v2934, %v3049
      %v3053 = vunpack.c.l.s4 1983009808
      %v3054 = vunpack.c.0.s8 %v3053
      %v3055 = vlaneseq
      %v3056 = vshrl.u32 %v3055, 7
      %v3057 = vsub.s32 %v3054, %v3056
      %v3058 = vrot.slane %v2940, %v3057
      %v3059 = vcombine.low %v3050, %v3058
      %v3060 = vcombine.high %v3050, %v3058
      %v3062 = vunpack.c.l.s4 1934713408
      %v3063 = vunpack.c.0.s8 %v3062
      %v3064 = vlaneseq
      %v3065 = vshrl.u32 %v3064, 7
      %v3066 = vsub.s32 %v3063, %v3065
      %v3067 = vrot.slane %v3059, %v3066
      %v3069 = vunpack.c.l.s4 1934713408
      %v3070 = vunpack.c.0.s8 %v3069
      %v3071 = vlaneseq
      %v3072 = vshrl.u32 %v3071, 7
      %v3073 = vsub.s32 %v3070, %v3072
      %v3074 = vrot.slane %v3060, %v3073
      %v3075 = vcombine.high %v3067, 0
      %v3076 = vcombine.high %v3074, 0
      %v3078 = vunpack.c.l.b16 %v2999
      %v3079 = vpack.c.b16 %v3078, %v3078
      %3080 = vrot.lane.b32.xlu0 %v3079, 16
      %v3081 = vpop.permute.xlu0 %3080
      %v3083 = vunpack.c.l.b16 %v2973
      %v3084 = vpack.c.b16 %v3083, %v3083
      %3085 = vrot.lane.b32.xlu0 %v3084, 32
      %v3086 = vpop.permute.xlu0 %3085
      %v3088 = vunpack.c.l.b16 %v3007
      %v3089 = vpack.c.b16 %v3088, %v3088
      %3090 = vrot.lane.b32.xlu0 %v3089, 48
      %v3091 = vpop.permute.xlu0 %3090
      %v3093 = vunpack.c.l.b16 %v2972
      %v3094 = vpack.c.b16 %v3093, %v3093
      %3095 = vrot.lane.b32.xlu0 %v3094, 64
      %v3096 = vpop.permute.xlu0 %3095
      %v3098 = vunpack.c.l.b16 %v3006
      %v3099 = vpack.c.b16 %v3098, %v3098
      %3100 = vrot.lane.b32.xlu0 %v3099, 80
      %v3101 = vpop.permute.xlu0 %3100
      %v3103 = vunpack.c.l.b16 %v2974
      %v3104 = vpack.c.b16 %v3103, %v3103
      %3105 = vrot.lane.b32.xlu0 %v3104, 96
      %v3106 = vpop.permute.xlu0 %3105
      %v3108 = vunpack.c.l.b16 %v3008
      %v3109 = vpack.c.b16 %v3108, %v3108
      %3110 = vrot.lane.b32.xlu0 %v3109, 112
      %v3111 = vpop.permute.xlu0 %3110
      %v3113 = vunpack.c.l.b16 %v3067
      %v3114 = vpack.c.b16 %v3113, %v3113
      %3115 = vrot.lane.b32.xlu0 %v3114, 16
      %v3116 = vpop.permute.xlu0 %3115
      %v3118 = vunpack.c.l.b16 %v3041
      %v3119 = vpack.c.b16 %v3118, %v3118
      %3120 = vrot.lane.b32.xlu0 %v3119, 32
      %v3121 = vpop.permute.xlu0 %3120
      %v3123 = vunpack.c.l.b16 %v3075
      %v3124 = vpack.c.b16 %v3123, %v3123
      %3125 = vrot.lane.b32.xlu0 %v3124, 48
      %v3126 = vpop.permute.xlu0 %3125
      %v3128 = vunpack.c.l.b16 %v3040
      %v3129 = vpack.c.b16 %v3128, %v3128
      %3130 = vrot.lane.b32.xlu0 %v3129, 64
      %v3131 = vpop.permute.xlu0 %3130
      %v3133 = vunpack.c.l.b16 %v3074
      %v3134 = vpack.c.b16 %v3133, %v3133
      %3135 = vrot.lane.b32.xlu0 %v3134, 80
      %v3136 = vpop.permute.xlu0 %3135
      %v3138 = vunpack.c.l.b16 %v3042
      %v3139 = vpack.c.b16 %v3138, %v3138
      %3140 = vrot.lane.b32.xlu0 %v3139, 96
      %v3141 = vpop.permute.xlu0 %3140
      %v3143 = vunpack.c.l.b16 %v3076
      %v3144 = vpack.c.b16 %v3143, %v3143
      %3145 = vrot.lane.b32.xlu0 %v3144, 112
      %v3146 = vpop.permute.xlu0 %3145
      %v3149 = vsel %vm826, %v2965, %v3081
      %v3151 = vsel %vm830, %v3149, %v3086
      %v3153 = vsel %vm833, %v3151, %v3091
      %v3155 = vsel %vm836, %v3153, %v3096
      %v3157 = vsel %vm839, %v3155, %v3101
      %v3159 = vsel %vm842, %v3157, %v3106
      %v3161 = vsel %vm845, %v3159, %v3111
      %v3164 = vsel %vm826, %v3033, %v3116
      %v3166 = vsel %vm830, %v3164, %v3121
      %v3168 = vsel %vm833, %v3166, %v3126
      %v3170 = vsel %vm836, %v3168, %v3131
      %v3172 = vsel %vm839, %v3170, %v3136
      %v3174 = vsel %vm842, %v3172, %v3141
      %v3176 = vsel %vm845, %v3174, %v3146
      %v3179 = vrot.slane %v1131, 6
      %v3180 = vrot.slane %v1146, 6
      %v3183 = vrot.slane %v1407, 4
      %v3184 = vrot.slane %v1422, 4
      %v3187 = vrot.slane %v1754, 2
      %v3188 = vrot.slane %v1769, 2
      %v3191 = vrot.slane %v2306, 6
      %v3192 = vrot.slane %v2321, 6
      %v3195 = vrot.slane %v2609, 4
      %v3196 = vrot.slane %v2624, 4
      %v3199 = vrot.slane %v2885, 2
      %v3200 = vrot.slane %v2900, 2
      %vm3201 = vcmask 1041408
      %v3203 = vsel %vm3201, %v847, %v3179
      %v3205 = vsel %vm3201, %v862, %v3180
      %vm3206 = vcmask 1043456
      %v3208 = vsel %vm3206, %v3203, %v3183
      %v3210 = vsel %vm3206, %v3205, %v3184
      %vm3211 = vcmask 1045504
      %v3213 = vsel %vm3211, %v3208, %v3187
      %v3216 = vsel %vm3211, %v3210, %v3188
      %v3219 = vsel %vm3201, %v2030, %v3191
      %v3221 = vsel %vm3201, %v2045, %v3192
      %v3223 = vsel %vm3206, %v3219, %v3195
      %v3225 = vsel %vm3206, %v3221, %v3196
      %v3227 = vsel %vm3211, %v3223, %v3199
      %v3230 = vsel %vm3211, %v3225, %v3200
      %v3232 = vld [vmem:[%s1] sm:$0x3]
      %v3233 = vld [vmem:[%s2] sm:$0xf]
      %3235 = vset.pattern.permute.xlu0 0
      %3236 = vperm.xlu0 %3235, %v3233
      %v3237 = vpop.permute.xlu0 %3236
      %vm3239 = vcmask 293888
      %v3241 = vsel %vm3239, %v3232, 0
      %v3243 = vsel %vm3201, %v3161, 0
      %v3245 = vsel %vm3201, %v3176, 0
      %3247 = vmatprep.subr.bf16.mxu0 %v3216
      %3248 = vmatpush1.bf16.msra.mxu0 %v3213
      %3249 = vmatprep.subr.bf16.mxu0 %v3230
      %3250 = vmatpush1.bf16.msra.mxu0 %v3227
      %3251 = vmatprep.subr.bf16.mxu0 %v3245
      %3252 = vmatpush1.bf16.msra.mxu0 %v3243
      %3253 = vmatprep.subr.bf16.mxu0 0
      %3254 = vmatpush1.bf16.msra.mxu0 0
      %3255 = vmatprep.subr.bf16.mxu0 0
      %3256 = vmatpush1.bf16.msra.mxu0 0
      %3257 = vmatprep.subr.bf16.mxu0 0
      %3258 = vmatpush1.bf16.msra.mxu0 0
      %3259 = vmatprep.subr.bf16.mxu0 0
      %3260 = vmatpush1.bf16.msra.mxu0 0
      %3261 = vmatprep.subr.bf16.mxu0 0
      %3262 = vmatpush1.bf16.msra.mxu0 0
      %3263 = vmatprep.subr.bf16.mxu0 0
      %3264 = vmatpush1.bf16.msra.mxu0 0
      %3265 = vmatprep.subr.bf16.mxu0 0
      %3266 = vmatpush1.bf16.msra.mxu0 0
      %3267 = vmatprep.subr.bf16.mxu0 0
      %3268 = vmatpush1.bf16.msra.mxu0 0
      %3269 = vmatprep.subr.bf16.mxu0 0
      %3270 = vmatpush1.bf16.msra.mxu0 0
      %3271 = vmatprep.subr.bf16.mxu0 0
      %3272 = vmatpush1.bf16.msra.mxu0 0
      %3273 = vmatprep.subr.bf16.mxu0 0
      %3274 = vmatpush1.bf16.msra.mxu0 0
      %3275 = vmatprep.subr.bf16.mxu0 0
      %3276 = vmatpush1.bf16.msra.mxu0 0
      %3277 = vmatprep.subr.bf16.mxu0 0
      %3278 = vmatpush1.bf16.msra.mxu0 0
      %3279 = vmatprep.mubr.bf16.mxu0 0
      %3280 = vmatmul.mubr.bf16.gmra.mrb[0].mxu0 %v3241
      %v3281 = vpop.f32.mrb[0].mxu0
      %v3282 = vadd.f32 %v3237, %v3281
      %v3283 = vpop.f32.mrb[0].mxu0
      %v3284 = vadd.f32 %v3237, %v3283
      %v3285 = vpop.f32.mrb[0].mxu0
      %v3286 = vpop.f32.mrb[0].mxu0
      %3287 = vdwg.mxu0
      %v3290 = vcombine.low %v3282, %v3284
      %3292 = vst [vmem:[%s204] sm:$0xff] %v3290
      %v3293 = vsel %vm3206, %v3282, 0.0
      %v3294 = vsel %vm3206, %v3284, 0.0
      %v3295 = vadd.f32 %v3293, %v3294
      %3296 = vadd.xlane.f32.xlu0 %v3295
      %v3297 = vpop.xlane.xlu0 %3296
      %v3298 = vmul.f32 %v3297, 0.00390625
      %v3299 = vsub.f32 %v3282, %v3298
      %v3300 = vsub.f32 %v3284, %v3298
      %v3301 = vmul.f32 %v3299, %v3299
      %v3302 = vmul.f32 %v3300, %v3300
      %v3303 = vsel %vm3206, %v3301, 0.0
      %v3304 = vsel %vm3206, %v3302, 0.0
      %v3305 = vadd.f32 %v3303, %v3304
      %3306 = vadd.xlane.f32.xlu0 %v3305
      %v3307 = vpop.xlane.xlu0 %3306
      %vm3308 = vcmask 7168
      %v3309 = vsel %vm3308, %v3297, %v3307
      %vm3310 = vcmask 11264
      %3311 = vst.msk [vmem:[%s208] sm:$0xf] %vm3310, %v3309
      %p3312 = scmp.lt.s32.totalorder %s16, 1
      %s3313 = scalar_select %p3312, %s16, 1
      %s3314 = smul.addr %s3313, 2
      %s3315 = smul.addr %s3314, 4
      %s3316 = scalar_lea.vmem %s3, %s3315
      %p3317 = scmp.lt.s32.totalorder %s16, 1
      %s3318 = scalar_select %p3317, %s16, 1
      %s3319 = smul.addr %s3318, 4
      %s3320 = scalar_lea.vmem %s4, %s3319
      // Predicated region
      $region33: #{residual_block.3} parent=31 // pred_check
        %p3321 = pneg %p102
      $region34: #{residual_block.3} parent=31 // pred_check_branch
        %3323 = sbr.rel (%p3321) target = $region36
      $region35: #{residual_block.3} parent=31 // pred_region
        _
      $region36: #{residual_block.3} parent=31 // pred_fallthru
        _
      // Predicated region
      $region37: #{residual_block.3} parent=31 // pred_check
        %p3324 = pneg %p128
      $region38: #{residual_block.3} parent=31 // pred_check_branch
        %3326 = sbr.rel (%p3324) target = $region40
      $region39: #{residual_block.3} parent=31 // pred_region
        _
      $region40: #{residual_block.3} parent=31 // pred_fallthru
        _
    $region32: #{residual_block.3} parent=5 // pred_fallthru
      _
    %p3327 = scmp.le.s32.totalorder 2, %s11
    // Predicated region
    $region41: #{residual_block.3} parent=5 // pred_check
      %p3328 = pneg %p3327
    $region42: #{residual_block.3} parent=5 // pred_check_branch
      %3330 = sbr.rel (%p3328) target = $region44
    $region43: #{residual_block.3} parent=5 // pred_region
      %s3331 = ssub.s32 %s11, 2
      // Predicated region
      $region45: #{residual_block.3} parent=43 // pred_check
        %p3332 = pneg %p108
      $region46: #{residual_block.3} parent=43 // pred_check_branch
        %3334 = sbr.rel (%p3332) target = $region48
      $region47: #{residual_block.3} parent=43 // pred_region
        %p3335 = scmp.lt.s32.totalorder %s17, 1
        %s3336 = scalar_select %p3335, %s17, 1
        %s3337 = smul.addr %s3336, 2
        %s3338 = smul.addr %s3337, 4
        %s3339 = scalar_lea.vmem %s3, %s3338
      $region48: #{residual_block.3} parent=43 // pred_fallthru
        _
      // Predicated region
      $region49: #{residual_block.3} parent=43 // pred_check
        %p3340 = pneg %p134
      $region50: #{residual_block.3} parent=43 // pred_check_branch
        %3342 = sbr.rel (%p3340) target = $region52
      $region51: #{residual_block.3} parent=43 // pred_region
        %p3343 = scmp.lt.s32.totalorder %s17, 1
        %s3344 = scalar_select %p3343, %s17, 1
        %s3345 = smul.addr %s3344, 4
        %s3346 = scalar_lea.vmem %s4, %s3345
      $region52: #{residual_block.3} parent=43 // pred_fallthru
        _
    $region44: #{residual_block.3} parent=5 // pred_fallthru
      _
  $region6: #{residual_block.3} parent=0 // loop_footer
    %s15 = sadd.s32 1, %s11
  $region7: #{residual_block.3} parent=0 // loop_footer_branch
    %10 = sbr.rel target = $region3
  $region8: #{residual_block.3} parent=0 // loop_exit
    _

// kernel: residual_block.4
$region0: #{residual_block.4}
  #allocation0 [shape = 'u32[]', space=smem, size = 0x4, offset = 0x4, fixed_abs, tag = 'smem constant byte address 0x4 - core index']
  #allocation1 [shape = 'u32[144,128]{1,0:T(1,128)}', space=vmem, size = 0x12000, scoped, tag = 'internal scratch']
  #allocation2 [shape = 'bf16[4,18,18]{2,1,0:T(8,128)(2,1)}', space=vmem, size = 0x6000, scoped, tag = 'scratch operand']
  %s0 = inlined_call_operand.vmem [shape: f32[2,4,256], index: 0, kind: input, shape index: {}]
  %s1 = inlined_call_operand.vmem [shape: f32[4,1], index: 1, kind: input, shape index: {}]
  %s2 = inlined_call_operand.vmem [shape: f32[4,1], index: 2, kind: input, shape index: {}]
  %s3 = inlined_call_operand.vmem [shape: f32[4,1], index: 3, kind: input, shape index: {}]
  %s4 = inlined_call_operand.vmem [shape: bf16[4,36], index: 4, kind: input, shape index: {}]
  %s5 = inlined_call_operand.vmem [shape: f32[4,1], index: 5, kind: input, shape index: {}]
  %s6 = inlined_call_operand.vmem [shape: f32[2,4,256], index: 6, kind: output, shape index: {0}]
  %s7 = inlined_call_operand.vmem [shape: f32[2,4,2], index: 7, kind: output, shape index: {1}]
  %8 = xla_tuple %s6, %s7
  %s9 = sld [smem:[#allocation0]]
  $region65: #{residual_block.4} parent=0
    _
  %s11 = ssub.s32 1, %s9
  %s12 = scalar_select 0, %s11, %s9
  loop: start=0, step=1, limit=4
  $region2: #{residual_block.4} parent=0 // loop_pre_header
    _
  $region3: #{residual_block.4} parent=0 // loop_header
    %s14 = sphi 0, %s18
    %p15 = scmp.ge.s32.totalorder %s14, 4
    %s24 = sphi 0, %s26
    %s27 = sphi 0, %s24
    %s28 = sphi 0, %s27
    %s44 = sphi 0, %s28
    %s48 = sphi 0, %s48
    %s50 = sphi 0, %s48
    %s51 = sphi 0, %s50
    %s65 = sphi 0, %s51
    %s69 = sphi 0, %s69
    %s71 = sphi 0, %s69
    %s72 = sphi 0, %s71
    %s86 = sphi 0, %s72
    %s90 = sphi 0, %s90
    %s92 = sphi 0, %s90
    %s93 = sphi 0, %s92
    %s107 = sphi 0, %s93
    %s111 = sphi 0, %s111
    %s113 = sphi 0, %s111
    %s114 = sphi 0, %s113
    %s128 = sphi 0, %s114
    %s132 = sphi 0, %s132
    %s134 = sphi 0, %s132
    %s135 = sphi 0, %s134
    %s149 = sphi 0, %s135
    %s155 = sphi 0, %s157
    %s158 = sphi 0, %s155
    %s159 = sphi 0, %s158
    %s175 = sphi 0, %s159
    %s181 = sphi 0, %s183
    %s184 = sphi 0, %s181
    %s185 = sphi 0, %s184
    %s201 = sphi 0, %s185
  $region4: #{residual_block.4} parent=0 // loop_header_branch
    %17 = sbr.rel (%p15) target = $region8
  $region5: #{residual_block.4} parent=0 // loop_body
    %s19 = ssub.s32 %s14, 1
    %s20 = ssub.s32 %s14, 2
    %s21 = sadd.s32 %s14, 1
    %s22 = ssub.s32 %s14, %s21
    %p23 = scmp.eq.s32.totalorder %s22, 0
    %s25 = sadd.s32 %s24, 1
    %s26 = scalar_select %p23, %s24, %s25
    %p29 = pneg %p23
    %p30 = scmp.eq.s32.totalorder %s14, 1
    %p31 = por %p29, %p30
    %p32 = scmp.ne.s32.totalorder %s24, %s27
    %p33 = scmp.eq.s32.totalorder %s14, 0
    %p34 = por %p32, %p33
    %p35 = scmp.ne.s32.totalorder %s24, %s27
    %p36 = scmp.eq.s32.totalorder %s19, 1
    %p37 = por %p35, %p36
    %p38 = scmp.ne.s32.totalorder %s27, %s28
    %p39 = scmp.eq.s32.totalorder %s19, 0
    %p40 = por %p38, %p39
    %p41 = scmp.ne.s32.totalorder %s27, %s28
    %p42 = scmp.eq.s32.totalorder %s20, 1
    %p43 = por %p41, %p42
    %p45 = scmp.ne.s32.totalorder %s28, %s44
    %p46 = scmp.eq.s32.totalorder %s20, 0
    %p47 = por %p45, %p46
    %s49 = sadd.s32 %s48, 1
    %p52 = scmp.eq.s32.totalorder %s14, 1
    %p53 = scmp.ne.s32.totalorder %s48, %s50
    %p54 = scmp.eq.s32.totalorder %s14, 0
    %p55 = por %p53, %p54
    %p56 = scmp.ne.s32.totalorder %s48, %s50
    %p57 = scmp.eq.s32.totalorder %s19, 1
    %p58 = por %p56, %p57
    %p59 = scmp.ne.s32.totalorder %s50, %s51
    %p60 = scmp.eq.s32.totalorder %s19, 0
    %p61 = por %p59, %p60
    %p62 = scmp.ne.s32.totalorder %s50, %s51
    %p63 = scmp.eq.s32.totalorder %s20, 1
    %p64 = por %p62, %p63
    %p66 = scmp.ne.s32.totalorder %s51, %s65
    %p67 = scmp.eq.s32.totalorder %s20, 0
    %p68 = por %p66, %p67
    %s70 = sadd.s32 %s69, 1
    %p73 = scmp.eq.s32.totalorder %s14, 1
    %p74 = scmp.ne.s32.totalorder %s69, %s71
    %p75 = scmp.eq.s32.totalorder %s14, 0
    %p76 = por %p74, %p75
    %p77 = scmp.ne.s32.totalorder %s69, %s71
    %p78 = scmp.eq.s32.totalorder %s19, 1
    %p79 = por %p77, %p78
    %p80 = scmp.ne.s32.totalorder %s71, %s72
    %p81 = scmp.eq.s32.totalorder %s19, 0
    %p82 = por %p80, %p81
    %p83 = scmp.ne.s32.totalorder %s71, %s72
    %p84 = scmp.eq.s32.totalorder %s20, 1
    %p85 = por %p83, %p84
    %p87 = scmp.ne.s32.totalorder %s72, %s86
    %p88 = scmp.eq.s32.totalorder %s20, 0
    %p89 = por %p87, %p88
    %s91 = sadd.s32 %s90, 1
    %p94 = scmp.eq.s32.totalorder %s14, 1
    %p95 = scmp.ne.s32.totalorder %s90, %s92
    %p96 = scmp.eq.s32.totalorder %s14, 0
    %p97 = por %p95, %p96
    %p98 = scmp.ne.s32.totalorder %s90, %s92
    %p99 = scmp.eq.s32.totalorder %s19, 1
    %p100 = por %p98, %p99
    %p101 = scmp.ne.s32.totalorder %s92, %s93
    %p102 = scmp.eq.s32.totalorder %s19, 0
    %p103 = por %p101, %p102
    %p104 = scmp.ne.s32.totalorder %s92, %s93
    %p105 = scmp.eq.s32.totalorder %s20, 1
    %p106 = por %p104, %p105
    %p108 = scmp.ne.s32.totalorder %s93, %s107
    %p109 = scmp.eq.s32.totalorder %s20, 0
    %p110 = por %p108, %p109
    %s112 = sadd.s32 %s111, 1
    %p115 = scmp.eq.s32.totalorder %s14, 1
    %p116 = scmp.ne.s32.totalorder %s111, %s113
    %p117 = scmp.eq.s32.totalorder %s14, 0
    %p118 = por %p116, %p117
    %p119 = scmp.ne.s32.totalorder %s111, %s113
    %p120 = scmp.eq.s32.totalorder %s19, 1
    %p121 = por %p119, %p120
    %p122 = scmp.ne.s32.totalorder %s113, %s114
    %p123 = scmp.eq.s32.totalorder %s19, 0
    %p124 = por %p122, %p123
    %p125 = scmp.ne.s32.totalorder %s113, %s114
    %p126 = scmp.eq.s32.totalorder %s20, 1
    %p127 = por %p125, %p126
    %p129 = scmp.ne.s32.totalorder %s114, %s128
    %p130 = scmp.eq.s32.totalorder %s20, 0
    %p131 = por %p129, %p130
    %s133 = sadd.s32 %s132, 1
    %p136 = scmp.eq.s32.totalorder %s14, 1
    %p137 = scmp.ne.s32.totalorder %s132, %s134
    %p138 = scmp.eq.s32.totalorder %s14, 0
    %p139 = por %p137, %p138
    %p140 = scmp.ne.s32.totalorder %s132, %s134
    %p141 = scmp.eq.s32.totalorder %s19, 1
    %p142 = por %p140, %p141
    %p143 = scmp.ne.s32.totalorder %s134, %s135
    %p144 = scmp.eq.s32.totalorder %s19, 0
    %p145 = por %p143, %p144
    %p146 = scmp.ne.s32.totalorder %s134, %s135
    %p147 = scmp.eq.s32.totalorder %s20, 1
    %p148 = por %p146, %p147
    %p150 = scmp.ne.s32.totalorder %s135, %s149
    %p151 = scmp.eq.s32.totalorder %s20, 0
    %p152 = por %p150, %p151
    %s153 = ssub.s32 %s14, %s21
    %p154 = scmp.eq.s32.totalorder %s153, 0
    %s156 = sadd.s32 %s155, 1
    %s157 = scalar_select %p154, %s155, %s156
    %p160 = pneg %p154
    %p161 = scmp.eq.s32.totalorder %s14, 1
    %p162 = por %p160, %p161
    %p163 = scmp.ne.s32.totalorder %s155, %s158
    %p164 = scmp.eq.s32.totalorder %s14, 0
    %p165 = por %p163, %p164
    %p166 = scmp.ne.s32.totalorder %s155, %s158
    %p167 = scmp.eq.s32.totalorder %s19, 1
    %p168 = por %p166, %p167
    %p169 = scmp.ne.s32.totalorder %s158, %s159
    %p170 = scmp.eq.s32.totalorder %s19, 0
    %p171 = por %p169, %p170
    %p172 = scmp.ne.s32.totalorder %s158, %s159
    %p173 = scmp.eq.s32.totalorder %s20, 1
    %p174 = por %p172, %p173
    %p176 = scmp.ne.s32.totalorder %s159, %s175
    %p177 = scmp.eq.s32.totalorder %s20, 0
    %p178 = por %p176, %p177
    %s179 = ssub.s32 %s14, %s21
    %p180 = scmp.eq.s32.totalorder %s179, 0
    %s182 = sadd.s32 %s181, 1
    %s183 = scalar_select %p180, %s181, %s182
    %p186 = pneg %p180
    %p187 = scmp.eq.s32.totalorder %s14, 1
    %p188 = por %p186, %p187
    %p189 = scmp.ne.s32.totalorder %s181, %s184
    %p190 = scmp.eq.s32.totalorder %s14, 0
    %p191 = por %p189, %p190
    %p192 = scmp.ne.s32.totalorder %s181, %s184
    %p193 = scmp.eq.s32.totalorder %s19, 1
    %p194 = por %p192, %p193
    %p195 = scmp.ne.s32.totalorder %s184, %s185
    %p196 = scmp.eq.s32.totalorder %s19, 0
    %p197 = por %p195, %p196
    %p198 = scmp.ne.s32.totalorder %s184, %s185
    %p199 = scmp.eq.s32.totalorder %s20, 1
    %p200 = por %p198, %p199
    %p202 = scmp.ne.s32.totalorder %s185, %s201
    %p203 = scmp.eq.s32.totalorder %s20, 0
    %p204 = por %p202, %p203
    %p205 = scmp.le.s32.totalorder 1, %s14
    %p206 = scmp.lt.s32.totalorder %s14, 3
    %p207 = pnand %p205, %p206
    %p208 = pneg %p207
    // Predicated region
    $region9: #{residual_block.4} parent=5 // pred_check
      _
    $region10: #{residual_block.4} parent=5 // pred_check_branch
      %210 = sbr.rel (%p207) target = $region12
    $region11: #{residual_block.4} parent=5 // pred_region
      %s211 = ssub.s32 %s14, 1
      // Predicated region
      $region13: #{residual_block.4} parent=11 // pred_check
        %p212 = pneg %p61
      $region14: #{residual_block.4} parent=11 // pred_check_branch
        %214 = sbr.rel (%p212) target = $region16
      $region15: #{residual_block.4} parent=11 // pred_region
        _
      $region16: #{residual_block.4} parent=11 // pred_fallthru
        _
      // Predicated region
      $region17: #{residual_block.4} parent=11 // pred_check
        %p215 = pneg %p82
      $region18: #{residual_block.4} parent=11 // pred_check_branch
        %217 = sbr.rel (%p215) target = $region20
      $region19: #{residual_block.4} parent=11 // pred_region
        _
      $region20: #{residual_block.4} parent=11 // pred_fallthru
        _
      // Predicated region
      $region21: #{residual_block.4} parent=11 // pred_check
        %p218 = pneg %p103
      $region22: #{residual_block.4} parent=11 // pred_check_branch
        %220 = sbr.rel (%p218) target = $region24
      $region23: #{residual_block.4} parent=11 // pred_region
        _
      $region24: #{residual_block.4} parent=11 // pred_fallthru
        _
      // Predicated region
      $region25: #{residual_block.4} parent=11 // pred_check
        %p221 = pneg %p124
      $region26: #{residual_block.4} parent=11 // pred_check_branch
        %223 = sbr.rel (%p221) target = $region28
      $region27: #{residual_block.4} parent=11 // pred_region
        _
      $region28: #{residual_block.4} parent=11 // pred_fallthru
        _
      // Predicated region
      $region29: #{residual_block.4} parent=11 // pred_check
        %p224 = pneg %p145
      $region30: #{residual_block.4} parent=11 // pred_check_branch
        %226 = sbr.rel (%p224) target = $region32
      $region31: #{residual_block.4} parent=11 // pred_region
        _
      $region32: #{residual_block.4} parent=11 // pred_fallthru
        _
    $region12: #{residual_block.4} parent=5 // pred_fallthru
      _
    %p227 = scmp.lt.s32.totalorder %s14, 2
    // Predicated region
    $region33: #{residual_block.4} parent=5 // pred_check
      %p228 = pneg %p227
    $region34: #{residual_block.4} parent=5 // pred_check_branch
      %230 = sbr.rel (%p228) target = $region36
    $region35: #{residual_block.4} parent=5 // pred_region
      // Predicated region
      $region37: #{residual_block.4} parent=35 // pred_check
        %p231 = pneg %p34
      $region38: #{residual_block.4} parent=35 // pred_check_branch
        %233 = sbr.rel (%p231) target = $region40
      $region39: #{residual_block.4} parent=35 // pred_region
        %p234 = scmp.lt.s32.totalorder %s14, 1
        %s235 = scalar_select %p234, %s14, 1
        %s236 = smul.addr %s235, 2
        %s237 = smul.addr %s236, 4
        %s238 = scalar_lea.vmem %s0, %s237
      $region40: #{residual_block.4} parent=35 // pred_fallthru
        _
    $region36: #{residual_block.4} parent=5 // pred_fallthru
      _
    %p239 = scmp.le.s32.totalorder 1, %s14
    %p240 = scmp.lt.s32.totalorder %s14, 3
    %p241 = pnand %p239, %p240
    %p242 = pneg %p241
    // Predicated region
    $region41: #{residual_block.4} parent=5 // pred_check
      _
    $region42: #{residual_block.4} parent=5 // pred_check_branch
      %244 = sbr.rel (%p241) target = $region44
    $region43: #{residual_block.4} parent=5 // pred_region
      %s245 = ssub.s32 %s14, 1
      %p246 = scmp.lt.s32.totalorder %s19, 1
      %s247 = scalar_select %p246, %s19, 1
      %s248 = smul.addr %s247, 2
      %s249 = smul.addr %s248, 4
      %s250 = scalar_lea.vmem %s0, %s249
      %p251 = pneg %p40
      %p252 = pneg %p37
      %p253 = pneg %p61
      %p254 = pneg %p58
      %p255 = pneg %p82
      %p256 = pneg %p79
      %p257 = pneg %p103
      %p258 = pneg %p100
      %p259 = pneg %p124
      %p260 = pneg %p121
      %p261 = pneg %p145
      %p262 = pneg %p142
      %p263 = pneg %p171
      %p264 = pneg %p168
      %p265 = scmp.lt.s32.totalorder %s19, 1
      %s266 = scalar_select %p265, %s19, 1
      %s267 = smul.addr %s266, 2
      %s268 = smul.addr %s267, 4
      %s269 = scalar_lea.vmem %s6, %s268
      %p270 = pneg %p197
      %p271 = pneg %p194
      %p272 = scmp.lt.s32.totalorder %s19, 1
      %s273 = scalar_select %p272, %s19, 1
      %s274 = smul.addr %s273, 4
      %s275 = scalar_lea.vmem %s7, %s274
      %p276 = scmp.lt.s32.totalorder %s19, 1
      %s277 = scalar_select %p276, %s19, 1
      %s278 = smul.addr %s277, 2
      %s279 = smul.addr %s278, 4
      %s280 = scalar_lea.vmem %s0, %s279
      %p281 = scmp.lt.s32.totalorder %s19, 1
      %s282 = scalar_select %p281, %s19, 1
      %s283 = smul.addr %s282, 2
      %s284 = smul.addr %s283, 4
      %s285 = scalar_lea.vmem %s6, %s284
      %p286 = scmp.lt.s32.totalorder %s19, 1
      %s287 = scalar_select %p286, %s19, 1
      %s288 = smul.addr %s287, 4
      %s289 = scalar_lea.vmem %s7, %s288
      %v291 = vld [vmem:[%s280] sm:$0xff]
      %v292 = vld [vmem:[%s1] sm:$0xf]
      %294 = vset.pattern.permute.xlu0 0
      %295 = vperm.xlu0 %294, %v292
      %v296 = vpop.permute.xlu0 %295
      %v298 = vunpack.c.l.s4 839922192
      %v299 = vunpack.c.0.s8 %v298
      %v300 = vlaneseq
      %v301 = vshrl.u32 %v300, 7
      %v302 = vsub.s32 %v299, %v301
      %v303 = vrot.slane %v296, %v302
      %v305 = vmul.f32 %v291, %v303
      %v306 = vld [vmem:[%s2] sm:$0xf]
      %308 = vset.pattern.permute.xlu0 0
      %309 = vperm.xlu0 %308, %v306
      %v310 = vpop.permute.xlu0 %309
      %v312 = vunpack.c.l.s4 839922192
      %v313 = vunpack.c.0.s8 %v312
      %v314 = vlaneseq
      %v315 = vshrl.u32 %v314, 7
      %v316 = vsub.s32 %v313, %v315
      %v317 = vrot.slane %v310, %v316
      %v319 = vadd.f32 %v305, %v317
      %vm320 = vcmp.gt.f32.partialorder %v319, 0.0
      %v321 = vld [vmem:[%s3] sm:$0xf]
      %323 = vset.pattern.permute.xlu0 0
      %324 = vperm.xlu0 %323, %v321
      %v325 = vpop.permute.xlu0 %324
      %v328 = vcombine.high %v319, %v319
      %v330 = vmul.f32 %v325, %v319
      %v331 = vmul.f32 %v325, %v328
      %v334 = vcombine.low %v330, %v331
      %v336 = vsel %vm320, %v319, %v334
      %v338 = vcombine.high %v336, %v336
      %v340 = vpack.c.bf16 %v336, %v336
      %v341 = vpack.c.bf16 %v338, %v338
      %343 = vrot.lane.b32.xlu0 %v340, 112
      %v344 = vpop.permute.xlu0 %343
      %346 = vrot.lane.b32.xlu0 %v340, 96
      %v347 = vpop.permute.xlu0 %346
      %349 = vrot.lane.b32.xlu0 %v340, 80
      %v350 = vpop.permute.xlu0 %349
      %352 = vrot.lane.b32.xlu0 %v340, 64
      %v353 = vpop.permute.xlu0 %352
      %355 = vrot.lane.b32.xlu0 %v340, 48
      %v356 = vpop.permute.xlu0 %355
      %358 = vrot.lane.b32.xlu0 %v340, 32
      %v359 = vpop.permute.xlu0 %358
      %361 = vrot.lane.b32.xlu0 %v340, 16
      %v362 = vpop.permute.xlu0 %361
      %365 = vrot.lane.b32.xlu0 %v341, 112
      %v366 = vpop.permute.xlu0 %365
      %368 = vrot.lane.b32.xlu0 %v341, 96
      %v369 = vpop.permute.xlu0 %368
      %371 = vrot.lane.b32.xlu0 %v341, 80
      %v372 = vpop.permute.xlu0 %371
      %374 = vrot.lane.b32.xlu0 %v341, 64
      %v375 = vpop.permute.xlu0 %374
      %377 = vrot.lane.b32.xlu0 %v341, 48
      %v378 = vpop.permute.xlu0 %377
      %380 = vrot.lane.b32.xlu0 %v341, 32
      %v381 = vpop.permute.xlu0 %380
      %383 = vrot.lane.b32.xlu0 %v341, 16
      %v384 = vpop.permute.xlu0 %383
      %v386 = vcombine.low %v340, %v353
      %v388 = vunpack.c.l.s4 1983009808
      %v389 = vunpack.c.0.s8 %v388
      %v390 = vlaneseq
      %v391 = vshrl.u32 %v390, 7
      %v392 = vsub.s32 %v389, %v391
      %v393 = vrot.slane %v386, %v392
      %v394 = vcombine.low %v347, %v359
      %v396 = vunpack.c.l.s4 1983009808
      %v397 = vunpack.c.0.s8 %v396
      %v398 = vlaneseq
      %v399 = vshrl.u32 %v398, 7
      %v400 = vsub.s32 %v397, %v399
      %v401 = vrot.slane %v394, %v400
      %v402 = vcombine.low %v341, %v375
      %v404 = vunpack.c.l.s4 1983009808
      %v405 = vunpack.c.0.s8 %v404
      %v406 = vlaneseq
      %v407 = vshrl.u32 %v406, 7
      %v408 = vsub.s32 %v405, %v407
      %v409 = vrot.slane %v402, %v408
      %v410 = vcombine.low %v369, %v381
      %v412 = vunpack.c.l.s4 1983009808
      %v413 = vunpack.c.0.s8 %v412
      %v414 = vlaneseq
      %v415 = vshrl.u32 %v414, 7
      %v416 = vsub.s32 %v413, %v415
      %v417 = vrot.slane %v410, %v416
      %v418 = vcombine.low %v393, %v401
      %v420 = vunpack.c.l.s4 1934713408
      %v421 = vunpack.c.0.s8 %v420
      %v422 = vlaneseq
      %v423 = vshrl.u32 %v422, 7
      %v424 = vsub.s32 %v421, %v423
      %v425 = vrot.slane %v418, %v424
      %v426 = vcombine.low %v409, %v417
      %v428 = vunpack.c.l.s4 1934713408
      %v429 = vunpack.c.0.s8 %v428
      %v430 = vlaneseq
      %v431 = vshrl.u32 %v430, 7
      %v432 = vsub.s32 %v429, %v431
      %v433 = vrot.slane %v426, %v432
      %v434 = vcombine.low %v425, %v433
      %v435 = vcombine.high %v425, %v433
      %v436 = vcombine.low %v344, %v356
      %v438 = vunpack.c.l.s4 1983009808
      %v439 = vunpack.c.0.s8 %v438
      %v440 = vlaneseq
      %v441 = vshrl.u32 %v440, 7
      %v442 = vsub.s32 %v439, %v441
      %v443 = vrot.slane %v436, %v442
      %v444 = vcombine.low %v350, %v362
      %v446 = vunpack.c.l.s4 1983009808
      %v447 = vunpack.c.0.s8 %v446
      %v448 = vlaneseq
      %v449 = vshrl.u32 %v448, 7
      %v450 = vsub.s32 %v447, %v449
      %v451 = vrot.slane %v444, %v450
      %v452 = vcombine.low %v366, %v378
      %v454 = vunpack.c.l.s4 1983009808
      %v455 = vunpack.c.0.s8 %v454
      %v456 = vlaneseq
      %v457 = vshrl.u32 %v456, 7
      %v458 = vsub.s32 %v455, %v457
      %v459 = vrot.slane %v452, %v458
      %v460 = vcombine.low %v372, %v384
      %v462 = vunpack.c.l.s4 1983009808
      %v463 = vunpack.c.0.s8 %v462
      %v464 = vlaneseq
      %v465 = vshrl.u32 %v464, 7
      %v466 = vsub.s32 %v463, %v465
      %v467 = vrot.slane %v460, %v466
      %v468 = vcombine.low %v443, %v451
      %v470 = vunpack.c.l.s4 1934713408
      %v471 = vunpack.c.0.s8 %v470
      %v472 = vlaneseq
      %v473 = vshrl.u32 %v472, 7
      %v474 = vsub.s32 %v471, %v473
      %v475 = vrot.slane %v468, %v474
      %v476 = vcombine.low %v459, %v467
      %v478 = vunpack.c.l.s4 1934713408
      %v479 = vunpack.c.0.s8 %v478
      %v480 = vlaneseq
      %v481 = vshrl.u32 %v480, 7
      %v482 = vsub.s32 %v479, %v481
      %v483 = vrot.slane %v476, %v482
      %v484 = vcombine.low %v475, %v483
      %v485 = vcombine.high %v475, %v483
      %v488 = vpack.i.b16 %v484, %v434
      %v489 = vshrl.u32 %v434, 16
      %v490 = vshrl.u32 %v484, 16
      %v491 = vpack.i.b16 %v490, %v489
      %v494 = vpack.i.b16 %v485, %v435
      %v495 = vshrl.u32 %v435, 16
      %v496 = vshrl.u32 %v485, 16
      %v497 = vpack.i.b16 %v496, %v495
      %v498 = vunpack.c.l.b16 %v488
      %v499 = vunpack.c.h.b16 %v488
      %v500 = vunpack.c.l.b16 %v491
      %v501 = vunpack.c.h.b16 %v491
      %v502 = vunpack.c.l.b16 %v494
      %v503 = vunpack.c.h.b16 %v494
      %v504 = vunpack.c.l.b16 %v497
      %v505 = vunpack.c.h.b16 %v497
      %v506 = vpack.c.b16 %v498, %v498
      %v507 = vpack.c.b16 %v499, %v499
      %v508 = vpack.c.b16 %v500, %v500
      %v509 = vpack.c.b16 %v501, %v501
      %v510 = vpack.c.b16 %v502, %v502
      %v511 = vpack.c.b16 %v503, %v503
      %v512 = vpack.c.b16 %v504, %v504
      %v513 = vpack.c.b16 %v505, %v505
      %vm514 = vsmask.f32 256
      %vm515 = vsmask.f32 4368
      %vm516 = vmor %vm514, %vm515
      %v518 = vshrl.u32 %v506, 16
      %v520 = vrot.slane %v518, 7
      %v521 = vshll.u32 %v506, 16
      %v523 = vor.u32 %v520, %v521
      %v524 = vrot.slane %v520, 4
      %v526 = vshrl.u32 %v507, 16
      %v528 = vrot.slane %v526, 7
      %v529 = vshll.u32 %v507, 16
      %v531 = vor.u32 %v528, %v529
      %v532 = vsel %vm516, %v524, %v531
      %v533 = vrot.slane %v528, 4
      %v535 = vshrl.u32 %v508, 16
      %v537 = vrot.slane %v535, 7
      %v538 = vshll.u32 %v508, 16
      %v540 = vor.u32 %v537, %v538
      %v541 = vrot.slane %v537, 4
      %v543 = vshrl.u32 %v509, 16
      %v545 = vrot.slane %v543, 7
      %v546 = vshll.u32 %v509, 16
      %v548 = vor.u32 %v545, %v546
      %v549 = vsel %vm516, %v541, %v548
      %v550 = vrot.slane %v545, 4
      %v552 = vshrl.u32 %v510, 16
      %v554 = vrot.slane %v552, 7
      %v555 = vshll.u32 %v510, 16
      %v557 = vor.u32 %v554, %v555
      %v558 = vrot.slane %v554, 4
      %v560 = vshrl.u32 %v511, 16
      %v562 = vrot.slane %v560, 7
      %v563 = vshll.u32 %v511, 16
      %v565 = vor.u32 %v562, %v563
      %v566 = vsel %vm516, %v558, %v565
      %v567 = vrot.slane %v562, 4
      %v569 = vshrl.u32 %v512, 16
      %v571 = vrot.slane %v569, 7
      %v572 = vshll.u32 %v512, 16
      %v574 = vor.u32 %v571, %v572
      %v575 = vrot.slane %v571, 4
      %v577 = vshrl.u32 %v513, 16
      %v579 = vrot.slane %v577, 7
      %v580 = vshll.u32 %v513, 16
      %v582 = vor.u32 %v579, %v580
      %v583 = vsel %vm516, %v575, %v582
      %v584 = vrot.slane %v579, 4
      %585 = vrot.lane.b32.xlu0 %v523, 1
      %v586 = vpop.permute.xlu0 %585
      %587 = vrot.lane.b32.xlu0 %v532, 1
      %v588 = vpop.permute.xlu0 %587
      %589 = vrot.lane.b32.xlu0 %v533, 1
      %v590 = vpop.permute.xlu0 %589
      %591 = vrot.lane.b32.xlu0 %v540, 1
      %v592 = vpop.permute.xlu0 %591
      %593 = vrot.lane.b32.xlu0 %v549, 1
      %v594 = vpop.permute.xlu0 %593
      %595 = vrot.lane.b32.xlu0 %v550, 1
      %v596 = vpop.permute.xlu0 %595
      %597 = vrot.lane.b32.xlu0 %v557, 1
      %v598 = vpop.permute.xlu0 %597
      %599 = vrot.lane.b32.xlu0 %v566, 1
      %v600 = vpop.permute.xlu0 %599
      %601 = vrot.lane.b32.xlu0 %v567, 1
      %v602 = vpop.permute.xlu0 %601
      %603 = vrot.lane.b32.xlu0 %v574, 1
      %v604 = vpop.permute.xlu0 %603
      %605 = vrot.lane.b32.xlu0 %v583, 1
      %v606 = vpop.permute.xlu0 %605
      %607 = vrot.lane.b32.xlu0 %v584, 1
      %v608 = vpop.permute.xlu0 %607
      %vm621 = vcmask 134152
      %vm622 = vsmask.f32 7938
      %vm623 = vmand %vm621, %vm622
      %v624 = vld [vmem:[#allocation2] sm:$0xf]
      %v625 = vsel %vm623, %v586, %v624
      %626 = vst [vmem:[#allocation2] sm:$0xf] %v625
      %vm627 = vcmask 134152
      %628 = vst.msk [vmem:[#allocation2 + $0x4] sm:$0xf] %vm627, %v588
      %vm629 = vcmask 131080
      %vm630 = vmand %vm629, %vm514
      %v631 = vld [vmem:[#allocation2 + $0x8] sm:$0x1]
      %v632 = vsel %vm630, %v590, %v631
      %633 = vst [vmem:[#allocation2 + $0x8] sm:$0x1] %v632
      %v634 = vld [vmem:[#allocation2 + $0xc] sm:$0xf]
      %v635 = vsel %vm623, %v592, %v634
      %636 = vst [vmem:[#allocation2 + $0xc] sm:$0xf] %v635
      %637 = vst.msk [vmem:[#allocation2 + $0x10] sm:$0xf] %vm627, %v594
      %v638 = vld [vmem:[#allocation2 + $0x14] sm:$0x1]
      %v639 = vsel %vm630, %v596, %v638
      %640 = vst [vmem:[#allocation2 + $0x14] sm:$0x1] %v639
      %v641 = vld [vmem:[#allocation2 + $0x18] sm:$0xf]
      %v642 = vsel %vm623, %v598, %v641
      %643 = vst [vmem:[#allocation2 + $0x18] sm:$0xf] %v642
      %644 = vst.msk [vmem:[#allocation2 + $0x1c] sm:$0xf] %vm627, %v600
      %v645 = vld [vmem:[#allocation2 + $0x20] sm:$0x1]
      %v646 = vsel %vm630, %v602, %v645
      %647 = vst [vmem:[#allocation2 + $0x20] sm:$0x1] %v646
      %v648 = vld [vmem:[#allocation2 + $0x24] sm:$0xf]
      %v649 = vsel %vm623, %v604, %v648
      %650 = vst [vmem:[#allocation2 + $0x24] sm:$0xf] %v649
      %651 = vst.msk [vmem:[#allocation2 + $0x28] sm:$0xf] %vm627, %v606
      %v652 = vld [vmem:[#allocation2 + $0x2c] sm:$0x1]
      %v653 = vsel %vm630, %v608, %v652
      %654 = vst [vmem:[#allocation2 + $0x2c] sm:$0x1] %v653
      %655 = vrot.lane.b32.xlu0 %v506, 1
      %v656 = vpop.permute.xlu0 %655
      %657 = vrot.lane.b32.xlu0 %v508, 1
      %v658 = vpop.permute.xlu0 %657
      %659 = vrot.lane.b32.xlu0 %v510, 1
      %v660 = vpop.permute.xlu0 %659
      %661 = vrot.lane.b32.xlu0 %v512, 1
      %v662 = vpop.permute.xlu0 %661
      %v667 = vld [vmem:[#allocation2] sm:$0x1]
      %v668 = vsel %vm630, %v656, %v667
      %669 = vst [vmem:[#allocation2] sm:$0x1] %v668
      %v670 = vld [vmem:[#allocation2 + $0xc] sm:$0x1]
      %v671 = vsel %vm630, %v658, %v670
      %672 = vst [vmem:[#allocation2 + $0xc] sm:$0x1] %v671
      %v673 = vld [vmem:[#allocation2 + $0x18] sm:$0x1]
      %v674 = vsel %vm630, %v660, %v673
      %675 = vst [vmem:[#allocation2 + $0x18] sm:$0x1] %v674
      %v676 = vld [vmem:[#allocation2 + $0x24] sm:$0x1]
      %v677 = vsel %vm630, %v662, %v676
      %678 = vst [vmem:[#allocation2 + $0x24] sm:$0x1] %v677
      %v679 = vrot.slane %v507, 7
      %v680 = vrot.slane %v679, 4
      %v681 = vrot.slane %v509, 7
      %v682 = vrot.slane %v681, 4
      %v683 = vrot.slane %v511, 7
      %v684 = vrot.slane %v683, 4
      %v685 = vrot.slane %v513, 7
      %v686 = vrot.slane %v685, 4
      %687 = vrot.lane.b32.xlu0 %v680, 1
      %v688 = vpop.permute.xlu0 %687
      %689 = vrot.lane.b32.xlu0 %v682, 1
      %v690 = vpop.permute.xlu0 %689
      %691 = vrot.lane.b32.xlu0 %v684, 1
      %v692 = vpop.permute.xlu0 %691
      %693 = vrot.lane.b32.xlu0 %v686, 1
      %v694 = vpop.permute.xlu0 %693
      %vm699 = vmand %vm629, %vm622
      %v700 = vld [vmem:[#allocation2 + $0x8] sm:$0x1]
      %v701 = vsel %vm699, %v688, %v700
      %702 = vst [vmem:[#allocation2 + $0x8] sm:$0x1] %v701
      %v703 = vld [vmem:[#allocation2 + $0x14] sm:$0x1]
      %v704 = vsel %vm699, %v690, %v703
      %705 = vst [vmem:[#allocation2 + $0x14] sm:$0x1] %v704
      %v706 = vld [vmem:[#allocation2 + $0x20] sm:$0x1]
      %v707 = vsel %vm699, %v692, %v706
      %708 = vst [vmem:[#allocation2 + $0x20] sm:$0x1] %v707
      %v709 = vld [vmem:[#allocation2 + $0x2c] sm:$0x1]
      %v710 = vsel %vm699, %v694, %v709
      %711 = vst [vmem:[#allocation2 + $0x2c] sm:$0x1] %v710
      %v712 = vld [vmem:[#allocation2] sm:$0xf]
      %v713 = vld [vmem:[#allocation2 + $0x4] sm:$0xf]
      %v714 = vld [vmem:[#allocation2 + $0x8] sm:$0x1]
      %v715 = vld [vmem:[#allocation2 + $0xc] sm:$0xf]
      %v716 = vld [vmem:[#allocation2 + $0x10] sm:$0xf]
      %v717 = vld [vmem:[#allocation2 + $0x14] sm:$0x1]
      %v718 = vld [vmem:[#allocation2 + $0x18] sm:$0xf]
      %v719 = vld [vmem:[#allocation2 + $0x1c] sm:$0xf]
      %v720 = vld [vmem:[#allocation2 + $0x20] sm:$0x1]
      %v721 = vld [vmem:[#allocation2 + $0x24] sm:$0xf]
      %v722 = vld [vmem:[#allocation2 + $0x28] sm:$0xf]
      %v723 = vld [vmem:[#allocation2 + $0x2c] sm:$0x1]
      %736 = vrot.lane.b32.xlu0 %v712, 127
      %v737 = vpop.permute.xlu0 %736
      %738 = vrot.lane.b32.xlu0 %v713, 127
      %v739 = vpop.permute.xlu0 %738
      %740 = vrot.lane.b32.xlu0 %v714, 127
      %v741 = vpop.permute.xlu0 %740
      %742 = vrot.lane.b32.xlu0 %v715, 127
      %v743 = vpop.permute.xlu0 %742
      %744 = vrot.lane.b32.xlu0 %v716, 127
      %v745 = vpop.permute.xlu0 %744
      %746 = vrot.lane.b32.xlu0 %v717, 127
      %v747 = vpop.permute.xlu0 %746
      %748 = vrot.lane.b32.xlu0 %v718, 127
      %v749 = vpop.permute.xlu0 %748
      %750 = vrot.lane.b32.xlu0 %v719, 127
      %v751 = vpop.permute.xlu0 %750
      %752 = vrot.lane.b32.xlu0 %v720, 127
      %v753 = vpop.permute.xlu0 %752
      %754 = vrot.lane.b32.xlu0 %v721, 127
      %v755 = vpop.permute.xlu0 %754
      %756 = vrot.lane.b32.xlu0 %v722, 127
      %v757 = vpop.permute.xlu0 %756
      %758 = vrot.lane.b32.xlu0 %v723, 127
      %v759 = vpop.permute.xlu0 %758
      %vm772 = vcmask 3072
      %773 = vst.msk [vmem:[#allocation2] sm:$0xf] %vm772, %v737
      %774 = vst.msk [vmem:[#allocation2 + $0x4] sm:$0xf] %vm772, %v739
      %vm775 = vcmask 0
      %776 = vst.msk [vmem:[#allocation2 + $0x8] sm:$0x1] %vm775, %v741
      %777 = vst.msk [vmem:[#allocation2 + $0xc] sm:$0xf] %vm772, %v743
      %778 = vst.msk [vmem:[#allocation2 + $0x10] sm:$0xf] %vm772, %v745
      %779 = vst.msk [vmem:[#allocation2 + $0x14] sm:$0x1] %vm775, %v747
      %780 = vst.msk [vmem:[#allocation2 + $0x18] sm:$0xf] %vm772, %v749
      %781 = vst.msk [vmem:[#allocation2 + $0x1c] sm:$0xf] %vm772, %v751
      %782 = vst.msk [vmem:[#allocation2 + $0x20] sm:$0x1] %vm775, %v753
      %783 = vst.msk [vmem:[#allocation2 + $0x24] sm:$0xf] %vm772, %v755
      %784 = vst.msk [vmem:[#allocation2 + $0x28] sm:$0xf] %vm772, %v757
      %785 = vst.msk [vmem:[#allocation2 + $0x2c] sm:$0x1] %vm775, %v759
      %v786 = vld [vmem:[#allocation2] sm:$0xf]
      %v787 = vld [vmem:[#allocation2 + $0x4] sm:$0xf]
      %v788 = vld [vmem:[#allocation2 + $0x8] sm:$0x1]
      %v789 = vld [vmem:[#allocation2 + $0xc] sm:$0xf]
      %v790 = vld [vmem:[#allocation2 + $0x10] sm:$0xf]
      %v791 = vld [vmem:[#allocation2 + $0x14] sm:$0x1]
      %v792 = vld [vmem:[#allocation2 + $0x18] sm:$0xf]
      %v793 = vld [vmem:[#allocation2 + $0x1c] sm:$0xf]
      %v794 = vld [vmem:[#allocation2 + $0x20] sm:$0x1]
      %v795 = vld [vmem:[#allocation2 + $0x24] sm:$0xf]
      %v796 = vld [vmem:[#allocation2 + $0x28] sm:$0xf]
      %v797 = vld [vmem:[#allocation2 + $0x2c] sm:$0x1]
      %810 = vrot.lane.b32.xlu0 %v786, 1
      %v811 = vpop.permute.xlu0 %810
      %812 = vrot.lane.b32.xlu0 %v787, 1
      %v813 = vpop.permute.xlu0 %812
      %814 = vrot.lane.b32.xlu0 %v788, 1
      %v815 = vpop.permute.xlu0 %814
      %816 = vrot.lane.b32.xlu0 %v789, 1
      %v817 = vpop.permute.xlu0 %816
      %818 = vrot.lane.b32.xlu0 %v790, 1
      %v819 = vpop.permute.xlu0 %818
      %820 = vrot.lane.b32.xlu0 %v791, 1
      %v821 = vpop.permute.xlu0 %820
      %822 = vrot.lane.b32.xlu0 %v792, 1
      %v823 = vpop.permute.xlu0 %822
      %824 = vrot.lane.b32.xlu0 %v793, 1
      %v825 = vpop.permute.xlu0 %824
      %826 = vrot.lane.b32.xlu0 %v794, 1
      %v827 = vpop.permute.xlu0 %826
      %828 = vrot.lane.b32.xlu0 %v795, 1
      %v829 = vpop.permute.xlu0 %828
      %830 = vrot.lane.b32.xlu0 %v796, 1
      %v831 = vpop.permute.xlu0 %830
      %832 = vrot.lane.b32.xlu0 %v797, 1
      %v833 = vpop.permute.xlu0 %832
      %vm846 = vcmask 142472
      %847 = vst.msk [vmem:[#allocation2] sm:$0xf] %vm846, %v811
      %848 = vst.msk [vmem:[#allocation2 + $0x4] sm:$0xf] %vm846, %v813
      %vm849 = vcmask 139400
      %850 = vst.msk [vmem:[#allocation2 + $0x8] sm:$0x1] %vm849, %v815
      %851 = vst.msk [vmem:[#allocation2 + $0xc] sm:$0xf] %vm846, %v817
      %852 = vst.msk [vmem:[#allocation2 + $0x10] sm:$0xf] %vm846, %v819
      %853 = vst.msk [vmem:[#allocation2 + $0x14] sm:$0x1] %vm849, %v821
      %854 = vst.msk [vmem:[#allocation2 + $0x18] sm:$0xf] %vm846, %v823
      %855 = vst.msk [vmem:[#allocation2 + $0x1c] sm:$0xf] %vm846, %v825
      %856 = vst.msk [vmem:[#allocation2 + $0x20] sm:$0x1] %vm849, %v827
      %857 = vst.msk [vmem:[#allocation2 + $0x24] sm:$0xf] %vm846, %v829
      %858 = vst.msk [vmem:[#allocation2 + $0x28] sm:$0xf] %vm846, %v831
      %859 = vst.msk [vmem:[#allocation2 + $0x2c] sm:$0x1] %vm849, %v833
      %v860 = vld [vmem:[#allocation2] sm:$0xf]
      %v861 = vld [vmem:[#allocation2 + $0x4] sm:$0xf]
      %v862 = vld [vmem:[#allocation2 + $0xc] sm:$0xf]
      %v863 = vld [vmem:[#allocation2 + $0x10] sm:$0xf]
      %v864 = vld [vmem:[#allocation2 + $0x18] sm:$0xf]
      %v865 = vld [vmem:[#allocation2 + $0x1c] sm:$0xf]
      %v866 = vld [vmem:[#allocation2 + $0x24] sm:$0xf]
      %v867 = vld [vmem:[#allocation2 + $0x28] sm:$0xf]
      %v870 = vpack.i.b16 %v862, %v860
      %v871 = vshrl.u32 %v860, 16
      %v872 = vshrl.u32 %v862, 16
      %v873 = vpack.i.b16 %v872, %v871
      %v876 = vpack.i.b16 %v866, %v864
      %v877 = vshrl.u32 %v864, 16
      %v878 = vshrl.u32 %v866, 16
      %v879 = vpack.i.b16 %v878, %v877
      %v882 = vpack.i.b16 %v863, %v861
      %v883 = vshrl.u32 %v861, 16
      %v884 = vshrl.u32 %v863, 16
      %v885 = vpack.i.b16 %v884, %v883
      %v888 = vpack.i.b16 %v867, %v865
      %v889 = vshrl.u32 %v865, 16
      %v890 = vshrl.u32 %v867, 16
      %v891 = vpack.i.b16 %v890, %v889
      %v894 = vunpack.c.l.s4 1983009808
      %v895 = vunpack.c.0.s8 %v894
      %v896 = vlaneseq
      %v897 = vshrl.u32 %v896, 7
      %v898 = vsub.s32 %v895, %v897
      %v899 = vrot.slane %v870, %v898
      %v902 = vunpack.c.l.s4 1983009808
      %v903 = vunpack.c.0.s8 %v902
      %v904 = vlaneseq
      %v905 = vshrl.u32 %v904, 7
      %v906 = vsub.s32 %v903, %v905
      %v907 = vrot.slane %v876, %v906
      %v908 = vcombine.low %v899, %v907
      %v909 = vcombine.high %v899, %v907
      %v911 = vunpack.c.l.s4 1934713408
      %v912 = vunpack.c.0.s8 %v911
      %v913 = vlaneseq
      %v914 = vshrl.u32 %v913, 7
      %v915 = vsub.s32 %v912, %v914
      %v916 = vrot.slane %v908, %v915
      %v918 = vunpack.c.l.s4 1934713408
      %v919 = vunpack.c.0.s8 %v918
      %v920 = vlaneseq
      %v921 = vshrl.u32 %v920, 7
      %v922 = vsub.s32 %v919, %v921
      %v923 = vrot.slane %v909, %v922
      %v924 = vcombine.high %v916, 0
      %v925 = vcombine.high %v923, 0
      %v928 = vunpack.c.l.s4 1983009808
      %v929 = vunpack.c.0.s8 %v928
      %v930 = vlaneseq
      %v931 = vshrl.u32 %v930, 7
      %v932 = vsub.s32 %v929, %v931
      %v933 = vrot.slane %v873, %v932
      %v936 = vunpack.c.l.s4 1983009808
      %v937 = vunpack.c.0.s8 %v936
      %v938 = vlaneseq
      %v939 = vshrl.u32 %v938, 7
      %v940 = vsub.s32 %v937, %v939
      %v941 = vrot.slane %v879, %v940
      %v942 = vcombine.low %v933, %v941
      %v943 = vcombine.high %v933, %v941
      %v945 = vunpack.c.l.s4 1934713408
      %v946 = vunpack.c.0.s8 %v945
      %v947 = vlaneseq
      %v948 = vshrl.u32 %v947, 7
      %v949 = vsub.s32 %v946, %v948
      %v950 = vrot.slane %v942, %v949
      %v952 = vunpack.c.l.s4 1934713408
      %v953 = vunpack.c.0.s8 %v952
      %v954 = vlaneseq
      %v955 = vshrl.u32 %v954, 7
      %v956 = vsub.s32 %v953, %v955
      %v957 = vrot.slane %v943, %v956
      %v958 = vcombine.high %v950, 0
      %v959 = vcombine.high %v957, 0
      %v962 = vunpack.c.l.s4 1983009808
      %v963 = vunpack.c.0.s8 %v962
      %v964 = vlaneseq
      %v965 = vshrl.u32 %v964, 7
      %v966 = vsub.s32 %v963, %v965
      %v967 = vrot.slane %v882, %v966
      %v970 = vunpack.c.l.s4 1983009808
      %v971 = vunpack.c.0.s8 %v970
      %v972 = vlaneseq
      %v973 = vshrl.u32 %v972, 7
      %v974 = vsub.s32 %v971, %v973
      %v975 = vrot.slane %v888, %v974
      %v976 = vcombine.low %v967, %v975
      %v977 = vcombine.high %v967, %v975
      %v979 = vunpack.c.l.s4 1934713408
      %v980 = vunpack.c.0.s8 %v979
      %v981 = vlaneseq
      %v982 = vshrl.u32 %v981, 7
      %v983 = vsub.s32 %v980, %v982
      %v984 = vrot.slane %v976, %v983
      %v986 = vunpack.c.l.s4 1934713408
      %v987 = vunpack.c.0.s8 %v986
      %v988 = vlaneseq
      %v989 = vshrl.u32 %v988, 7
      %v990 = vsub.s32 %v987, %v989
      %v991 = vrot.slane %v977, %v990
      %v992 = vcombine.high %v984, 0
      %v993 = vcombine.high %v991, 0
      %v996 = vunpack.c.l.s4 1983009808
      %v997 = vunpack.c.0.s8 %v996
      %v998 = vlaneseq
      %v999 = vshrl.u32 %v998, 7
      %v1000 = vsub.s32 %v997, %v999
      %v1001 = vrot.slane %v885, %v1000
      %v1004 = vunpack.c.l.s4 1983009808
      %v1005 = vunpack.c.0.s8 %v1004
      %v1006 = vlaneseq
      %v1007 = vshrl.u32 %v1006, 7
      %v1008 = vsub.s32 %v1005, %v1007
      %v1009 = vrot.slane %v891, %v1008
      %v1010 = vcombine.low %v1001, %v1009
      %v1011 = vcombine.high %v1001, %v1009
      %v1013 = vunpack.c.l.s4 1934713408
      %v1014 = vunpack.c.0.s8 %v1013
      %v1015 = vlaneseq
      %v1016 = vshrl.u32 %v1015, 7
      %v1017 = vsub.s32 %v1014, %v1016
      %v1018 = vrot.slane %v1010, %v1017
      %v1020 = vunpack.c.l.s4 1934713408
      %v1021 = vunpack.c.0.s8 %v1020
      %v1022 = vlaneseq
      %v1023 = vshrl.u32 %v1022, 7
      %v1024 = vsub.s32 %v1021, %v1023
      %v1025 = vrot.slane %v1011, %v1024
      %v1026 = vcombine.high %v1018, 0
      %v1027 = vcombine.high %v1025, 0
      %v1029 = vunpack.c.l.b16 %v950
      %v1030 = vpack.c.b16 %v1029, %v1029
      %1031 = vrot.lane.b32.xlu0 %v1030, 16
      %v1032 = vpop.permute.xlu0 %1031
      %v1034 = vunpack.c.l.b16 %v924
      %v1035 = vpack.c.b16 %v1034, %v1034
      %1036 = vrot.lane.b32.xlu0 %v1035, 32
      %v1037 = vpop.permute.xlu0 %1036
      %v1039 = vunpack.c.l.b16 %v958
      %v1040 = vpack.c.b16 %v1039, %v1039
      %1041 = vrot.lane.b32.xlu0 %v1040, 48
      %v1042 = vpop.permute.xlu0 %1041
      %v1044 = vunpack.c.l.b16 %v923
      %v1045 = vpack.c.b16 %v1044, %v1044
      %1046 = vrot.lane.b32.xlu0 %v1045, 64
      %v1047 = vpop.permute.xlu0 %1046
      %v1049 = vunpack.c.l.b16 %v957
      %v1050 = vpack.c.b16 %v1049, %v1049
      %1051 = vrot.lane.b32.xlu0 %v1050, 80
      %v1052 = vpop.permute.xlu0 %1051
      %v1054 = vunpack.c.l.b16 %v925
      %v1055 = vpack.c.b16 %v1054, %v1054
      %1056 = vrot.lane.b32.xlu0 %v1055, 96
      %v1057 = vpop.permute.xlu0 %1056
      %v1059 = vunpack.c.l.b16 %v959
      %v1060 = vpack.c.b16 %v1059, %v1059
      %1061 = vrot.lane.b32.xlu0 %v1060, 112
      %v1062 = vpop.permute.xlu0 %1061
      %v1064 = vunpack.c.l.b16 %v1018
      %v1065 = vpack.c.b16 %v1064, %v1064
      %1066 = vrot.lane.b32.xlu0 %v1065, 16
      %v1067 = vpop.permute.xlu0 %1066
      %v1069 = vunpack.c.l.b16 %v992
      %v1070 = vpack.c.b16 %v1069, %v1069
      %1071 = vrot.lane.b32.xlu0 %v1070, 32
      %v1072 = vpop.permute.xlu0 %1071
      %v1074 = vunpack.c.l.b16 %v1026
      %v1075 = vpack.c.b16 %v1074, %v1074
      %1076 = vrot.lane.b32.xlu0 %v1075, 48
      %v1077 = vpop.permute.xlu0 %1076
      %v1079 = vunpack.c.l.b16 %v991
      %v1080 = vpack.c.b16 %v1079, %v1079
      %1081 = vrot.lane.b32.xlu0 %v1080, 64
      %v1082 = vpop.permute.xlu0 %1081
      %v1084 = vunpack.c.l.b16 %v1025
      %v1085 = vpack.c.b16 %v1084, %v1084
      %1086 = vrot.lane.b32.xlu0 %v1085, 80
      %v1087 = vpop.permute.xlu0 %1086
      %v1089 = vunpack.c.l.b16 %v993
      %v1090 = vpack.c.b16 %v1089, %v1089
      %1091 = vrot.lane.b32.xlu0 %v1090, 96
      %v1092 = vpop.permute.xlu0 %1091
      %v1094 = vunpack.c.l.b16 %v1027
      %v1095 = vpack.c.b16 %v1094, %v1094
      %1096 = vrot.lane.b32.xlu0 %v1095, 112
      %v1097 = vpop.permute.xlu0 %1096
      %vm1098 = vcmask 130048
      %v1101 = vsel %vm1098, %v916, %v1032
      %vm1102 = vcmask 261120
      %v1104 = vsel %vm1102, %v1101, %v1037
      %vm1105 = vcmask 392192
      %v1107 = vsel %vm1105, %v1104, %v1042
      %vm1108 = vcmask 523264
      %v1110 = vsel %vm1108, %v1107, %v1047
      %vm1111 = vcmask 654336
      %v1113 = vsel %vm1111, %v1110, %v1052
      %vm1114 = vcmask 785408
      %v1116 = vsel %vm1114, %v1113, %v1057
      %vm1117 = vcmask 916480
      %v1119 = vsel %vm1117, %v1116, %v1062
      %v1122 = vsel %vm1098, %v984, %v1067
      %v1124 = vsel %vm1102, %v1122, %v1072
      %v1126 = vsel %vm1105, %v1124, %v1077
      %v1128 = vsel %vm1108, %v1126, %v1082
      %v1130 = vsel %vm1111, %v1128, %v1087
      %v1132 = vsel %vm1114, %v1130, %v1092
      %v1134 = vsel %vm1117, %v1132, %v1097
      %1143 = vrot.lane.b32.xlu0 %v860, 127
      %v1144 = vpop.permute.xlu0 %1143
      %1145 = vrot.lane.b32.xlu0 %v861, 127
      %v1146 = vpop.permute.xlu0 %1145
      %1147 = vrot.lane.b32.xlu0 %v862, 127
      %v1148 = vpop.permute.xlu0 %1147
      %1149 = vrot.lane.b32.xlu0 %v863, 127
      %v1150 = vpop.permute.xlu0 %1149
      %1151 = vrot.lane.b32.xlu0 %v864, 127
      %v1152 = vpop.permute.xlu0 %1151
      %1153 = vrot.lane.b32.xlu0 %v865, 127
      %v1154 = vpop.permute.xlu0 %1153
      %1155 = vrot.lane.b32.xlu0 %v866, 127
      %v1156 = vpop.permute.xlu0 %1155
      %1157 = vrot.lane.b32.xlu0 %v867, 127
      %v1158 = vpop.permute.xlu0 %1157
      %v1161 = vpack.i.b16 %v1148, %v1144
      %v1162 = vshrl.u32 %v1144, 16
      %v1163 = vshrl.u32 %v1148, 16
      %v1164 = vpack.i.b16 %v1163, %v1162
      %v1167 = vpack.i.b16 %v1156, %v1152
      %v1168 = vshrl.u32 %v1152, 16
      %v1169 = vshrl.u32 %v1156, 16
      %v1170 = vpack.i.b16 %v1169, %v1168
      %v1173 = vpack.i.b16 %v1150, %v1146
      %v1174 = vshrl.u32 %v1146, 16
      %v1175 = vshrl.u32 %v1150, 16
      %v1176 = vpack.i.b16 %v1175, %v1174
      %v1179 = vpack.i.b16 %v1158, %v1154
      %v1180 = vshrl.u32 %v1154, 16
      %v1181 = vshrl.u32 %v1158, 16
      %v1182 = vpack.i.b16 %v1181, %v1180
      %v1185 = vunpack.c.l.s4 1983009808
      %v1186 = vunpack.c.0.s8 %v1185
      %v1187 = vlaneseq
      %v1188 = vshrl.u32 %v1187, 7
      %v1189 = vsub.s32 %v1186, %v1188
      %v1190 = vrot.slane %v1161, %v1189
      %v1193 = vunpack.c.l.s4 1983009808
      %v1194 = vunpack.c.0.s8 %v1193
      %v1195 = vlaneseq
      %v1196 = vshrl.u32 %v1195, 7
      %v1197 = vsub.s32 %v1194, %v1196
      %v1198 = vrot.slane %v1167, %v1197
      %v1199 = vcombine.low %v1190, %v1198
      %v1200 = vcombine.high %v1190, %v1198
      %v1202 = vunpack.c.l.s4 1934713408
      %v1203 = vunpack.c.0.s8 %v1202
      %v1204 = vlaneseq
      %v1205 = vshrl.u32 %v1204, 7
      %v1206 = vsub.s32 %v1203, %v1205
      %v1207 = vrot.slane %v1199, %v1206
      %v1209 = vunpack.c.l.s4 1934713408
      %v1210 = vunpack.c.0.s8 %v1209
      %v1211 = vlaneseq
      %v1212 = vshrl.u32 %v1211, 7
      %v1213 = vsub.s32 %v1210, %v1212
      %v1214 = vrot.slane %v1200, %v1213
      %v1215 = vcombine.high %v1207, 0
      %v1216 = vcombine.high %v1214, 0
      %v1219 = vunpack.c.l.s4 1983009808
      %v1220 = vunpack.c.0.s8 %v1219
      %v1221 = vlaneseq
      %v1222 = vshrl.u32 %v1221, 7
      %v1223 = vsub.s32 %v1220, %v1222
      %v1224 = vrot.slane %v1164, %v1223
      %v1227 = vunpack.c.l.s4 1983009808
      %v1228 = vunpack.c.0.s8 %v1227
      %v1229 = vlaneseq
      %v1230 = vshrl.u32 %v1229, 7
      %v1231 = vsub.s32 %v1228, %v1230
      %v1232 = vrot.slane %v1170, %v1231
      %v1233 = vcombine.low %v1224, %v1232
      %v1234 = vcombine.high %v1224, %v1232
      %v1236 = vunpack.c.l.s4 1934713408
      %v1237 = vunpack.c.0.s8 %v1236
      %v1238 = vlaneseq
      %v1239 = vshrl.u32 %v1238, 7
      %v1240 = vsub.s32 %v1237, %v1239
      %v1241 = vrot.slane %v1233, %v1240
      %v1243 = vunpack.c.l.s4 1934713408
      %v1244 = vunpack.c.0.s8 %v1243
      %v1245 = vlaneseq
      %v1246 = vshrl.u32 %v1245, 7
      %v1247 = vsub.s32 %v1244, %v1246
      %v1248 = vrot.slane %v1234, %v1247
      %v1249 = vcombine.high %v1241, 0
      %v1250 = vcombine.high %v1248, 0
      %v1253 = vunpack.c.l.s4 1983009808
      %v1254 = vunpack.c.0.s8 %v1253
      %v1255 = vlaneseq
      %v1256 = vshrl.u32 %v1255, 7
      %v1257 = vsub.s32 %v1254, %v1256
      %v1258 = vrot.slane %v1173, %v1257
      %v1261 = vunpack.c.l.s4 1983009808
      %v1262 = vunpack.c.0.s8 %v1261
      %v1263 = vlaneseq
      %v1264 = vshrl.u32 %v1263, 7
      %v1265 = vsub.s32 %v1262, %v1264
      %v1266 = vrot.slane %v1179, %v1265
      %v1267 = vcombine.low %v1258, %v1266
      %v1268 = vcombine.high %v1258, %v1266
      %v1270 = vunpack.c.l.s4 1934713408
      %v1271 = vunpack.c.0.s8 %v1270
      %v1272 = vlaneseq
      %v1273 = vshrl.u32 %v1272, 7
      %v1274 = vsub.s32 %v1271, %v1273
      %v1275 = vrot.slane %v1267, %v1274
      %v1277 = vunpack.c.l.s4 1934713408
      %v1278 = vunpack.c.0.s8 %v1277
      %v1279 = vlaneseq
      %v1280 = vshrl.u32 %v1279, 7
      %v1281 = vsub.s32 %v1278, %v1280
      %v1282 = vrot.slane %v1268, %v1281
      %v1283 = vcombine.high %v1275, 0
      %v1284 = vcombine.high %v1282, 0
      %v1287 = vunpack.c.l.s4 1983009808
      %v1288 = vunpack.c.0.s8 %v1287
      %v1289 = vlaneseq
      %v1290 = vshrl.u32 %v1289, 7
      %v1291 = vsub.s32 %v1288, %v1290
      %v1292 = vrot.slane %v1176, %v1291
      %v1295 = vunpack.c.l.s4 1983009808
      %v1296 = vunpack.c.0.s8 %v1295
      %v1297 = vlaneseq
      %v1298 = vshrl.u32 %v1297, 7
      %v1299 = vsub.s32 %v1296, %v1298
      %v1300 = vrot.slane %v1182, %v1299
      %v1301 = vcombine.low %v1292, %v1300
      %v1302 = vcombine.high %v1292, %v1300
      %v1304 = vunpack.c.l.s4 1934713408
      %v1305 = vunpack.c.0.s8 %v1304
      %v1306 = vlaneseq
      %v1307 = vshrl.u32 %v1306, 7
      %v1308 = vsub.s32 %v1305, %v1307
      %v1309 = vrot.slane %v1301, %v1308
      %v1311 = vunpack.c.l.s4 1934713408
      %v1312 = vunpack.c.0.s8 %v1311
      %v1313 = vlaneseq
      %v1314 = vshrl.u32 %v1313, 7
      %v1315 = vsub.s32 %v1312, %v1314
      %v1316 = vrot.slane %v1302, %v1315
      %v1317 = vcombine.high %v1309, 0
      %v1318 = vcombine.high %v1316, 0
      %v1320 = vunpack.c.l.b16 %v1241
      %v1321 = vpack.c.b16 %v1320, %v1320
      %1322 = vrot.lane.b32.xlu0 %v1321, 16
      %v1323 = vpop.permute.xlu0 %1322
      %v1325 = vunpack.c.l.b16 %v1215
      %v1326 = vpack.c.b16 %v1325, %v1325
      %1327 = vrot.lane.b32.xlu0 %v1326, 32
      %v1328 = vpop.permute.xlu0 %1327
      %v1330 = vunpack.c.l.b16 %v1249
      %v1331 = vpack.c.b16 %v1330, %v1330
      %1332 = vrot.lane.b32.xlu0 %v1331, 48
      %v1333 = vpop.permute.xlu0 %1332
      %v1335 = vunpack.c.l.b16 %v1214
      %v1336 = vpack.c.b16 %v1335, %v1335
      %1337 = vrot.lane.b32.xlu0 %v1336, 64
      %v1338 = vpop.permute.xlu0 %1337
      %v1340 = vunpack.c.l.b16 %v1248
      %v1341 = vpack.c.b16 %v1340, %v1340
      %1342 = vrot.lane.b32.xlu0 %v1341, 80
      %v1343 = vpop.permute.xlu0 %1342
      %v1345 = vunpack.c.l.b16 %v1216
      %v1346 = vpack.c.b16 %v1345, %v1345
      %1347 = vrot.lane.b32.xlu0 %v1346, 96
      %v1348 = vpop.permute.xlu0 %1347
      %v1350 = vunpack.c.l.b16 %v1250
      %v1351 = vpack.c.b16 %v1350, %v1350
      %1352 = vrot.lane.b32.xlu0 %v1351, 112
      %v1353 = vpop.permute.xlu0 %1352
      %v1355 = vunpack.c.l.b16 %v1309
      %v1356 = vpack.c.b16 %v1355, %v1355
      %1357 = vrot.lane.b32.xlu0 %v1356, 16
      %v1358 = vpop.permute.xlu0 %1357
      %v1360 = vunpack.c.l.b16 %v1283
      %v1361 = vpack.c.b16 %v1360, %v1360
      %1362 = vrot.lane.b32.xlu0 %v1361, 32
      %v1363 = vpop.permute.xlu0 %1362
      %v1365 = vunpack.c.l.b16 %v1317
      %v1366 = vpack.c.b16 %v1365, %v1365
      %1367 = vrot.lane.b32.xlu0 %v1366, 48
      %v1368 = vpop.permute.xlu0 %1367
      %v1370 = vunpack.c.l.b16 %v1282
      %v1371 = vpack.c.b16 %v1370, %v1370
      %1372 = vrot.lane.b32.xlu0 %v1371, 64
      %v1373 = vpop.permute.xlu0 %1372
      %v1375 = vunpack.c.l.b16 %v1316
      %v1376 = vpack.c.b16 %v1375, %v1375
      %1377 = vrot.lane.b32.xlu0 %v1376, 80
      %v1378 = vpop.permute.xlu0 %1377
      %v1380 = vunpack.c.l.b16 %v1284
      %v1381 = vpack.c.b16 %v1380, %v1380
      %1382 = vrot.lane.b32.xlu0 %v1381, 96
      %v1383 = vpop.permute.xlu0 %1382
      %v1385 = vunpack.c.l.b16 %v1318
      %v1386 = vpack.c.b16 %v1385, %v1385
      %1387 = vrot.lane.b32.xlu0 %v1386, 112
      %v1388 = vpop.permute.xlu0 %1387
      %v1391 = vsel %vm1098, %v1207, %v1323
      %v1393 = vsel %vm1102, %v1391, %v1328
      %v1395 = vsel %vm1105, %v1393, %v1333
      %v1397 = vsel %vm1108, %v1395, %v1338
      %v1399 = vsel %vm1111, %v1397, %v1343
      %v1401 = vsel %vm1114, %v1399, %v1348
      %v1403 = vsel %vm1117, %v1401, %v1353
      %v1406 = vsel %vm1098, %v1275, %v1358
      %v1408 = vsel %vm1102, %v1406, %v1363
      %v1410 = vsel %vm1105, %v1408, %v1368
      %v1412 = vsel %vm1108, %v1410, %v1373
      %v1414 = vsel %vm1111, %v1412, %v1378
      %v1416 = vsel %vm1114, %v1414, %v1383
      %v1418 = vsel %vm1117, %v1416, %v1388
      %1419 = vrot.lane.b32.xlu0 %v860, 126
      %v1420 = vpop.permute.xlu0 %1419
      %1421 = vrot.lane.b32.xlu0 %v861, 126
      %v1422 = vpop.permute.xlu0 %1421
      %1423 = vrot.lane.b32.xlu0 %v862, 126
      %v1424 = vpop.permute.xlu0 %1423
      %1425 = vrot.lane.b32.xlu0 %v863, 126
      %v1426 = vpop.permute.xlu0 %1425
      %1427 = vrot.lane.b32.xlu0 %v864, 126
      %v1428 = vpop.permute.xlu0 %1427
      %1429 = vrot.lane.b32.xlu0 %v865, 126
      %v1430 = vpop.permute.xlu0 %1429
      %1431 = vrot.lane.b32.xlu0 %v866, 126
      %v1432 = vpop.permute.xlu0 %1431
      %1433 = vrot.lane.b32.xlu0 %v867, 126
      %v1434 = vpop.permute.xlu0 %1433
      %v1437 = vpack.i.b16 %v1424, %v1420
      %v1438 = vshrl.u32 %v1420, 16
      %v1439 = vshrl.u32 %v1424, 16
      %v1440 = vpack.i.b16 %v1439, %v1438
      %v1443 = vpack.i.b16 %v1432, %v1428
      %v1444 = vshrl.u32 %v1428, 16
      %v1445 = vshrl.u32 %v1432, 16
      %v1446 = vpack.i.b16 %v1445, %v1444
      %v1449 = vpack.i.b16 %v1426, %v1422
      %v1450 = vshrl.u32 %v1422, 16
      %v1451 = vshrl.u32 %v1426, 16
      %v1452 = vpack.i.b16 %v1451, %v1450
      %v1455 = vpack.i.b16 %v1434, %v1430
      %v1456 = vshrl.u32 %v1430, 16
      %v1457 = vshrl.u32 %v1434, 16
      %v1458 = vpack.i.b16 %v1457, %v1456
      %v1461 = vunpack.c.l.s4 1983009808
      %v1462 = vunpack.c.0.s8 %v1461
      %v1463 = vlaneseq
      %v1464 = vshrl.u32 %v1463, 7
      %v1465 = vsub.s32 %v1462, %v1464
      %v1466 = vrot.slane %v1437, %v1465
      %v1469 = vunpack.c.l.s4 1983009808
      %v1470 = vunpack.c.0.s8 %v1469
      %v1471 = vlaneseq
      %v1472 = vshrl.u32 %v1471, 7
      %v1473 = vsub.s32 %v1470, %v1472
      %v1474 = vrot.slane %v1443, %v1473
      %v1475 = vcombine.low %v1466, %v1474
      %v1476 = vcombine.high %v1466, %v1474
      %v1478 = vunpack.c.l.s4 1934713408
      %v1479 = vunpack.c.0.s8 %v1478
      %v1480 = vlaneseq
      %v1481 = vshrl.u32 %v1480, 7
      %v1482 = vsub.s32 %v1479, %v1481
      %v1483 = vrot.slane %v1475, %v1482
      %v1485 = vunpack.c.l.s4 1934713408
      %v1486 = vunpack.c.0.s8 %v1485
      %v1487 = vlaneseq
      %v1488 = vshrl.u32 %v1487, 7
      %v1489 = vsub.s32 %v1486, %v1488
      %v1490 = vrot.slane %v1476, %v1489
      %v1491 = vcombine.high %v1483, 0
      %v1492 = vcombine.high %v1490, 0
      %v1495 = vunpack.c.l.s4 1983009808
      %v1496 = vunpack.c.0.s8 %v1495
      %v1497 = vlaneseq
      %v1498 = vshrl.u32 %v1497, 7
      %v1499 = vsub.s32 %v1496, %v1498
      %v1500 = vrot.slane %v1440, %v1499
      %v1503 = vunpack.c.l.s4 1983009808
      %v1504 = vunpack.c.0.s8 %v1503
      %v1505 = vlaneseq
      %v1506 = vshrl.u32 %v1505, 7
      %v1507 = vsub.s32 %v1504, %v1506
      %v1508 = vrot.slane %v1446, %v1507
      %v1509 = vcombine.low %v1500, %v1508
      %v1510 = vcombine.high %v1500, %v1508
      %v1512 = vunpack.c.l.s4 1934713408
      %v1513 = vunpack.c.0.s8 %v1512
      %v1514 = vlaneseq
      %v1515 = vshrl.u32 %v1514, 7
      %v1516 = vsub.s32 %v1513, %v1515
      %v1517 = vrot.slane %v1509, %v1516
      %v1519 = vunpack.c.l.s4 1934713408
      %v1520 = vunpack.c.0.s8 %v1519
      %v1521 = vlaneseq
      %v1522 = vshrl.u32 %v1521, 7
      %v1523 = vsub.s32 %v1520, %v1522
      %v1524 = vrot.slane %v1510, %v1523
      %v1525 = vcombine.high %v1517, 0
      %v1526 = vcombine.high %v1524, 0
      %v1529 = vunpack.c.l.s4 1983009808
      %v1530 = vunpack.c.0.s8 %v1529
      %v1531 = vlaneseq
      %v1532 = vshrl.u32 %v1531, 7
      %v1533 = vsub.s32 %v1530, %v1532
      %v1534 = vrot.slane %v1449, %v1533
      %v1537 = vunpack.c.l.s4 1983009808
      %v1538 = vunpack.c.0.s8 %v1537
      %v1539 = vlaneseq
      %v1540 = vshrl.u32 %v1539, 7
      %v1541 = vsub.s32 %v1538, %v1540
      %v1542 = vrot.slane %v1455, %v1541
      %v1543 = vcombine.low %v1534, %v1542
      %v1544 = vcombine.high %v1534, %v1542
      %v1546 = vunpack.c.l.s4 1934713408
      %v1547 = vunpack.c.0.s8 %v1546
      %v1548 = vlaneseq
      %v1549 = vshrl.u32 %v1548, 7
      %v1550 = vsub.s32 %v1547, %v1549
      %v1551 = vrot.slane %v1543, %v1550
      %v1553 = vunpack.c.l.s4 1934713408
      %v1554 = vunpack.c.0.s8 %v1553
      %v1555 = vlaneseq
      %v1556 = vshrl.u32 %v1555, 7
      %v1557 = vsub.s32 %v1554, %v1556
      %v1558 = vrot.slane %v1544, %v1557
      %v1559 = vcombine.high %v1551, 0
      %v1560 = vcombine.high %v1558, 0
      %v1563 = vunpack.c.l.s4 1983009808
      %v1564 = vunpack.c.0.s8 %v1563
      %v1565 = vlaneseq
      %v1566 = vshrl.u32 %v1565, 7
      %v1567 = vsub.s32 %v1564, %v1566
      %v1568 = vrot.slane %v1452, %v1567
      %v1571 = vunpack.c.l.s4 1983009808
      %v1572 = vunpack.c.0.s8 %v1571
      %v1573 = vlaneseq
      %v1574 = vshrl.u32 %v1573, 7
      %v1575 = vsub.s32 %v1572, %v1574
      %v1576 = vrot.slane %v1458, %v1575
      %v1577 = vcombine.low %v1568, %v1576
      %v1578 = vcombine.high %v1568, %v1576
      %v1580 = vunpack.c.l.s4 1934713408
      %v1581 = vunpack.c.0.s8 %v1580
      %v1582 = vlaneseq
      %v1583 = vshrl.u32 %v1582, 7
      %v1584 = vsub.s32 %v1581, %v1583
      %v1585 = vrot.slane %v1577, %v1584
      %v1587 = vunpack.c.l.s4 1934713408
      %v1588 = vunpack.c.0.s8 %v1587
      %v1589 = vlaneseq
      %v1590 = vshrl.u32 %v1589, 7
      %v1591 = vsub.s32 %v1588, %v1590
      %v1592 = vrot.slane %v1578, %v1591
      %v1593 = vcombine.high %v1585, 0
      %v1594 = vcombine.high %v1592, 0
      %v1596 = vunpack.c.l.b16 %v1517
      %v1597 = vpack.c.b16 %v1596, %v1596
      %1598 = vrot.lane.b32.xlu0 %v1597, 16
      %v1599 = vpop.permute.xlu0 %1598
      %v1601 = vunpack.c.l.b16 %v1491
      %v1602 = vpack.c.b16 %v1601, %v1601
      %1603 = vrot.lane.b32.xlu0 %v1602, 32
      %v1604 = vpop.permute.xlu0 %1603
      %v1606 = vunpack.c.l.b16 %v1525
      %v1607 = vpack.c.b16 %v1606, %v1606
      %1608 = vrot.lane.b32.xlu0 %v1607, 48
      %v1609 = vpop.permute.xlu0 %1608
      %v1611 = vunpack.c.l.b16 %v1490
      %v1612 = vpack.c.b16 %v1611, %v1611
      %1613 = vrot.lane.b32.xlu0 %v1612, 64
      %v1614 = vpop.permute.xlu0 %1613
      %v1616 = vunpack.c.l.b16 %v1524
      %v1617 = vpack.c.b16 %v1616, %v1616
      %1618 = vrot.lane.b32.xlu0 %v1617, 80
      %v1619 = vpop.permute.xlu0 %1618
      %v1621 = vunpack.c.l.b16 %v1492
      %v1622 = vpack.c.b16 %v1621, %v1621
      %1623 = vrot.lane.b32.xlu0 %v1622, 96
      %v1624 = vpop.permute.xlu0 %1623
      %v1626 = vunpack.c.l.b16 %v1526
      %v1627 = vpack.c.b16 %v1626, %v1626
      %1628 = vrot.lane.b32.xlu0 %v1627, 112
      %v1629 = vpop.permute.xlu0 %1628
      %v1631 = vunpack.c.l.b16 %v1585
      %v1632 = vpack.c.b16 %v1631, %v1631
      %1633 = vrot.lane.b32.xlu0 %v1632, 16
      %v1634 = vpop.permute.xlu0 %1633
      %v1636 = vunpack.c.l.b16 %v1559
      %v1637 = vpack.c.b16 %v1636, %v1636
      %1638 = vrot.lane.b32.xlu0 %v1637, 32
      %v1639 = vpop.permute.xlu0 %1638
      %v1641 = vunpack.c.l.b16 %v1593
      %v1642 = vpack.c.b16 %v1641, %v1641
      %1643 = vrot.lane.b32.xlu0 %v1642, 48
      %v1644 = vpop.permute.xlu0 %1643
      %v1646 = vunpack.c.l.b16 %v1558
      %v1647 = vpack.c.b16 %v1646, %v1646
      %1648 = vrot.lane.b32.xlu0 %v1647, 64
      %v1649 = vpop.permute.xlu0 %1648
      %v1651 = vunpack.c.l.b16 %v1592
      %v1652 = vpack.c.b16 %v1651, %v1651
      %1653 = vrot.lane.b32.xlu0 %v1652, 80
      %v1654 = vpop.permute.xlu0 %1653
      %v1656 = vunpack.c.l.b16 %v1560
      %v1657 = vpack.c.b16 %v1656, %v1656
      %1658 = vrot.lane.b32.xlu0 %v1657, 96
      %v1659 = vpop.permute.xlu0 %1658
      %v1661 = vunpack.c.l.b16 %v1594
      %v1662 = vpack.c.b16 %v1661, %v1661
      %1663 = vrot.lane.b32.xlu0 %v1662, 112
      %v1664 = vpop.permute.xlu0 %1663
      %v1667 = vsel %vm1098, %v1483, %v1599
      %v1669 = vsel %vm1102, %v1667, %v1604
      %v1671 = vsel %vm1105, %v1669, %v1609
      %v1673 = vsel %vm1108, %v1671, %v1614
      %v1675 = vsel %vm1111, %v1673, %v1619
      %v1677 = vsel %vm1114, %v1675, %v1624
      %v1679 = vsel %vm1117, %v1677, %v1629
      %v1682 = vsel %vm1098, %v1551, %v1634
      %v1684 = vsel %vm1102, %v1682, %v1639
      %v1686 = vsel %vm1105, %v1684, %v1644
      %v1688 = vsel %vm1108, %v1686, %v1649
      %v1690 = vsel %vm1111, %v1688, %v1654
      %v1692 = vsel %vm1114, %v1690, %v1659
      %v1694 = vsel %vm1117, %v1692, %v1664
      %v1695 = vld [vmem:[#allocation2 + $0x8] sm:$0x1]
      %v1696 = vld [vmem:[#allocation2 + $0x14] sm:$0x1]
      %v1697 = vld [vmem:[#allocation2 + $0x20] sm:$0x1]
      %v1698 = vld [vmem:[#allocation2 + $0x2c] sm:$0x1]
      %vm1699 = vsmask.f32 3328
      %vm1700 = vsmask.f32 7440
      %vm1701 = vmor %vm1699, %vm1700
      %v1703 = vrot.slane %v871, 4
      %v1704 = vshll.u32 %v860, 16
      %v1706 = vrot.slane %v1704, 5
      %v1707 = vor.u32 %v1703, %v1706
      %v1708 = vrot.slane %v1707, 4
      %v1709 = vshll.u32 %v861, 16
      %v1711 = vrot.slane %v1709, 5
      %v1712 = vsel %vm1701, %v1708, %v1711
      %v1714 = vrot.slane %v883, 4
      %v1715 = vor.u32 %v1714, %v1711
      %v1716 = vrot.slane %v1715, 4
      %v1718 = vshll.u32 %v1695, 16
      %v1720 = vrot.slane %v1718, 5
      %v1721 = vsel %vm1701, %v1716, %v1720
      %v1723 = vrot.slane %v872, 4
      %v1724 = vshll.u32 %v862, 16
      %v1726 = vrot.slane %v1724, 5
      %v1727 = vor.u32 %v1723, %v1726
      %v1728 = vrot.slane %v1727, 4
      %v1729 = vshll.u32 %v863, 16
      %v1731 = vrot.slane %v1729, 5
      %v1732 = vsel %vm1701, %v1728, %v1731
      %v1734 = vrot.slane %v884, 4
      %v1735 = vor.u32 %v1734, %v1731
      %v1736 = vrot.slane %v1735, 4
      %v1738 = vshll.u32 %v1696, 16
      %v1740 = vrot.slane %v1738, 5
      %v1741 = vsel %vm1701, %v1736, %v1740
      %v1743 = vrot.slane %v877, 4
      %v1744 = vshll.u32 %v864, 16
      %v1746 = vrot.slane %v1744, 5
      %v1747 = vor.u32 %v1743, %v1746
      %v1748 = vrot.slane %v1747, 4
      %v1749 = vshll.u32 %v865, 16
      %v1751 = vrot.slane %v1749, 5
      %v1752 = vsel %vm1701, %v1748, %v1751
      %v1754 = vrot.slane %v889, 4
      %v1755 = vor.u32 %v1754, %v1751
      %v1756 = vrot.slane %v1755, 4
      %v1758 = vshll.u32 %v1697, 16
      %v1760 = vrot.slane %v1758, 5
      %v1761 = vsel %vm1701, %v1756, %v1760
      %v1763 = vrot.slane %v878, 4
      %v1764 = vshll.u32 %v866, 16
      %v1766 = vrot.slane %v1764, 5
      %v1767 = vor.u32 %v1763, %v1766
      %v1768 = vrot.slane %v1767, 4
      %v1769 = vshll.u32 %v867, 16
      %v1771 = vrot.slane %v1769, 5
      %v1772 = vsel %vm1701, %v1768, %v1771
      %v1774 = vrot.slane %v890, 4
      %v1775 = vor.u32 %v1774, %v1771
      %v1776 = vrot.slane %v1775, 4
      %v1778 = vshll.u32 %v1698, 16
      %v1780 = vrot.slane %v1778, 5
      %v1781 = vsel %vm1701, %v1776, %v1780
      %v1784 = vpack.i.b16 %v1732, %v1712
      %v1785 = vshrl.u32 %v1712, 16
      %v1786 = vshrl.u32 %v1732, 16
      %v1787 = vpack.i.b16 %v1786, %v1785
      %v1790 = vpack.i.b16 %v1772, %v1752
      %v1791 = vshrl.u32 %v1752, 16
      %v1792 = vshrl.u32 %v1772, 16
      %v1793 = vpack.i.b16 %v1792, %v1791
      %v1796 = vpack.i.b16 %v1741, %v1721
      %v1797 = vshrl.u32 %v1721, 16
      %v1798 = vshrl.u32 %v1741, 16
      %v1799 = vpack.i.b16 %v1798, %v1797
      %v1802 = vpack.i.b16 %v1781, %v1761
      %v1803 = vshrl.u32 %v1761, 16
      %v1804 = vshrl.u32 %v1781, 16
      %v1805 = vpack.i.b16 %v1804, %v1803
      %v1808 = vunpack.c.l.s4 1983009808
      %v1809 = vunpack.c.0.s8 %v1808
      %v1810 = vlaneseq
      %v1811 = vshrl.u32 %v1810, 7
      %v1812 = vsub.s32 %v1809, %v1811
      %v1813 = vrot.slane %v1784, %v1812
      %v1816 = vunpack.c.l.s4 1983009808
      %v1817 = vunpack.c.0.s8 %v1816
      %v1818 = vlaneseq
      %v1819 = vshrl.u32 %v1818, 7
      %v1820 = vsub.s32 %v1817, %v1819
      %v1821 = vrot.slane %v1790, %v1820
      %v1822 = vcombine.low %v1813, %v1821
      %v1823 = vcombine.high %v1813, %v1821
      %v1825 = vunpack.c.l.s4 1934713408
      %v1826 = vunpack.c.0.s8 %v1825
      %v1827 = vlaneseq
      %v1828 = vshrl.u32 %v1827, 7
      %v1829 = vsub.s32 %v1826, %v1828
      %v1830 = vrot.slane %v1822, %v1829
      %v1832 = vunpack.c.l.s4 1934713408
      %v1833 = vunpack.c.0.s8 %v1832
      %v1834 = vlaneseq
      %v1835 = vshrl.u32 %v1834, 7
      %v1836 = vsub.s32 %v1833, %v1835
      %v1837 = vrot.slane %v1823, %v1836
      %v1838 = vcombine.high %v1830, 0
      %v1839 = vcombine.high %v1837, 0
      %v1842 = vunpack.c.l.s4 1983009808
      %v1843 = vunpack.c.0.s8 %v1842
      %v1844 = vlaneseq
      %v1845 = vshrl.u32 %v1844, 7
      %v1846 = vsub.s32 %v1843, %v1845
      %v1847 = vrot.slane %v1787, %v1846
      %v1850 = vunpack.c.l.s4 1983009808
      %v1851 = vunpack.c.0.s8 %v1850
      %v1852 = vlaneseq
      %v1853 = vshrl.u32 %v1852, 7
      %v1854 = vsub.s32 %v1851, %v1853
      %v1855 = vrot.slane %v1793, %v1854
      %v1856 = vcombine.low %v1847, %v1855
      %v1857 = vcombine.high %v1847, %v1855
      %v1859 = vunpack.c.l.s4 1934713408
      %v1860 = vunpack.c.0.s8 %v1859
      %v1861 = vlaneseq
      %v1862 = vshrl.u32 %v1861, 7
      %v1863 = vsub.s32 %v1860, %v1862
      %v1864 = vrot.slane %v1856, %v1863
      %v1866 = vunpack.c.l.s4 1934713408
      %v1867 = vunpack.c.0.s8 %v1866
      %v1868 = vlaneseq
      %v1869 = vshrl.u32 %v1868, 7
      %v1870 = vsub.s32 %v1867, %v1869
      %v1871 = vrot.slane %v1857, %v1870
      %v1872 = vcombine.high %v1864, 0
      %v1873 = vcombine.high %v1871, 0
      %v1876 = vunpack.c.l.s4 1983009808
      %v1877 = vunpack.c.0.s8 %v1876
      %v1878 = vlaneseq
      %v1879 = vshrl.u32 %v1878, 7
      %v1880 = vsub.s32 %v1877, %v1879
      %v1881 = vrot.slane %v1796, %v1880
      %v1884 = vunpack.c.l.s4 1983009808
      %v1885 = vunpack.c.0.s8 %v1884
      %v1886 = vlaneseq
      %v1887 = vshrl.u32 %v1886, 7
      %v1888 = vsub.s32 %v1885, %v1887
      %v1889 = vrot.slane %v1802, %v1888
      %v1890 = vcombine.low %v1881, %v1889
      %v1891 = vcombine.high %v1881, %v1889
      %v1893 = vunpack.c.l.s4 1934713408
      %v1894 = vunpack.c.0.s8 %v1893
      %v1895 = vlaneseq
      %v1896 = vshrl.u32 %v1895, 7
      %v1897 = vsub.s32 %v1894, %v1896
      %v1898 = vrot.slane %v1890, %v1897
      %v1900 = vunpack.c.l.s4 1934713408
      %v1901 = vunpack.c.0.s8 %v1900
      %v1902 = vlaneseq
      %v1903 = vshrl.u32 %v1902, 7
      %v1904 = vsub.s32 %v1901, %v1903
      %v1905 = vrot.slane %v1891, %v1904
      %v1906 = vcombine.high %v1898, 0
      %v1907 = vcombine.high %v1905, 0
      %v1910 = vunpack.c.l.s4 1983009808
      %v1911 = vunpack.c.0.s8 %v1910
      %v1912 = vlaneseq
      %v1913 = vshrl.u32 %v1912, 7
      %v1914 = vsub.s32 %v1911, %v1913
      %v1915 = vrot.slane %v1799, %v1914
      %v1918 = vunpack.c.l.s4 1983009808
      %v1919 = vunpack.c.0.s8 %v1918
      %v1920 = vlaneseq
      %v1921 = vshrl.u32 %v1920, 7
      %v1922 = vsub.s32 %v1919, %v1921
      %v1923 = vrot.slane %v1805, %v1922
      %v1924 = vcombine.low %v1915, %v1923
      %v1925 = vcombine.high %v1915, %v1923
      %v1927 = vunpack.c.l.s4 1934713408
      %v1928 = vunpack.c.0.s8 %v1927
      %v1929 = vlaneseq
      %v1930 = vshrl.u32 %v1929, 7
      %v1931 = vsub.s32 %v1928, %v1930
      %v1932 = vrot.slane %v1924, %v1931
      %v1934 = vunpack.c.l.s4 1934713408
      %v1935 = vunpack.c.0.s8 %v1934
      %v1936 = vlaneseq
      %v1937 = vshrl.u32 %v1936, 7
      %v1938 = vsub.s32 %v1935, %v1937
      %v1939 = vrot.slane %v1925, %v1938
      %v1940 = vcombine.high %v1932, 0
      %v1941 = vcombine.high %v1939, 0
      %v1943 = vunpack.c.l.b16 %v1864
      %v1944 = vpack.c.b16 %v1943, %v1943
      %1945 = vrot.lane.b32.xlu0 %v1944, 16
      %v1946 = vpop.permute.xlu0 %1945
      %v1948 = vunpack.c.l.b16 %v1838
      %v1949 = vpack.c.b16 %v1948, %v1948
      %1950 = vrot.lane.b32.xlu0 %v1949, 32
      %v1951 = vpop.permute.xlu0 %1950
      %v1953 = vunpack.c.l.b16 %v1872
      %v1954 = vpack.c.b16 %v1953, %v1953
      %1955 = vrot.lane.b32.xlu0 %v1954, 48
      %v1956 = vpop.permute.xlu0 %1955
      %v1958 = vunpack.c.l.b16 %v1837
      %v1959 = vpack.c.b16 %v1958, %v1958
      %1960 = vrot.lane.b32.xlu0 %v1959, 64
      %v1961 = vpop.permute.xlu0 %1960
      %v1963 = vunpack.c.l.b16 %v1871
      %v1964 = vpack.c.b16 %v1963, %v1963
      %1965 = vrot.lane.b32.xlu0 %v1964, 80
      %v1966 = vpop.permute.xlu0 %1965
      %v1968 = vunpack.c.l.b16 %v1839
      %v1969 = vpack.c.b16 %v1968, %v1968
      %1970 = vrot.lane.b32.xlu0 %v1969, 96
      %v1971 = vpop.permute.xlu0 %1970
      %v1973 = vunpack.c.l.b16 %v1873
      %v1974 = vpack.c.b16 %v1973, %v1973
      %1975 = vrot.lane.b32.xlu0 %v1974, 112
      %v1976 = vpop.permute.xlu0 %1975
      %v1978 = vunpack.c.l.b16 %v1932
      %v1979 = vpack.c.b16 %v1978, %v1978
      %1980 = vrot.lane.b32.xlu0 %v1979, 16
      %v1981 = vpop.permute.xlu0 %1980
      %v1983 = vunpack.c.l.b16 %v1906
      %v1984 = vpack.c.b16 %v1983, %v1983
      %1985 = vrot.lane.b32.xlu0 %v1984, 32
      %v1986 = vpop.permute.xlu0 %1985
      %v1988 = vunpack.c.l.b16 %v1940
      %v1989 = vpack.c.b16 %v1988, %v1988
      %1990 = vrot.lane.b32.xlu0 %v1989, 48
      %v1991 = vpop.permute.xlu0 %1990
      %v1993 = vunpack.c.l.b16 %v1905
      %v1994 = vpack.c.b16 %v1993, %v1993
      %1995 = vrot.lane.b32.xlu0 %v1994, 64
      %v1996 = vpop.permute.xlu0 %1995
      %v1998 = vunpack.c.l.b16 %v1939
      %v1999 = vpack.c.b16 %v1998, %v1998
      %2000 = vrot.lane.b32.xlu0 %v1999, 80
      %v2001 = vpop.permute.xlu0 %2000
      %v2003 = vunpack.c.l.b16 %v1907
      %v2004 = vpack.c.b16 %v2003, %v2003
      %2005 = vrot.lane.b32.xlu0 %v2004, 96
      %v2006 = vpop.permute.xlu0 %2005
      %v2008 = vunpack.c.l.b16 %v1941
      %v2009 = vpack.c.b16 %v2008, %v2008
      %2010 = vrot.lane.b32.xlu0 %v2009, 112
      %v2011 = vpop.permute.xlu0 %2010
      %v2014 = vsel %vm1098, %v1830, %v1946
      %v2016 = vsel %vm1102, %v2014, %v1951
      %v2018 = vsel %vm1105, %v2016, %v1956
      %v2020 = vsel %vm1108, %v2018, %v1961
      %v2022 = vsel %vm1111, %v2020, %v1966
      %v2024 = vsel %vm1114, %v2022, %v1971
      %v2026 = vsel %vm1117, %v2024, %v1976
      %v2029 = vsel %vm1098, %v1898, %v1981
      %v2031 = vsel %vm1102, %v2029, %v1986
      %v2033 = vsel %vm1105, %v2031, %v1991
      %v2035 = vsel %vm1108, %v2033, %v1996
      %v2037 = vsel %vm1111, %v2035, %v2001
      %v2039 = vsel %vm1114, %v2037, %v2006
      %v2041 = vsel %vm1117, %v2039, %v2011
      %2042 = vrot.lane.b32.xlu0 %v1712, 127
      %v2043 = vpop.permute.xlu0 %2042
      %2044 = vrot.lane.b32.xlu0 %v1721, 127
      %v2045 = vpop.permute.xlu0 %2044
      %2046 = vrot.lane.b32.xlu0 %v1732, 127
      %v2047 = vpop.permute.xlu0 %2046
      %2048 = vrot.lane.b32.xlu0 %v1741, 127
      %v2049 = vpop.permute.xlu0 %2048
      %2050 = vrot.lane.b32.xlu0 %v1752, 127
      %v2051 = vpop.permute.xlu0 %2050
      %2052 = vrot.lane.b32.xlu0 %v1761, 127
      %v2053 = vpop.permute.xlu0 %2052
      %2054 = vrot.lane.b32.xlu0 %v1772, 127
      %v2055 = vpop.permute.xlu0 %2054
      %2056 = vrot.lane.b32.xlu0 %v1781, 127
      %v2057 = vpop.permute.xlu0 %2056
      %v2060 = vpack.i.b16 %v2047, %v2043
      %v2061 = vshrl.u32 %v2043, 16
      %v2062 = vshrl.u32 %v2047, 16
      %v2063 = vpack.i.b16 %v2062, %v2061
      %v2066 = vpack.i.b16 %v2055, %v2051
      %v2067 = vshrl.u32 %v2051, 16
      %v2068 = vshrl.u32 %v2055, 16
      %v2069 = vpack.i.b16 %v2068, %v2067
      %v2072 = vpack.i.b16 %v2049, %v2045
      %v2073 = vshrl.u32 %v2045, 16
      %v2074 = vshrl.u32 %v2049, 16
      %v2075 = vpack.i.b16 %v2074, %v2073
      %v2078 = vpack.i.b16 %v2057, %v2053
      %v2079 = vshrl.u32 %v2053, 16
      %v2080 = vshrl.u32 %v2057, 16
      %v2081 = vpack.i.b16 %v2080, %v2079
      %v2084 = vunpack.c.l.s4 1983009808
      %v2085 = vunpack.c.0.s8 %v2084
      %v2086 = vlaneseq
      %v2087 = vshrl.u32 %v2086, 7
      %v2088 = vsub.s32 %v2085, %v2087
      %v2089 = vrot.slane %v2060, %v2088
      %v2092 = vunpack.c.l.s4 1983009808
      %v2093 = vunpack.c.0.s8 %v2092
      %v2094 = vlaneseq
      %v2095 = vshrl.u32 %v2094, 7
      %v2096 = vsub.s32 %v2093, %v2095
      %v2097 = vrot.slane %v2066, %v2096
      %v2098 = vcombine.low %v2089, %v2097
      %v2099 = vcombine.high %v2089, %v2097
      %v2101 = vunpack.c.l.s4 1934713408
      %v2102 = vunpack.c.0.s8 %v2101
      %v2103 = vlaneseq
      %v2104 = vshrl.u32 %v2103, 7
      %v2105 = vsub.s32 %v2102, %v2104
      %v2106 = vrot.slane %v2098, %v2105
      %v2108 = vunpack.c.l.s4 1934713408
      %v2109 = vunpack.c.0.s8 %v2108
      %v2110 = vlaneseq
      %v2111 = vshrl.u32 %v2110, 7
      %v2112 = vsub.s32 %v2109, %v2111
      %v2113 = vrot.slane %v2099, %v2112
      %v2114 = vcombine.high %v2106, 0
      %v2115 = vcombine.high %v2113, 0
      %v2118 = vunpack.c.l.s4 1983009808
      %v2119 = vunpack.c.0.s8 %v2118
      %v2120 = vlaneseq
      %v2121 = vshrl.u32 %v2120, 7
      %v2122 = vsub.s32 %v2119, %v2121
      %v2123 = vrot.slane %v2063, %v2122
      %v2126 = vunpack.c.l.s4 1983009808
      %v2127 = vunpack.c.0.s8 %v2126
      %v2128 = vlaneseq
      %v2129 = vshrl.u32 %v2128, 7
      %v2130 = vsub.s32 %v2127, %v2129
      %v2131 = vrot.slane %v2069, %v2130
      %v2132 = vcombine.low %v2123, %v2131
      %v2133 = vcombine.high %v2123, %v2131
      %v2135 = vunpack.c.l.s4 1934713408
      %v2136 = vunpack.c.0.s8 %v2135
      %v2137 = vlaneseq
      %v2138 = vshrl.u32 %v2137, 7
      %v2139 = vsub.s32 %v2136, %v2138
      %v2140 = vrot.slane %v2132, %v2139
      %v2142 = vunpack.c.l.s4 1934713408
      %v2143 = vunpack.c.0.s8 %v2142
      %v2144 = vlaneseq
      %v2145 = vshrl.u32 %v2144, 7
      %v2146 = vsub.s32 %v2143, %v2145
      %v2147 = vrot.slane %v2133, %v2146
      %v2148 = vcombine.high %v2140, 0
      %v2149 = vcombine.high %v2147, 0
      %v2152 = vunpack.c.l.s4 1983009808
      %v2153 = vunpack.c.0.s8 %v2152
      %v2154 = vlaneseq
      %v2155 = vshrl.u32 %v2154, 7
      %v2156 = vsub.s32 %v2153, %v2155
      %v2157 = vrot.slane %v2072, %v2156
      %v2160 = vunpack.c.l.s4 1983009808
      %v2161 = vunpack.c.0.s8 %v2160
      %v2162 = vlaneseq
      %v2163 = vshrl.u32 %v2162, 7
      %v2164 = vsub.s32 %v2161, %v2163
      %v2165 = vrot.slane %v2078, %v2164
      %v2166 = vcombine.low %v2157, %v2165
      %v2167 = vcombine.high %v2157, %v2165
      %v2169 = vunpack.c.l.s4 1934713408
      %v2170 = vunpack.c.0.s8 %v2169
      %v2171 = vlaneseq
      %v2172 = vshrl.u32 %v2171, 7
      %v2173 = vsub.s32 %v2170, %v2172
      %v2174 = vrot.slane %v2166, %v2173
      %v2176 = vunpack.c.l.s4 1934713408
      %v2177 = vunpack.c.0.s8 %v2176
      %v2178 = vlaneseq
      %v2179 = vshrl.u32 %v2178, 7
      %v2180 = vsub.s32 %v2177, %v2179
      %v2181 = vrot.slane %v2167, %v2180
      %v2182 = vcombine.high %v2174, 0
      %v2183 = vcombine.high %v2181, 0
      %v2186 = vunpack.c.l.s4 1983009808
      %v2187 = vunpack.c.0.s8 %v2186
      %v2188 = vlaneseq
      %v2189 = vshrl.u32 %v2188, 7
      %v2190 = vsub.s32 %v2187, %v2189
      %v2191 = vrot.slane %v2075, %v2190
      %v2194 = vunpack.c.l.s4 1983009808
      %v2195 = vunpack.c.0.s8 %v2194
      %v2196 = vlaneseq
      %v2197 = vshrl.u32 %v2196, 7
      %v2198 = vsub.s32 %v2195, %v2197
      %v2199 = vrot.slane %v2081, %v2198
      %v2200 = vcombine.low %v2191, %v2199
      %v2201 = vcombine.high %v2191, %v2199
      %v2203 = vunpack.c.l.s4 1934713408
      %v2204 = vunpack.c.0.s8 %v2203
      %v2205 = vlaneseq
      %v2206 = vshrl.u32 %v2205, 7
      %v2207 = vsub.s32 %v2204, %v2206
      %v2208 = vrot.slane %v2200, %v2207
      %v2210 = vunpack.c.l.s4 1934713408
      %v2211 = vunpack.c.0.s8 %v2210
      %v2212 = vlaneseq
      %v2213 = vshrl.u32 %v2212, 7
      %v2214 = vsub.s32 %v2211, %v2213
      %v2215 = vrot.slane %v2201, %v2214
      %v2216 = vcombine.high %v2208, 0
      %v2217 = vcombine.high %v2215, 0
      %v2219 = vunpack.c.l.b16 %v2140
      %v2220 = vpack.c.b16 %v2219, %v2219
      %2221 = vrot.lane.b32.xlu0 %v2220, 16
      %v2222 = vpop.permute.xlu0 %2221
      %v2224 = vunpack.c.l.b16 %v2114
      %v2225 = vpack.c.b16 %v2224, %v2224
      %2226 = vrot.lane.b32.xlu0 %v2225, 32
      %v2227 = vpop.permute.xlu0 %2226
      %v2229 = vunpack.c.l.b16 %v2148
      %v2230 = vpack.c.b16 %v2229, %v2229
      %2231 = vrot.lane.b32.xlu0 %v2230, 48
      %v2232 = vpop.permute.xlu0 %2231
      %v2234 = vunpack.c.l.b16 %v2113
      %v2235 = vpack.c.b16 %v2234, %v2234
      %2236 = vrot.lane.b32.xlu0 %v2235, 64
      %v2237 = vpop.permute.xlu0 %2236
      %v2239 = vunpack.c.l.b16 %v2147
      %v2240 = vpack.c.b16 %v2239, %v2239
      %2241 = vrot.lane.b32.xlu0 %v2240, 80
      %v2242 = vpop.permute.xlu0 %2241
      %v2244 = vunpack.c.l.b16 %v2115
      %v2245 = vpack.c.b16 %v2244, %v2244
      %2246 = vrot.lane.b32.xlu0 %v2245, 96
      %v2247 = vpop.permute.xlu0 %2246
      %v2249 = vunpack.c.l.b16 %v2149
      %v2250 = vpack.c.b16 %v2249, %v2249
      %2251 = vrot.lane.b32.xlu0 %v2250, 112
      %v2252 = vpop.permute.xlu0 %2251
      %v2254 = vunpack.c.l.b16 %v2208
      %v2255 = vpack.c.b16 %v2254, %v2254
      %2256 = vrot.lane.b32.xlu0 %v2255, 16
      %v2257 = vpop.permute.xlu0 %2256
      %v2259 = vunpack.c.l.b16 %v2182
      %v2260 = vpack.c.b16 %v2259, %v2259
      %2261 = vrot.lane.b32.xlu0 %v2260, 32
      %v2262 = vpop.permute.xlu0 %2261
      %v2264 = vunpack.c.l.b16 %v2216
      %v2265 = vpack.c.b16 %v2264, %v2264
      %2266 = vrot.lane.b32.xlu0 %v2265, 48
      %v2267 = vpop.permute.xlu0 %2266
      %v2269 = vunpack.c.l.b16 %v2181
      %v2270 = vpack.c.b16 %v2269, %v2269
      %2271 = vrot.lane.b32.xlu0 %v2270, 64
      %v2272 = vpop.permute.xlu0 %2271
      %v2274 = vunpack.c.l.b16 %v2215
      %v2275 = vpack.c.b16 %v2274, %v2274
      %2276 = vrot.lane.b32.xlu0 %v2275, 80
      %v2277 = vpop.permute.xlu0 %2276
      %v2279 = vunpack.c.l.b16 %v2183
      %v2280 = vpack.c.b16 %v2279, %v2279
      %2281 = vrot.lane.b32.xlu0 %v2280, 96
      %v2282 = vpop.permute.xlu0 %2281
      %v2284 = vunpack.c.l.b16 %v2217
      %v2285 = vpack.c.b16 %v2284, %v2284
      %2286 = vrot.lane.b32.xlu0 %v2285, 112
      %v2287 = vpop.permute.xlu0 %2286
      %v2290 = vsel %vm1098, %v2106, %v2222
      %v2292 = vsel %vm1102, %v2290, %v2227
      %v2294 = vsel %vm1105, %v2292, %v2232
      %v2296 = vsel %vm1108, %v2294, %v2237
      %v2298 = vsel %vm1111, %v2296, %v2242
      %v2300 = vsel %vm1114, %v2298, %v2247
      %v2302 = vsel %vm1117, %v2300, %v2252
      %v2305 = vsel %vm1098, %v2174, %v2257
      %v2307 = vsel %vm1102, %v2305, %v2262
      %v2309 = vsel %vm1105, %v2307, %v2267
      %v2311 = vsel %vm1108, %v2309, %v2272
      %v2313 = vsel %vm1111, %v2311, %v2277
      %v2315 = vsel %vm1114, %v2313, %v2282
      %v2317 = vsel %vm1117, %v2315, %v2287
      %2318 = vrot.lane.b32.xlu0 %v1712, 126
      %v2319 = vpop.permute.xlu0 %2318
      %2320 = vrot.lane.b32.xlu0 %v1721, 126
      %v2321 = vpop.permute.xlu0 %2320
      %2322 = vrot.lane.b32.xlu0 %v1732, 126
      %v2323 = vpop.permute.xlu0 %2322
      %2324 = vrot.lane.b32.xlu0 %v1741, 126
      %v2325 = vpop.permute.xlu0 %2324
      %2326 = vrot.lane.b32.xlu0 %v1752, 126
      %v2327 = vpop.permute.xlu0 %2326
      %2328 = vrot.lane.b32.xlu0 %v1761, 126
      %v2329 = vpop.permute.xlu0 %2328
      %2330 = vrot.lane.b32.xlu0 %v1772, 126
      %v2331 = vpop.permute.xlu0 %2330
      %2332 = vrot.lane.b32.xlu0 %v1781, 126
      %v2333 = vpop.permute.xlu0 %2332
      %v2336 = vpack.i.b16 %v2323, %v2319
      %v2337 = vshrl.u32 %v2319, 16
      %v2338 = vshrl.u32 %v2323, 16
      %v2339 = vpack.i.b16 %v2338, %v2337
      %v2342 = vpack.i.b16 %v2331, %v2327
      %v2343 = vshrl.u32 %v2327, 16
      %v2344 = vshrl.u32 %v2331, 16
      %v2345 = vpack.i.b16 %v2344, %v2343
      %v2348 = vpack.i.b16 %v2325, %v2321
      %v2349 = vshrl.u32 %v2321, 16
      %v2350 = vshrl.u32 %v2325, 16
      %v2351 = vpack.i.b16 %v2350, %v2349
      %v2354 = vpack.i.b16 %v2333, %v2329
      %v2355 = vshrl.u32 %v2329, 16
      %v2356 = vshrl.u32 %v2333, 16
      %v2357 = vpack.i.b16 %v2356, %v2355
      %v2360 = vunpack.c.l.s4 1983009808
      %v2361 = vunpack.c.0.s8 %v2360
      %v2362 = vlaneseq
      %v2363 = vshrl.u32 %v2362, 7
      %v2364 = vsub.s32 %v2361, %v2363
      %v2365 = vrot.slane %v2336, %v2364
      %v2368 = vunpack.c.l.s4 1983009808
      %v2369 = vunpack.c.0.s8 %v2368
      %v2370 = vlaneseq
      %v2371 = vshrl.u32 %v2370, 7
      %v2372 = vsub.s32 %v2369, %v2371
      %v2373 = vrot.slane %v2342, %v2372
      %v2374 = vcombine.low %v2365, %v2373
      %v2375 = vcombine.high %v2365, %v2373
      %v2377 = vunpack.c.l.s4 1934713408
      %v2378 = vunpack.c.0.s8 %v2377
      %v2379 = vlaneseq
      %v2380 = vshrl.u32 %v2379, 7
      %v2381 = vsub.s32 %v2378, %v2380
      %v2382 = vrot.slane %v2374, %v2381
      %v2384 = vunpack.c.l.s4 1934713408
      %v2385 = vunpack.c.0.s8 %v2384
      %v2386 = vlaneseq
      %v2387 = vshrl.u32 %v2386, 7
      %v2388 = vsub.s32 %v2385, %v2387
      %v2389 = vrot.slane %v2375, %v2388
      %v2390 = vcombine.high %v2382, 0
      %v2391 = vcombine.high %v2389, 0
      %v2394 = vunpack.c.l.s4 1983009808
      %v2395 = vunpack.c.0.s8 %v2394
      %v2396 = vlaneseq
      %v2397 = vshrl.u32 %v2396, 7
      %v2398 = vsub.s32 %v2395, %v2397
      %v2399 = vrot.slane %v2339, %v2398
      %v2402 = vunpack.c.l.s4 1983009808
      %v2403 = vunpack.c.0.s8 %v2402
      %v2404 = vlaneseq
      %v2405 = vshrl.u32 %v2404, 7
      %v2406 = vsub.s32 %v2403, %v2405
      %v2407 = vrot.slane %v2345, %v2406
      %v2408 = vcombine.low %v2399, %v2407
      %v2409 = vcombine.high %v2399, %v2407
      %v2411 = vunpack.c.l.s4 1934713408
      %v2412 = vunpack.c.0.s8 %v2411
      %v2413 = vlaneseq
      %v2414 = vshrl.u32 %v2413, 7
      %v2415 = vsub.s32 %v2412, %v2414
      %v2416 = vrot.slane %v2408, %v2415
      %v2418 = vunpack.c.l.s4 1934713408
      %v2419 = vunpack.c.0.s8 %v2418
      %v2420 = vlaneseq
      %v2421 = vshrl.u32 %v2420, 7
      %v2422 = vsub.s32 %v2419, %v2421
      %v2423 = vrot.slane %v2409, %v2422
      %v2424 = vcombine.high %v2416, 0
      %v2425 = vcombine.high %v2423, 0
      %v2428 = vunpack.c.l.s4 1983009808
      %v2429 = vunpack.c.0.s8 %v2428
      %v2430 = vlaneseq
      %v2431 = vshrl.u32 %v2430, 7
      %v2432 = vsub.s32 %v2429, %v2431
      %v2433 = vrot.slane %v2348, %v2432
      %v2436 = vunpack.c.l.s4 1983009808
      %v2437 = vunpack.c.0.s8 %v2436
      %v2438 = vlaneseq
      %v2439 = vshrl.u32 %v2438, 7
      %v2440 = vsub.s32 %v2437, %v2439
      %v2441 = vrot.slane %v2354, %v2440
      %v2442 = vcombine.low %v2433, %v2441
      %v2443 = vcombine.high %v2433, %v2441
      %v2445 = vunpack.c.l.s4 1934713408
      %v2446 = vunpack.c.0.s8 %v2445
      %v2447 = vlaneseq
      %v2448 = vshrl.u32 %v2447, 7
      %v2449 = vsub.s32 %v2446, %v2448
      %v2450 = vrot.slane %v2442, %v2449
      %v2452 = vunpack.c.l.s4 1934713408
      %v2453 = vunpack.c.0.s8 %v2452
      %v2454 = vlaneseq
      %v2455 = vshrl.u32 %v2454, 7
      %v2456 = vsub.s32 %v2453, %v2455
      %v2457 = vrot.slane %v2443, %v2456
      %v2458 = vcombine.high %v2450, 0
      %v2459 = vcombine.high %v2457, 0
      %v2462 = vunpack.c.l.s4 1983009808
      %v2463 = vunpack.c.0.s8 %v2462
      %v2464 = vlaneseq
      %v2465 = vshrl.u32 %v2464, 7
      %v2466 = vsub.s32 %v2463, %v2465
      %v2467 = vrot.slane %v2351, %v2466
      %v2470 = vunpack.c.l.s4 1983009808
      %v2471 = vunpack.c.0.s8 %v2470
      %v2472 = vlaneseq
      %v2473 = vshrl.u32 %v2472, 7
      %v2474 = vsub.s32 %v2471, %v2473
      %v2475 = vrot.slane %v2357, %v2474
      %v2476 = vcombine.low %v2467, %v2475
      %v2477 = vcombine.high %v2467, %v2475
      %v2479 = vunpack.c.l.s4 1934713408
      %v2480 = vunpack.c.0.s8 %v2479
      %v2481 = vlaneseq
      %v2482 = vshrl.u32 %v2481, 7
      %v2483 = vsub.s32 %v2480, %v2482
      %v2484 = vrot.slane %v2476, %v2483
      %v2486 = vunpack.c.l.s4 1934713408
      %v2487 = vunpack.c.0.s8 %v2486
      %v2488 = vlaneseq
      %v2489 = vshrl.u32 %v2488, 7
      %v2490 = vsub.s32 %v2487, %v2489
      %v2491 = vrot.slane %v2477, %v2490
      %v2492 = vcombine.high %v2484, 0
      %v2493 = vcombine.high %v2491, 0
      %v2495 = vunpack.c.l.b16 %v2416
      %v2496 = vpack.c.b16 %v2495, %v2495
      %2497 = vrot.lane.b32.xlu0 %v2496, 16
      %v2498 = vpop.permute.xlu0 %2497
      %v2500 = vunpack.c.l.b16 %v2390
      %v2501 = vpack.c.b16 %v2500, %v2500
      %2502 = vrot.lane.b32.xlu0 %v2501, 32
      %v2503 = vpop.permute.xlu0 %2502
      %v2505 = vunpack.c.l.b16 %v2424
      %v2506 = vpack.c.b16 %v2505, %v2505
      %2507 = vrot.lane.b32.xlu0 %v2506, 48
      %v2508 = vpop.permute.xlu0 %2507
      %v2510 = vunpack.c.l.b16 %v2389
      %v2511 = vpack.c.b16 %v2510, %v2510
      %2512 = vrot.lane.b32.xlu0 %v2511, 64
      %v2513 = vpop.permute.xlu0 %2512
      %v2515 = vunpack.c.l.b16 %v2423
      %v2516 = vpack.c.b16 %v2515, %v2515
      %2517 = vrot.lane.b32.xlu0 %v2516, 80
      %v2518 = vpop.permute.xlu0 %2517
      %v2520 = vunpack.c.l.b16 %v2391
      %v2521 = vpack.c.b16 %v2520, %v2520
      %2522 = vrot.lane.b32.xlu0 %v2521, 96
      %v2523 = vpop.permute.xlu0 %2522
      %v2525 = vunpack.c.l.b16 %v2425
      %v2526 = vpack.c.b16 %v2525, %v2525
      %2527 = vrot.lane.b32.xlu0 %v2526, 112
      %v2528 = vpop.permute.xlu0 %2527
      %v2530 = vunpack.c.l.b16 %v2484
      %v2531 = vpack.c.b16 %v2530, %v2530
      %2532 = vrot.lane.b32.xlu0 %v2531, 16
      %v2533 = vpop.permute.xlu0 %2532
      %v2535 = vunpack.c.l.b16 %v2458
      %v2536 = vpack.c.b16 %v2535, %v2535
      %2537 = vrot.lane.b32.xlu0 %v2536, 32
      %v2538 = vpop.permute.xlu0 %2537
      %v2540 = vunpack.c.l.b16 %v2492
      %v2541 = vpack.c.b16 %v2540, %v2540
      %2542 = vrot.lane.b32.xlu0 %v2541, 48
      %v2543 = vpop.permute.xlu0 %2542
      %v2545 = vunpack.c.l.b16 %v2457
      %v2546 = vpack.c.b16 %v2545, %v2545
      %2547 = vrot.lane.b32.xlu0 %v2546, 64
      %v2548 = vpop.permute.xlu0 %2547
      %v2550 = vunpack.c.l.b16 %v2491
      %v2551 = vpack.c.b16 %v2550, %v2550
      %2552 = vrot.lane.b32.xlu0 %v2551, 80
      %v2553 = vpop.permute.xlu0 %2552
      %v2555 = vunpack.c.l.b16 %v2459
      %v2556 = vpack.c.b16 %v2555, %v2555
      %2557 = vrot.lane.b32.xlu0 %v2556, 96
      %v2558 = vpop.permute.xlu0 %2557
      %v2560 = vunpack.c.l.b16 %v2493
      %v2561 = vpack.c.b16 %v2560, %v2560
      %2562 = vrot.lane.b32.xlu0 %v2561, 112
      %v2563 = vpop.permute.xlu0 %2562
      %v2566 = vsel %vm1098, %v2382, %v2498
      %v2568 = vsel %vm1102, %v2566, %v2503
      %v2570 = vsel %vm1105, %v2568, %v2508
      %v2572 = vsel %vm1108, %v2570, %v2513
      %v2574 = vsel %vm1111, %v2572, %v2518
      %v2576 = vsel %vm1114, %v2574, %v2523
      %v2578 = vsel %vm1117, %v2576, %v2528
      %v2581 = vsel %vm1098, %v2450, %v2533
      %v2583 = vsel %vm1102, %v2581, %v2538
      %v2585 = vsel %vm1105, %v2583, %v2543
      %v2587 = vsel %vm1108, %v2585, %v2548
      %v2589 = vsel %vm1111, %v2587, %v2553
      %v2591 = vsel %vm1114, %v2589, %v2558
      %v2593 = vsel %vm1117, %v2591, %v2563
      %v2594 = vld [vmem:[#allocation2] sm:$0xe]
      %v2595 = vld [vmem:[#allocation2 + $0xc] sm:$0xe]
      %v2596 = vld [vmem:[#allocation2 + $0x18] sm:$0xe]
      %v2597 = vld [vmem:[#allocation2 + $0x24] sm:$0xe]
      %vm2606 = vcmask 1042432
      %vm2607 = vcmask 1046532
      %vm2608 = vmor %vm2606, %vm2607
      %v2609 = vrot.slane %v2594, 5
      %v2610 = vrot.slane %v2609, 4
      %v2611 = vrot.slane %v861, 5
      %v2612 = vsel %vm2608, %v2610, %v2611
      %v2613 = vrot.slane %v2611, 4
      %v2614 = vrot.slane %v1695, 5
      %v2615 = vsel %vm2608, %v2613, %v2614
      %v2616 = vrot.slane %v2595, 5
      %v2617 = vrot.slane %v2616, 4
      %v2618 = vrot.slane %v863, 5
      %v2619 = vsel %vm2608, %v2617, %v2618
      %v2620 = vrot.slane %v2618, 4
      %v2621 = vrot.slane %v1696, 5
      %v2622 = vsel %vm2608, %v2620, %v2621
      %v2623 = vrot.slane %v2596, 5
      %v2624 = vrot.slane %v2623, 4
      %v2625 = vrot.slane %v865, 5
      %v2626 = vsel %vm2608, %v2624, %v2625
      %v2627 = vrot.slane %v2625, 4
      %v2628 = vrot.slane %v1697, 5
      %v2629 = vsel %vm2608, %v2627, %v2628
      %v2630 = vrot.slane %v2597, 5
      %v2631 = vrot.slane %v2630, 4
      %v2632 = vrot.slane %v867, 5
      %v2633 = vsel %vm2608, %v2631, %v2632
      %v2634 = vrot.slane %v2632, 4
      %v2635 = vrot.slane %v1698, 5
      %v2636 = vsel %vm2608, %v2634, %v2635
      %v2639 = vpack.i.b16 %v2619, %v2612
      %v2640 = vshrl.u32 %v2612, 16
      %v2641 = vshrl.u32 %v2619, 16
      %v2642 = vpack.i.b16 %v2641, %v2640
      %v2645 = vpack.i.b16 %v2633, %v2626
      %v2646 = vshrl.u32 %v2626, 16
      %v2647 = vshrl.u32 %v2633, 16
      %v2648 = vpack.i.b16 %v2647, %v2646
      %v2651 = vpack.i.b16 %v2622, %v2615
      %v2652 = vshrl.u32 %v2615, 16
      %v2653 = vshrl.u32 %v2622, 16
      %v2654 = vpack.i.b16 %v2653, %v2652
      %v2657 = vpack.i.b16 %v2636, %v2629
      %v2658 = vshrl.u32 %v2629, 16
      %v2659 = vshrl.u32 %v2636, 16
      %v2660 = vpack.i.b16 %v2659, %v2658
      %v2663 = vunpack.c.l.s4 1983009808
      %v2664 = vunpack.c.0.s8 %v2663
      %v2665 = vlaneseq
      %v2666 = vshrl.u32 %v2665, 7
      %v2667 = vsub.s32 %v2664, %v2666
      %v2668 = vrot.slane %v2639, %v2667
      %v2671 = vunpack.c.l.s4 1983009808
      %v2672 = vunpack.c.0.s8 %v2671
      %v2673 = vlaneseq
      %v2674 = vshrl.u32 %v2673, 7
      %v2675 = vsub.s32 %v2672, %v2674
      %v2676 = vrot.slane %v2645, %v2675
      %v2677 = vcombine.low %v2668, %v2676
      %v2678 = vcombine.high %v2668, %v2676
      %v2680 = vunpack.c.l.s4 1934713408
      %v2681 = vunpack.c.0.s8 %v2680
      %v2682 = vlaneseq
      %v2683 = vshrl.u32 %v2682, 7
      %v2684 = vsub.s32 %v2681, %v2683
      %v2685 = vrot.slane %v2677, %v2684
      %v2687 = vunpack.c.l.s4 1934713408
      %v2688 = vunpack.c.0.s8 %v2687
      %v2689 = vlaneseq
      %v2690 = vshrl.u32 %v2689, 7
      %v2691 = vsub.s32 %v2688, %v2690
      %v2692 = vrot.slane %v2678, %v2691
      %v2693 = vcombine.high %v2685, 0
      %v2694 = vcombine.high %v2692, 0
      %v2697 = vunpack.c.l.s4 1983009808
      %v2698 = vunpack.c.0.s8 %v2697
      %v2699 = vlaneseq
      %v2700 = vshrl.u32 %v2699, 7
      %v2701 = vsub.s32 %v2698, %v2700
      %v2702 = vrot.slane %v2642, %v2701
      %v2705 = vunpack.c.l.s4 1983009808
      %v2706 = vunpack.c.0.s8 %v2705
      %v2707 = vlaneseq
      %v2708 = vshrl.u32 %v2707, 7
      %v2709 = vsub.s32 %v2706, %v2708
      %v2710 = vrot.slane %v2648, %v2709
      %v2711 = vcombine.low %v2702, %v2710
      %v2712 = vcombine.high %v2702, %v2710
      %v2714 = vunpack.c.l.s4 1934713408
      %v2715 = vunpack.c.0.s8 %v2714
      %v2716 = vlaneseq
      %v2717 = vshrl.u32 %v2716, 7
      %v2718 = vsub.s32 %v2715, %v2717
      %v2719 = vrot.slane %v2711, %v2718
      %v2721 = vunpack.c.l.s4 1934713408
      %v2722 = vunpack.c.0.s8 %v2721
      %v2723 = vlaneseq
      %v2724 = vshrl.u32 %v2723, 7
      %v2725 = vsub.s32 %v2722, %v2724
      %v2726 = vrot.slane %v2712, %v2725
      %v2727 = vcombine.high %v2719, 0
      %v2728 = vcombine.high %v2726, 0
      %v2731 = vunpack.c.l.s4 1983009808
      %v2732 = vunpack.c.0.s8 %v2731
      %v2733 = vlaneseq
      %v2734 = vshrl.u32 %v2733, 7
      %v2735 = vsub.s32 %v2732, %v2734
      %v2736 = vrot.slane %v2651, %v2735
      %v2739 = vunpack.c.l.s4 1983009808
      %v2740 = vunpack.c.0.s8 %v2739
      %v2741 = vlaneseq
      %v2742 = vshrl.u32 %v2741, 7
      %v2743 = vsub.s32 %v2740, %v2742
      %v2744 = vrot.slane %v2657, %v2743
      %v2745 = vcombine.low %v2736, %v2744
      %v2746 = vcombine.high %v2736, %v2744
      %v2748 = vunpack.c.l.s4 1934713408
      %v2749 = vunpack.c.0.s8 %v2748
      %v2750 = vlaneseq
      %v2751 = vshrl.u32 %v2750, 7
      %v2752 = vsub.s32 %v2749, %v2751
      %v2753 = vrot.slane %v2745, %v2752
      %v2755 = vunpack.c.l.s4 1934713408
      %v2756 = vunpack.c.0.s8 %v2755
      %v2757 = vlaneseq
      %v2758 = vshrl.u32 %v2757, 7
      %v2759 = vsub.s32 %v2756, %v2758
      %v2760 = vrot.slane %v2746, %v2759
      %v2761 = vcombine.high %v2753, 0
      %v2762 = vcombine.high %v2760, 0
      %v2765 = vunpack.c.l.s4 1983009808
      %v2766 = vunpack.c.0.s8 %v2765
      %v2767 = vlaneseq
      %v2768 = vshrl.u32 %v2767, 7
      %v2769 = vsub.s32 %v2766, %v2768
      %v2770 = vrot.slane %v2654, %v2769
      %v2773 = vunpack.c.l.s4 1983009808
      %v2774 = vunpack.c.0.s8 %v2773
      %v2775 = vlaneseq
      %v2776 = vshrl.u32 %v2775, 7
      %v2777 = vsub.s32 %v2774, %v2776
      %v2778 = vrot.slane %v2660, %v2777
      %v2779 = vcombine.low %v2770, %v2778
      %v2780 = vcombine.high %v2770, %v2778
      %v2782 = vunpack.c.l.s4 1934713408
      %v2783 = vunpack.c.0.s8 %v2782
      %v2784 = vlaneseq
      %v2785 = vshrl.u32 %v2784, 7
      %v2786 = vsub.s32 %v2783, %v2785
      %v2787 = vrot.slane %v2779, %v2786
      %v2789 = vunpack.c.l.s4 1934713408
      %v2790 = vunpack.c.0.s8 %v2789
      %v2791 = vlaneseq
      %v2792 = vshrl.u32 %v2791, 7
      %v2793 = vsub.s32 %v2790, %v2792
      %v2794 = vrot.slane %v2780, %v2793
      %v2795 = vcombine.high %v2787, 0
      %v2796 = vcombine.high %v2794, 0
      %v2798 = vunpack.c.l.b16 %v2719
      %v2799 = vpack.c.b16 %v2798, %v2798
      %2800 = vrot.lane.b32.xlu0 %v2799, 16
      %v2801 = vpop.permute.xlu0 %2800
      %v2803 = vunpack.c.l.b16 %v2693
      %v2804 = vpack.c.b16 %v2803, %v2803
      %2805 = vrot.lane.b32.xlu0 %v2804, 32
      %v2806 = vpop.permute.xlu0 %2805
      %v2808 = vunpack.c.l.b16 %v2727
      %v2809 = vpack.c.b16 %v2808, %v2808
      %2810 = vrot.lane.b32.xlu0 %v2809, 48
      %v2811 = vpop.permute.xlu0 %2810
      %v2813 = vunpack.c.l.b16 %v2692
      %v2814 = vpack.c.b16 %v2813, %v2813
      %2815 = vrot.lane.b32.xlu0 %v2814, 64
      %v2816 = vpop.permute.xlu0 %2815
      %v2818 = vunpack.c.l.b16 %v2726
      %v2819 = vpack.c.b16 %v2818, %v2818
      %2820 = vrot.lane.b32.xlu0 %v2819, 80
      %v2821 = vpop.permute.xlu0 %2820
      %v2823 = vunpack.c.l.b16 %v2694
      %v2824 = vpack.c.b16 %v2823, %v2823
      %2825 = vrot.lane.b32.xlu0 %v2824, 96
      %v2826 = vpop.permute.xlu0 %2825
      %v2828 = vunpack.c.l.b16 %v2728
      %v2829 = vpack.c.b16 %v2828, %v2828
      %2830 = vrot.lane.b32.xlu0 %v2829, 112
      %v2831 = vpop.permute.xlu0 %2830
      %v2833 = vunpack.c.l.b16 %v2787
      %v2834 = vpack.c.b16 %v2833, %v2833
      %2835 = vrot.lane.b32.xlu0 %v2834, 16
      %v2836 = vpop.permute.xlu0 %2835
      %v2838 = vunpack.c.l.b16 %v2761
      %v2839 = vpack.c.b16 %v2838, %v2838
      %2840 = vrot.lane.b32.xlu0 %v2839, 32
      %v2841 = vpop.permute.xlu0 %2840
      %v2843 = vunpack.c.l.b16 %v2795
      %v2844 = vpack.c.b16 %v2843, %v2843
      %2845 = vrot.lane.b32.xlu0 %v2844, 48
      %v2846 = vpop.permute.xlu0 %2845
      %v2848 = vunpack.c.l.b16 %v2760
      %v2849 = vpack.c.b16 %v2848, %v2848
      %2850 = vrot.lane.b32.xlu0 %v2849, 64
      %v2851 = vpop.permute.xlu0 %2850
      %v2853 = vunpack.c.l.b16 %v2794
      %v2854 = vpack.c.b16 %v2853, %v2853
      %2855 = vrot.lane.b32.xlu0 %v2854, 80
      %v2856 = vpop.permute.xlu0 %2855
      %v2858 = vunpack.c.l.b16 %v2762
      %v2859 = vpack.c.b16 %v2858, %v2858
      %2860 = vrot.lane.b32.xlu0 %v2859, 96
      %v2861 = vpop.permute.xlu0 %2860
      %v2863 = vunpack.c.l.b16 %v2796
      %v2864 = vpack.c.b16 %v2863, %v2863
      %2865 = vrot.lane.b32.xlu0 %v2864, 112
      %v2866 = vpop.permute.xlu0 %2865
      %v2869 = vsel %vm1098, %v2685, %v2801
      %v2871 = vsel %vm1102, %v2869, %v2806
      %v2873 = vsel %vm1105, %v2871, %v2811
      %v2875 = vsel %vm1108, %v2873, %v2816
      %v2877 = vsel %vm1111, %v2875, %v2821
      %v2879 = vsel %vm1114, %v2877, %v2826
      %v2881 = vsel %vm1117, %v2879, %v2831
      %v2884 = vsel %vm1098, %v2753, %v2836
      %v2886 = vsel %vm1102, %v2884, %v2841
      %v2888 = vsel %vm1105, %v2886, %v2846
      %v2890 = vsel %vm1108, %v2888, %v2851
      %v2892 = vsel %vm1111, %v2890, %v2856
      %v2894 = vsel %vm1114, %v2892, %v2861
      %v2896 = vsel %vm1117, %v2894, %v2866
      %2897 = vrot.lane.b32.xlu0 %v2612, 127
      %v2898 = vpop.permute.xlu0 %2897
      %2899 = vrot.lane.b32.xlu0 %v2615, 127
      %v2900 = vpop.permute.xlu0 %2899
      %2901 = vrot.lane.b32.xlu0 %v2619, 127
      %v2902 = vpop.permute.xlu0 %2901
      %2903 = vrot.lane.b32.xlu0 %v2622, 127
      %v2904 = vpop.permute.xlu0 %2903
      %2905 = vrot.lane.b32.xlu0 %v2626, 127
      %v2906 = vpop.permute.xlu0 %2905
      %2907 = vrot.lane.b32.xlu0 %v2629, 127
      %v2908 = vpop.permute.xlu0 %2907
      %2909 = vrot.lane.b32.xlu0 %v2633, 127
      %v2910 = vpop.permute.xlu0 %2909
      %2911 = vrot.lane.b32.xlu0 %v2636, 127
      %v2912 = vpop.permute.xlu0 %2911
      %v2915 = vpack.i.b16 %v2902, %v2898
      %v2916 = vshrl.u32 %v2898, 16
      %v2917 = vshrl.u32 %v2902, 16
      %v2918 = vpack.i.b16 %v2917, %v2916
      %v2921 = vpack.i.b16 %v2910, %v2906
      %v2922 = vshrl.u32 %v2906, 16
      %v2923 = vshrl.u32 %v2910, 16
      %v2924 = vpack.i.b16 %v2923, %v2922
      %v2927 = vpack.i.b16 %v2904, %v2900
      %v2928 = vshrl.u32 %v2900, 16
      %v2929 = vshrl.u32 %v2904, 16
      %v2930 = vpack.i.b16 %v2929, %v2928
      %v2933 = vpack.i.b16 %v2912, %v2908
      %v2934 = vshrl.u32 %v2908, 16
      %v2935 = vshrl.u32 %v2912, 16
      %v2936 = vpack.i.b16 %v2935, %v2934
      %v2939 = vunpack.c.l.s4 1983009808
      %v2940 = vunpack.c.0.s8 %v2939
      %v2941 = vlaneseq
      %v2942 = vshrl.u32 %v2941, 7
      %v2943 = vsub.s32 %v2940, %v2942
      %v2944 = vrot.slane %v2915, %v2943
      %v2947 = vunpack.c.l.s4 1983009808
      %v2948 = vunpack.c.0.s8 %v2947
      %v2949 = vlaneseq
      %v2950 = vshrl.u32 %v2949, 7
      %v2951 = vsub.s32 %v2948, %v2950
      %v2952 = vrot.slane %v2921, %v2951
      %v2953 = vcombine.low %v2944, %v2952
      %v2954 = vcombine.high %v2944, %v2952
      %v2956 = vunpack.c.l.s4 1934713408
      %v2957 = vunpack.c.0.s8 %v2956
      %v2958 = vlaneseq
      %v2959 = vshrl.u32 %v2958, 7
      %v2960 = vsub.s32 %v2957, %v2959
      %v2961 = vrot.slane %v2953, %v2960
      %v2963 = vunpack.c.l.s4 1934713408
      %v2964 = vunpack.c.0.s8 %v2963
      %v2965 = vlaneseq
      %v2966 = vshrl.u32 %v2965, 7
      %v2967 = vsub.s32 %v2964, %v2966
      %v2968 = vrot.slane %v2954, %v2967
      %v2969 = vcombine.high %v2961, 0
      %v2970 = vcombine.high %v2968, 0
      %v2973 = vunpack.c.l.s4 1983009808
      %v2974 = vunpack.c.0.s8 %v2973
      %v2975 = vlaneseq
      %v2976 = vshrl.u32 %v2975, 7
      %v2977 = vsub.s32 %v2974, %v2976
      %v2978 = vrot.slane %v2918, %v2977
      %v2981 = vunpack.c.l.s4 1983009808
      %v2982 = vunpack.c.0.s8 %v2981
      %v2983 = vlaneseq
      %v2984 = vshrl.u32 %v2983, 7
      %v2985 = vsub.s32 %v2982, %v2984
      %v2986 = vrot.slane %v2924, %v2985
      %v2987 = vcombine.low %v2978, %v2986
      %v2988 = vcombine.high %v2978, %v2986
      %v2990 = vunpack.c.l.s4 1934713408
      %v2991 = vunpack.c.0.s8 %v2990
      %v2992 = vlaneseq
      %v2993 = vshrl.u32 %v2992, 7
      %v2994 = vsub.s32 %v2991, %v2993
      %v2995 = vrot.slane %v2987, %v2994
      %v2997 = vunpack.c.l.s4 1934713408
      %v2998 = vunpack.c.0.s8 %v2997
      %v2999 = vlaneseq
      %v3000 = vshrl.u32 %v2999, 7
      %v3001 = vsub.s32 %v2998, %v3000
      %v3002 = vrot.slane %v2988, %v3001
      %v3003 = vcombine.high %v2995, 0
      %v3004 = vcombine.high %v3002, 0
      %v3007 = vunpack.c.l.s4 1983009808
      %v3008 = vunpack.c.0.s8 %v3007
      %v3009 = vlaneseq
      %v3010 = vshrl.u32 %v3009, 7
      %v3011 = vsub.s32 %v3008, %v3010
      %v3012 = vrot.slane %v2927, %v3011
      %v3015 = vunpack.c.l.s4 1983009808
      %v3016 = vunpack.c.0.s8 %v3015
      %v3017 = vlaneseq
      %v3018 = vshrl.u32 %v3017, 7
      %v3019 = vsub.s32 %v3016, %v3018
      %v3020 = vrot.slane %v2933, %v3019
      %v3021 = vcombine.low %v3012, %v3020
      %v3022 = vcombine.high %v3012, %v3020
      %v3024 = vunpack.c.l.s4 1934713408
      %v3025 = vunpack.c.0.s8 %v3024
      %v3026 = vlaneseq
      %v3027 = vshrl.u32 %v3026, 7
      %v3028 = vsub.s32 %v3025, %v3027
      %v3029 = vrot.slane %v3021, %v3028
      %v3031 = vunpack.c.l.s4 1934713408
      %v3032 = vunpack.c.0.s8 %v3031
      %v3033 = vlaneseq
      %v3034 = vshrl.u32 %v3033, 7
      %v3035 = vsub.s32 %v3032, %v3034
      %v3036 = vrot.slane %v3022, %v3035
      %v3037 = vcombine.high %v3029, 0
      %v3038 = vcombine.high %v3036, 0
      %v3041 = vunpack.c.l.s4 1983009808
      %v3042 = vunpack.c.0.s8 %v3041
      %v3043 = vlaneseq
      %v3044 = vshrl.u32 %v3043, 7
      %v3045 = vsub.s32 %v3042, %v3044
      %v3046 = vrot.slane %v2930, %v3045
      %v3049 = vunpack.c.l.s4 1983009808
      %v3050 = vunpack.c.0.s8 %v3049
      %v3051 = vlaneseq
      %v3052 = vshrl.u32 %v3051, 7
      %v3053 = vsub.s32 %v3050, %v3052
      %v3054 = vrot.slane %v2936, %v3053
      %v3055 = vcombine.low %v3046, %v3054
      %v3056 = vcombine.high %v3046, %v3054
      %v3058 = vunpack.c.l.s4 1934713408
      %v3059 = vunpack.c.0.s8 %v3058
      %v3060 = vlaneseq
      %v3061 = vshrl.u32 %v3060, 7
      %v3062 = vsub.s32 %v3059, %v3061
      %v3063 = vrot.slane %v3055, %v3062
      %v3065 = vunpack.c.l.s4 1934713408
      %v3066 = vunpack.c.0.s8 %v3065
      %v3067 = vlaneseq
      %v3068 = vshrl.u32 %v3067, 7
      %v3069 = vsub.s32 %v3066, %v3068
      %v3070 = vrot.slane %v3056, %v3069
      %v3071 = vcombine.high %v3063, 0
      %v3072 = vcombine.high %v3070, 0
      %v3074 = vunpack.c.l.b16 %v2995
      %v3075 = vpack.c.b16 %v3074, %v3074
      %3076 = vrot.lane.b32.xlu0 %v3075, 16
      %v3077 = vpop.permute.xlu0 %3076
      %v3079 = vunpack.c.l.b16 %v2969
      %v3080 = vpack.c.b16 %v3079, %v3079
      %3081 = vrot.lane.b32.xlu0 %v3080, 32
      %v3082 = vpop.permute.xlu0 %3081
      %v3084 = vunpack.c.l.b16 %v3003
      %v3085 = vpack.c.b16 %v3084, %v3084
      %3086 = vrot.lane.b32.xlu0 %v3085, 48
      %v3087 = vpop.permute.xlu0 %3086
      %v3089 = vunpack.c.l.b16 %v2968
      %v3090 = vpack.c.b16 %v3089, %v3089
      %3091 = vrot.lane.b32.xlu0 %v3090, 64
      %v3092 = vpop.permute.xlu0 %3091
      %v3094 = vunpack.c.l.b16 %v3002
      %v3095 = vpack.c.b16 %v3094, %v3094
      %3096 = vrot.lane.b32.xlu0 %v3095, 80
      %v3097 = vpop.permute.xlu0 %3096
      %v3099 = vunpack.c.l.b16 %v2970
      %v3100 = vpack.c.b16 %v3099, %v3099
      %3101 = vrot.lane.b32.xlu0 %v3100, 96
      %v3102 = vpop.permute.xlu0 %3101
      %v3104 = vunpack.c.l.b16 %v3004
      %v3105 = vpack.c.b16 %v3104, %v3104
      %3106 = vrot.lane.b32.xlu0 %v3105, 112
      %v3107 = vpop.permute.xlu0 %3106
      %v3109 = vunpack.c.l.b16 %v3063
      %v3110 = vpack.c.b16 %v3109, %v3109
      %3111 = vrot.lane.b32.xlu0 %v3110, 16
      %v3112 = vpop.permute.xlu0 %3111
      %v3114 = vunpack.c.l.b16 %v3037
      %v3115 = vpack.c.b16 %v3114, %v3114
      %3116 = vrot.lane.b32.xlu0 %v3115, 32
      %v3117 = vpop.permute.xlu0 %3116
      %v3119 = vunpack.c.l.b16 %v3071
      %v3120 = vpack.c.b16 %v3119, %v3119
      %3121 = vrot.lane.b32.xlu0 %v3120, 48
      %v3122 = vpop.permute.xlu0 %3121
      %v3124 = vunpack.c.l.b16 %v3036
      %v3125 = vpack.c.b16 %v3124, %v3124
      %3126 = vrot.lane.b32.xlu0 %v3125, 64
      %v3127 = vpop.permute.xlu0 %3126
      %v3129 = vunpack.c.l.b16 %v3070
      %v3130 = vpack.c.b16 %v3129, %v3129
      %3131 = vrot.lane.b32.xlu0 %v3130, 80
      %v3132 = vpop.permute.xlu0 %3131
      %v3134 = vunpack.c.l.b16 %v3038
      %v3135 = vpack.c.b16 %v3134, %v3134
      %3136 = vrot.lane.b32.xlu0 %v3135, 96
      %v3137 = vpop.permute.xlu0 %3136
      %v3139 = vunpack.c.l.b16 %v3072
      %v3140 = vpack.c.b16 %v3139, %v3139
      %3141 = vrot.lane.b32.xlu0 %v3140, 112
      %v3142 = vpop.permute.xlu0 %3141
      %v3145 = vsel %vm1098, %v2961, %v3077
      %v3147 = vsel %vm1102, %v3145, %v3082
      %v3149 = vsel %vm1105, %v3147, %v3087
      %v3151 = vsel %vm1108, %v3149, %v3092
      %v3153 = vsel %vm1111, %v3151, %v3097
      %v3155 = vsel %vm1114, %v3153, %v3102
      %v3157 = vsel %vm1117, %v3155, %v3107
      %v3160 = vsel %vm1098, %v3029, %v3112
      %v3162 = vsel %vm1102, %v3160, %v3117
      %v3164 = vsel %vm1105, %v3162, %v3122
      %v3166 = vsel %vm1108, %v3164, %v3127
      %v3168 = vsel %vm1111, %v3166, %v3132
      %v3170 = vsel %vm1114, %v3168, %v3137
      %v3172 = vsel %vm1117, %v3170, %v3142
      %3173 = vrot.lane.b32.xlu0 %v2612, 126
      %v3174 = vpop.permute.xlu0 %3173
      %3175 = vrot.lane.b32.xlu0 %v2615, 126
      %v3176 = vpop.permute.xlu0 %3175
      %3177 = vrot.lane.b32.xlu0 %v2619, 126
      %v3178 = vpop.permute.xlu0 %3177
      %3179 = vrot.lane.b32.xlu0 %v2622, 126
      %v3180 = vpop.permute.xlu0 %3179
      %3181 = vrot.lane.b32.xlu0 %v2626, 126
      %v3182 = vpop.permute.xlu0 %3181
      %3183 = vrot.lane.b32.xlu0 %v2629, 126
      %v3184 = vpop.permute.xlu0 %3183
      %3185 = vrot.lane.b32.xlu0 %v2633, 126
      %v3186 = vpop.permute.xlu0 %3185
      %3187 = vrot.lane.b32.xlu0 %v2636, 126
      %v3188 = vpop.permute.xlu0 %3187
      %v3191 = vpack.i.b16 %v3178, %v3174
      %v3192 = vshrl.u32 %v3174, 16
      %v3193 = vshrl.u32 %v3178, 16
      %v3194 = vpack.i.b16 %v3193, %v3192
      %v3197 = vpack.i.b16 %v3186, %v3182
      %v3198 = vshrl.u32 %v3182, 16
      %v3199 = vshrl.u32 %v3186, 16
      %v3200 = vpack.i.b16 %v3199, %v3198
      %v3203 = vpack.i.b16 %v3180, %v3176
      %v3204 = vshrl.u32 %v3176, 16
      %v3205 = vshrl.u32 %v3180, 16
      %v3206 = vpack.i.b16 %v3205, %v3204
      %v3209 = vpack.i.b16 %v3188, %v3184
      %v3210 = vshrl.u32 %v3184, 16
      %v3211 = vshrl.u32 %v3188, 16
      %v3212 = vpack.i.b16 %v3211, %v3210
      %v3215 = vunpack.c.l.s4 1983009808
      %v3216 = vunpack.c.0.s8 %v3215
      %v3217 = vlaneseq
      %v3218 = vshrl.u32 %v3217, 7
      %v3219 = vsub.s32 %v3216, %v3218
      %v3220 = vrot.slane %v3191, %v3219
      %v3223 = vunpack.c.l.s4 1983009808
      %v3224 = vunpack.c.0.s8 %v3223
      %v3225 = vlaneseq
      %v3226 = vshrl.u32 %v3225, 7
      %v3227 = vsub.s32 %v3224, %v3226
      %v3228 = vrot.slane %v3197, %v3227
      %v3229 = vcombine.low %v3220, %v3228
      %v3230 = vcombine.high %v3220, %v3228
      %v3232 = vunpack.c.l.s4 1934713408
      %v3233 = vunpack.c.0.s8 %v3232
      %v3234 = vlaneseq
      %v3235 = vshrl.u32 %v3234, 7
      %v3236 = vsub.s32 %v3233, %v3235
      %v3237 = vrot.slane %v3229, %v3236
      %v3239 = vunpack.c.l.s4 1934713408
      %v3240 = vunpack.c.0.s8 %v3239
      %v3241 = vlaneseq
      %v3242 = vshrl.u32 %v3241, 7
      %v3243 = vsub.s32 %v3240, %v3242
      %v3244 = vrot.slane %v3230, %v3243
      %v3245 = vcombine.high %v3237, 0
      %v3246 = vcombine.high %v3244, 0
      %v3249 = vunpack.c.l.s4 1983009808
      %v3250 = vunpack.c.0.s8 %v3249
      %v3251 = vlaneseq
      %v3252 = vshrl.u32 %v3251, 7
      %v3253 = vsub.s32 %v3250, %v3252
      %v3254 = vrot.slane %v3194, %v3253
      %v3257 = vunpack.c.l.s4 1983009808
      %v3258 = vunpack.c.0.s8 %v3257
      %v3259 = vlaneseq
      %v3260 = vshrl.u32 %v3259, 7
      %v3261 = vsub.s32 %v3258, %v3260
      %v3262 = vrot.slane %v3200, %v3261
      %v3263 = vcombine.low %v3254, %v3262
      %v3264 = vcombine.high %v3254, %v3262
      %v3266 = vunpack.c.l.s4 1934713408
      %v3267 = vunpack.c.0.s8 %v3266
      %v3268 = vlaneseq
      %v3269 = vshrl.u32 %v3268, 7
      %v3270 = vsub.s32 %v3267, %v3269
      %v3271 = vrot.slane %v3263, %v3270
      %v3273 = vunpack.c.l.s4 1934713408
      %v3274 = vunpack.c.0.s8 %v3273
      %v3275 = vlaneseq
      %v3276 = vshrl.u32 %v3275, 7
      %v3277 = vsub.s32 %v3274, %v3276
      %v3278 = vrot.slane %v3264, %v3277
      %v3279 = vcombine.high %v3271, 0
      %v3280 = vcombine.high %v3278, 0
      %v3283 = vunpack.c.l.s4 1983009808
      %v3284 = vunpack.c.0.s8 %v3283
      %v3285 = vlaneseq
      %v3286 = vshrl.u32 %v3285, 7
      %v3287 = vsub.s32 %v3284, %v3286
      %v3288 = vrot.slane %v3203, %v3287
      %v3291 = vunpack.c.l.s4 1983009808
      %v3292 = vunpack.c.0.s8 %v3291
      %v3293 = vlaneseq
      %v3294 = vshrl.u32 %v3293, 7
      %v3295 = vsub.s32 %v3292, %v3294
      %v3296 = vrot.slane %v3209, %v3295
      %v3297 = vcombine.low %v3288, %v3296
      %v3298 = vcombine.high %v3288, %v3296
      %v3300 = vunpack.c.l.s4 1934713408
      %v3301 = vunpack.c.0.s8 %v3300
      %v3302 = vlaneseq
      %v3303 = vshrl.u32 %v3302, 7
      %v3304 = vsub.s32 %v3301, %v3303
      %v3305 = vrot.slane %v3297, %v3304
      %v3307 = vunpack.c.l.s4 1934713408
      %v3308 = vunpack.c.0.s8 %v3307
      %v3309 = vlaneseq
      %v3310 = vshrl.u32 %v3309, 7
      %v3311 = vsub.s32 %v3308, %v3310
      %v3312 = vrot.slane %v3298, %v3311
      %v3313 = vcombine.high %v3305, 0
      %v3314 = vcombine.high %v3312, 0
      %v3317 = vunpack.c.l.s4 1983009808
      %v3318 = vunpack.c.0.s8 %v3317
      %v3319 = vlaneseq
      %v3320 = vshrl.u32 %v3319, 7
      %v3321 = vsub.s32 %v3318, %v3320
      %v3322 = vrot.slane %v3206, %v3321
      %v3325 = vunpack.c.l.s4 1983009808
      %v3326 = vunpack.c.0.s8 %v3325
      %v3327 = vlaneseq
      %v3328 = vshrl.u32 %v3327, 7
      %v3329 = vsub.s32 %v3326, %v3328
      %v3330 = vrot.slane %v3212, %v3329
      %v3331 = vcombine.low %v3322, %v3330
      %v3332 = vcombine.high %v3322, %v3330
      %v3334 = vunpack.c.l.s4 1934713408
      %v3335 = vunpack.c.0.s8 %v3334
      %v3336 = vlaneseq
      %v3337 = vshrl.u32 %v3336, 7
      %v3338 = vsub.s32 %v3335, %v3337
      %v3339 = vrot.slane %v3331, %v3338
      %v3341 = vunpack.c.l.s4 1934713408
      %v3342 = vunpack.c.0.s8 %v3341
      %v3343 = vlaneseq
      %v3344 = vshrl.u32 %v3343, 7
      %v3345 = vsub.s32 %v3342, %v3344
      %v3346 = vrot.slane %v3332, %v3345
      %v3347 = vcombine.high %v3339, 0
      %v3348 = vcombine.high %v3346, 0
      %v3350 = vunpack.c.l.b16 %v3271
      %v3351 = vpack.c.b16 %v3350, %v3350
      %3352 = vrot.lane.b32.xlu0 %v3351, 16
      %v3353 = vpop.permute.xlu0 %3352
      %v3355 = vunpack.c.l.b16 %v3245
      %v3356 = vpack.c.b16 %v3355, %v3355
      %3357 = vrot.lane.b32.xlu0 %v3356, 32
      %v3358 = vpop.permute.xlu0 %3357
      %v3360 = vunpack.c.l.b16 %v3279
      %v3361 = vpack.c.b16 %v3360, %v3360
      %3362 = vrot.lane.b32.xlu0 %v3361, 48
      %v3363 = vpop.permute.xlu0 %3362
      %v3365 = vunpack.c.l.b16 %v3244
      %v3366 = vpack.c.b16 %v3365, %v3365
      %3367 = vrot.lane.b32.xlu0 %v3366, 64
      %v3368 = vpop.permute.xlu0 %3367
      %v3370 = vunpack.c.l.b16 %v3278
      %v3371 = vpack.c.b16 %v3370, %v3370
      %3372 = vrot.lane.b32.xlu0 %v3371, 80
      %v3373 = vpop.permute.xlu0 %3372
      %v3375 = vunpack.c.l.b16 %v3246
      %v3376 = vpack.c.b16 %v3375, %v3375
      %3377 = vrot.lane.b32.xlu0 %v3376, 96
      %v3378 = vpop.permute.xlu0 %3377
      %v3380 = vunpack.c.l.b16 %v3280
      %v3381 = vpack.c.b16 %v3380, %v3380
      %3382 = vrot.lane.b32.xlu0 %v3381, 112
      %v3383 = vpop.permute.xlu0 %3382
      %v3385 = vunpack.c.l.b16 %v3339
      %v3386 = vpack.c.b16 %v3385, %v3385
      %3387 = vrot.lane.b32.xlu0 %v3386, 16
      %v3388 = vpop.permute.xlu0 %3387
      %v3390 = vunpack.c.l.b16 %v3313
      %v3391 = vpack.c.b16 %v3390, %v3390
      %3392 = vrot.lane.b32.xlu0 %v3391, 32
      %v3393 = vpop.permute.xlu0 %3392
      %v3395 = vunpack.c.l.b16 %v3347
      %v3396 = vpack.c.b16 %v3395, %v3395
      %3397 = vrot.lane.b32.xlu0 %v3396, 48
      %v3398 = vpop.permute.xlu0 %3397
      %v3400 = vunpack.c.l.b16 %v3312
      %v3401 = vpack.c.b16 %v3400, %v3400
      %3402 = vrot.lane.b32.xlu0 %v3401, 64
      %v3403 = vpop.permute.xlu0 %3402
      %v3405 = vunpack.c.l.b16 %v3346
      %v3406 = vpack.c.b16 %v3405, %v3405
      %3407 = vrot.lane.b32.xlu0 %v3406, 80
      %v3408 = vpop.permute.xlu0 %3407
      %v3410 = vunpack.c.l.b16 %v3314
      %v3411 = vpack.c.b16 %v3410, %v3410
      %3412 = vrot.lane.b32.xlu0 %v3411, 96
      %v3413 = vpop.permute.xlu0 %3412
      %v3415 = vunpack.c.l.b16 %v3348
      %v3416 = vpack.c.b16 %v3415, %v3415
      %3417 = vrot.lane.b32.xlu0 %v3416, 112
      %v3418 = vpop.permute.xlu0 %3417
      %v3421 = vsel %vm1098, %v3237, %v3353
      %v3423 = vsel %vm1102, %v3421, %v3358
      %v3425 = vsel %vm1105, %v3423, %v3363
      %v3427 = vsel %vm1108, %v3425, %v3368
      %v3429 = vsel %vm1111, %v3427, %v3373
      %v3431 = vsel %vm1114, %v3429, %v3378
      %v3433 = vsel %vm1117, %v3431, %v3383
      %v3436 = vsel %vm1098, %v3305, %v3388
      %v3438 = vsel %vm1102, %v3436, %v3393
      %v3440 = vsel %vm1105, %v3438, %v3398
      %v3442 = vsel %vm1108, %v3440, %v3403
      %v3444 = vsel %vm1111, %v3442, %v3408
      %v3446 = vsel %vm1114, %v3444, %v3413
      %v3448 = vsel %vm1117, %v3446, %v3418
      %v3451 = vrot.slane %v1403, 6
      %v3452 = vrot.slane %v1418, 6
      %v3455 = vrot.slane %v1679, 4
      %v3456 = vrot.slane %v1694, 4
      %v3459 = vrot.slane %v2026, 2
      %v3460 = vrot.slane %v2041, 2
      %v3463 = vrot.slane %v2578, 6
      %v3464 = vrot.slane %v2593, 6
      %v3467 = vrot.slane %v2881, 4
      %v3468 = vrot.slane %v2896, 4
      %v3471 = vrot.slane %v3157, 2
      %v3472 = vrot.slane %v3172, 2
      %vm3473 = vcmask 1041408
      %v3475 = vsel %vm3473, %v1119, %v3451
      %v3477 = vsel %vm3473, %v1134, %v3452
      %vm3478 = vcmask 1043456
      %v3480 = vsel %vm3478, %v3475, %v3455
      %v3482 = vsel %vm3478, %v3477, %v3456
      %vm3483 = vcmask 1045504
      %v3485 = vsel %vm3483, %v3480, %v3459
      %v3488 = vsel %vm3483, %v3482, %v3460
      %v3491 = vsel %vm3473, %v2302, %v3463
      %v3493 = vsel %vm3473, %v2317, %v3464
      %v3495 = vsel %vm3478, %v3491, %v3467
      %v3497 = vsel %vm3478, %v3493, %v3468
      %v3499 = vsel %vm3483, %v3495, %v3471
      %v3502 = vsel %vm3483, %v3497, %v3472
      %v3504 = vld [vmem:[%s4] sm:$0x3]
      %v3505 = vld [vmem:[%s5] sm:$0xf]
      %3507 = vset.pattern.permute.xlu0 0
      %3508 = vperm.xlu0 %3507, %v3505
      %v3509 = vpop.permute.xlu0 %3508
      %vm3511 = vcmask 293888
      %v3513 = vsel %vm3511, %v3504, 0
      %v3515 = vsel %vm3473, %v3433, 0
      %v3517 = vsel %vm3473, %v3448, 0
      %3519 = vmatprep.subr.bf16.mxu0 %v3488
      %3520 = vmatpush1.bf16.msra.mxu0 %v3485
      %3521 = vmatprep.subr.bf16.mxu0 %v3502
      %3522 = vmatpush1.bf16.msra.mxu0 %v3499
      %3523 = vmatprep.subr.bf16.mxu0 %v3517
      %3524 = vmatpush1.bf16.msra.mxu0 %v3515
      %3525 = vmatprep.subr.bf16.mxu0 0
      %3526 = vmatpush1.bf16.msra.mxu0 0
      %3527 = vmatprep.subr.bf16.mxu0 0
      %3528 = vmatpush1.bf16.msra.mxu0 0
      %3529 = vmatprep.subr.bf16.mxu0 0
      %3530 = vmatpush1.bf16.msra.mxu0 0
      %3531 = vmatprep.subr.bf16.mxu0 0
      %3532 = vmatpush1.bf16.msra.mxu0 0
      %3533 = vmatprep.subr.bf16.mxu0 0
      %3534 = vmatpush1.bf16.msra.mxu0 0
      %3535 = vmatprep.subr.bf16.mxu0 0
      %3536 = vmatpush1.bf16.msra.mxu0 0
      %3537 = vmatprep.subr.bf16.mxu0 0
      %3538 = vmatpush1.bf16.msra.mxu0 0
      %3539 = vmatprep.subr.bf16.mxu0 0
      %3540 = vmatpush1.bf16.msra.mxu0 0
      %3541 = vmatprep.subr.bf16.mxu0 0
      %3542 = vmatpush1.bf16.msra.mxu0 0
      %3543 = vmatprep.subr.bf16.mxu0 0
      %3544 = vmatpush1.bf16.msra.mxu0 0
      %3545 = vmatprep.subr.bf16.mxu0 0
      %3546 = vmatpush1.bf16.msra.mxu0 0
      %3547 = vmatprep.subr.bf16.mxu0 0
      %3548 = vmatpush1.bf16.msra.mxu0 0
      %3549 = vmatprep.subr.bf16.mxu0 0
      %3550 = vmatpush1.bf16.msra.mxu0 0
      %3551 = vmatprep.mubr.bf16.mxu0 0
      %3552 = vmatmul.mubr.bf16.gmra.mrb[0].mxu0 %v3513
      %v3553 = vpop.f32.mrb[0].mxu0
      %v3554 = vadd.f32 %v3509, %v3553
      %v3555 = vpop.f32.mrb[0].mxu0
      %v3556 = vadd.f32 %v3509, %v3555
      %v3557 = vpop.f32.mrb[0].mxu0
      %v3558 = vpop.f32.mrb[0].mxu0
      %3559 = vdwg.mxu0
      %v3562 = vcombine.low %v3554, %v3556
      %3564 = vst [vmem:[%s285] sm:$0xff] %v3562
      %v3565 = vsel %vm3478, %v3554, 0.0
      %v3566 = vsel %vm3478, %v3556, 0.0
      %v3567 = vadd.f32 %v3565, %v3566
      %3568 = vadd.xlane.f32.xlu0 %v3567
      %v3569 = vpop.xlane.xlu0 %3568
      %v3570 = vmul.f32 %v3569, 0.00390625
      %v3571 = vsub.f32 %v3554, %v3570
      %v3572 = vsub.f32 %v3556, %v3570
      %v3573 = vmul.f32 %v3571, %v3571
      %v3574 = vmul.f32 %v3572, %v3572
      %v3575 = vsel %vm3478, %v3573, 0.0
      %v3576 = vsel %vm3478, %v3574, 0.0
      %v3577 = vadd.f32 %v3575, %v3576
      %3578 = vadd.xlane.f32.xlu0 %v3577
      %v3579 = vpop.xlane.xlu0 %3578
      %vm3580 = vcmask 7168
      %v3581 = vsel %vm3580, %v3569, %v3579
      %vm3582 = vcmask 11264
      %3583 = vst.msk [vmem:[%s289] sm:$0xf] %vm3582, %v3581
      %p3584 = scmp.lt.s32.totalorder %s19, 1
      %s3585 = scalar_select %p3584, %s19, 1
      %s3586 = smul.addr %s3585, 2
      %s3587 = smul.addr %s3586, 4
      %s3588 = scalar_lea.vmem %s6, %s3587
      %p3589 = scmp.lt.s32.totalorder %s19, 1
      %s3590 = scalar_select %p3589, %s19, 1
      %s3591 = smul.addr %s3590, 4
      %s3592 = scalar_lea.vmem %s7, %s3591
      // Predicated region
      $region45: #{residual_block.4} parent=43 // pred_check
        %p3593 = pneg %p168
      $region46: #{residual_block.4} parent=43 // pred_check_branch
        %3595 = sbr.rel (%p3593) target = $region48
      $region47: #{residual_block.4} parent=43 // pred_region
        _
      $region48: #{residual_block.4} parent=43 // pred_fallthru
        _
      // Predicated region
      $region49: #{residual_block.4} parent=43 // pred_check
        %p3596 = pneg %p194
      $region50: #{residual_block.4} parent=43 // pred_check_branch
        %3598 = sbr.rel (%p3596) target = $region52
      $region51: #{residual_block.4} parent=43 // pred_region
        _
      $region52: #{residual_block.4} parent=43 // pred_fallthru
        _
    $region44: #{residual_block.4} parent=5 // pred_fallthru
      _
    %p3599 = scmp.le.s32.totalorder 2, %s14
    // Predicated region
    $region53: #{residual_block.4} parent=5 // pred_check
      %p3600 = pneg %p3599
    $region54: #{residual_block.4} parent=5 // pred_check_branch
      %3602 = sbr.rel (%p3600) target = $region56
    $region55: #{residual_block.4} parent=5 // pred_region
      %s3603 = ssub.s32 %s14, 2
      // Predicated region
      $region57: #{residual_block.4} parent=55 // pred_check
        %p3604 = pneg %p174
      $region58: #{residual_block.4} parent=55 // pred_check_branch
        %3606 = sbr.rel (%p3604) target = $region60
      $region59: #{residual_block.4} parent=55 // pred_region
        %p3607 = scmp.lt.s32.totalorder %s20, 1
        %s3608 = scalar_select %p3607, %s20, 1
        %s3609 = smul.addr %s3608, 2
        %s3610 = smul.addr %s3609, 4
        %s3611 = scalar_lea.vmem %s6, %s3610
      $region60: #{residual_block.4} parent=55 // pred_fallthru
        _
      // Predicated region
      $region61: #{residual_block.4} parent=55 // pred_check
        %p3612 = pneg %p200
      $region62: #{residual_block.4} parent=55 // pred_check_branch
        %3614 = sbr.rel (%p3612) target = $region64
      $region63: #{residual_block.4} parent=55 // pred_region
        %p3615 = scmp.lt.s32.totalorder %s20, 1
        %s3616 = scalar_select %p3615, %s20, 1
        %s3617 = smul.addr %s3616, 4
        %s3618 = scalar_lea.vmem %s7, %s3617
      $region64: #{residual_block.4} parent=55 // pred_fallthru
        _
    $region56: #{residual_block.4} parent=5 // pred_fallthru
      _
  $region6: #{residual_block.4} parent=0 // loop_footer
    %s18 = sadd.s32 1, %s14
  $region7: #{residual_block.4} parent=0 // loop_footer_branch
    %13 = sbr.rel target = $region3
  $region8: #{residual_block.4} parent=0 // loop_exit
    _

</llo_original>
